<compile_context>
chip_gen: v7x
topology: tpu7x:2x2x1
jax: 0.10.0
libtpu: 0.0.40
codegen_flags: <defaults>
</compile_context>

<pallas_src>
import functools

import jax
import jax.numpy as jnp
from jax.experimental import pallas as pl
from jax.experimental.pallas import tpu as pltpu

OUTPUT_SIZE = 8
BATCH = 2


# ------------------------------ fused kernel ------------------------------ #
def _fused_kernel(x_ref, wfc1_ref, bfc1_ref, w1_ref, b1_ref, w2_ref, b2_ref,
                  w3_ref, b3_ref, wfc2_ref, bfc2_ref, o_ref,
                  z1_s, z2_s, z3_s, *, batch, output_size):
    f32 = jnp.float32
    os_ = output_size
    len2 = 5 * os_                     # conv2 output length (rows per conv2 tap block)

    wfc1 = wfc1_ref[...]               # (25*OS, 5)
    bfc1 = bfc1_ref[...]               # (25*OS, 5)
    w1 = w1_ref[...]                   # (5, 8)
    b1 = b1_ref[...]                   # (1, 8)
    b2 = b2_ref[...]                   # (1, 16)
    b3 = b3_ref[...]                   # (1, 32)
    bfc2 = bfc2_ref[...]               # (1, OS)

    rows = []
    for b in range(batch):             # static unroll; B is tiny here
        xb = x_ref[b, 0]               # scalar read from SMEM

        # fc1 (K=1): pure VPU broadcast multiply-add + ReLU -> (25*OS, 5)
        h0 = jnp.maximum(xb * wfc1 + bfc1, 0.0)

        # conv1 (Cin=1): all 5 taps form one K=5 matmul -> (25*OS, 8)
        z1 = jnp.dot(h0, w1, preferred_element_type=f32) + b1
        z1_s[...] = jnp.maximum(z1, 0.0)

        # conv2: accumulate over 5 taps; z1 rows were ordered (via the packed
        # fc1 layout) so each tap block is a contiguous 8-aligned row slice.
        acc2 = None
        for t in range(5):
            part = jnp.dot(z1_s[pl.ds(t * len2, len2), :], w2_ref[t],
                           preferred_element_type=f32)          # (5*OS,8)@(8,16)
            acc2 = part if acc2 is None else acc2 + part
        z2_s[...] = jnp.maximum(acc2 + b2, 0.0)                 # (5*OS, 16)

        # conv3: same tap accumulation, OS rows per tap block.
        acc3 = None
        for t in range(5):
            part = jnp.dot(z2_s[pl.ds(t * os_, os_), :], w3_ref[t],
                           preferred_element_type=f32)          # (OS,16)@(16,32)
            acc3 = part if acc3 is None else acc3 + part
        z3_s[...] = jnp.maximum(acc3 + b3, 0.0)                 # (OS, 32)

        # fc2: contract over (position, channel); packed weight columns already
        # follow torch.flatten's channel-major order.
        acc4 = None
        for l in range(os_):
            part = jnp.dot(z3_s[pl.ds(l, 1), :], wfc2_ref[l],
                           preferred_element_type=f32)          # (1,32)@(32,OS)
            acc4 = part if acc4 is None else acc4 + part
        rows.append(acc4 + bfc2)                                # (1, OS)

    o_ref[...] = jnp.concatenate(rows, axis=0).astype(o_ref.dtype)


# ------------------------------ forward pass ------------------------------ #
@jax.jit
def forward(x, pp):
    """x: (B, 1) float32; pp: packed params from pack_params()."""
    batch = x.shape[0]
    os_ = pp["bfc2"].shape[-1]

    args = (x, pp["wfc1"], pp["bfc1"], pp["w1"], pp["b1"], pp["w2"], pp["b2"],
            pp["w3"], pp["b3"], pp["wfc2"], pp["bfc2"])

    flops = batch * (2 * 125 * os_                 # fc1
                     + 2 * 25 * os_ * 5 * 8        # conv1
                     + 2 * 5 * os_ * 40 * 16       # conv2
                     + 2 * os_ * 80 * 32           # conv3
                     + 2 * 32 * os_ * os_)         # fc2
    bytes_accessed = int(sum(a.size * a.dtype.itemsize for a in args)
                         + batch * os_ * 4)

    in_specs = ([pl.BlockSpec(memory_space=pltpu.MemorySpace.SMEM)]
                + [pl.BlockSpec(memory_space=pltpu.MemorySpace.VMEM)
                   for _ in range(len(args) - 1)])

    return pl.pallas_call(
        functools.partial(_fused_kernel, batch=batch, output_size=os_),
        out_shape=jax.ShapeDtypeStruct((batch, os_), jnp.float32),
        in_specs=in_specs,
        out_specs=pl.BlockSpec(memory_space=pltpu.MemorySpace.VMEM),
        scratch_shapes=[
            pltpu.VMEM((25 * os_, 8), jnp.float32),   # conv1 output
            pltpu.VMEM((5 * os_, 16), jnp.float32),   # conv2 output
            pltpu.VMEM((os_, 32), jnp.float32),       # conv3 output
        ],
        cost_estimate=pl.CostEstimate(flops=flops, transcendentals=0,
                                      bytes_accessed=bytes_accessed),
    )(*args)


# ------------------------- parameter init / packing ------------------------ #
def init_params(key, output_size):
    """Matches torch defaults; fc2 is constant-zero initialized per the module."""
    ks = jax.random.split(key, 8)

    def u(k, shape, fan_in):
        bound = 1.0 / jnp.sqrt(jnp.float32(fan_in))
        return jax.random.uniform(k, shape, jnp.float32, -bound, bound)

    p = {}
    p["fc1_w"] = u(ks[0], (125 * output_size, 1), 1)          # nn.Linear(1, 125*OS)
    p["fc1_b"] = u(ks[1], (125 * output_size,), 1)
    p["conv1_w"] = u(ks[2], (8, 1, 5), 1 * 5)                 # Conv1d(1, 8, 5, 5)
    p["conv1_b"] = u(ks[3], (8,), 1 * 5)
    p["conv2_w"] = u(ks[4], (16, 8, 5), 8 * 5)                # Conv1d(8, 16, 5, 5)
    p["conv2_b"] = u(ks[5], (16,), 8 * 5)
    p["conv3_w"] = u(ks[6], (32, 16, 5), 16 * 5)              # Conv1d(16, 32, 5, 5)
    p["conv3_b"] = u(ks[7], (32,), 16 * 5)
    p["fc2_w"] = jnp.zeros((output_size, 32 * output_size), jnp.float32)
    p["fc2_b"] = jnp.zeros((output_size,), jnp.float32)
    return p


def pack_params(p, output_size):
    """One-time weight re-layout for the fused kernel (done outside forward())."""
    os_ = output_size

    # fc1 flat index j = 125*l3 + 25*t3 + 5*t2 + t1 (l3: conv3 pos, t*: taps).
    # Reorder rows to r1 = t2*(5*OS) + t3*OS + l3, column t1, so every conv
    # stage's tap blocks are contiguous row slices.
    def reorder_fc1(v):                                  # v: (125*OS,)
        return jnp.transpose(v.reshape(os_, 5, 5, 5),
                             (2, 1, 0, 3)).reshape(25 * os_, 5)

    packed = {
        "wfc1": reorder_fc1(p["fc1_w"][:, 0]),
        "bfc1": reorder_fc1(p["fc1_b"]),
        "w1": jnp.transpose(p["conv1_w"], (2, 1, 0)).reshape(5, 8),   # [t, co]
        "b1": p["conv1_b"].reshape(1, 8),
        "w2": jnp.transpose(p["conv2_w"], (2, 1, 0)),                 # [t, ci, co]
        "b2": p["conv2_b"].reshape(1, 16),
        "w3": jnp.transpose(p["conv3_w"], (2, 1, 0)),                 # [t, ci, co]
        "b3": p["conv3_b"].reshape(1, 32),
        # torch.flatten column index = co*OS + l3 -> permute to [l3, co, o].
        "wfc2": jnp.transpose(p["fc2_w"].reshape(os_, 32, os_), (2, 1, 0)),
        "bfc2": p["fc2_b"].reshape(1, os_),
    }
    return jax.tree_util.tree_map(lambda a: jnp.asarray(a, jnp.float32), packed)


# --------------------------- pure-JAX reference ---------------------------- #
def ref_forward(x, p):
    h = x @ p["fc1_w"].T + p["fc1_b"]
    h = jnp.maximum(h, 0.0)[:, None, :]                   # (B, 1, 125*OS), NCL
    dn = ("NCH", "OIH", "NCH")

    def conv_relu(h, w, b):
        y = jax.lax.conv_general_dilated(h, w, (5,), "VALID", dimension_numbers=dn)
        return jnp.maximum(y + b[None, :, None], 0.0)

    h = conv_relu(h, p["conv1_w"], p["conv1_b"])
    h = conv_relu(h, p["conv2_w"], p["conv2_b"])
    h = conv_relu(h, p["conv3_w"], p["conv3_b"])
    flat = h.reshape(h.shape[0], -1)                      # (B, 32*OS), co-major
    return flat @ p["fc2_w"].T + p["fc2_b"]


if __name__ == "__main__":
    key = jax.random.PRNGKey(0)
    pkey, xkey, wkey, bkey = jax.random.split(key, 4)

    params = init_params(pkey, OUTPUT_SIZE)
    x = jax.random.normal(xkey, (BATCH, 1), jnp.float32)  # nn.Linear(1, ...) input

    # Faithful module init (fc2 == 0).
    out = jax.block_until_ready(forward(x, pack_params(params, OUTPUT_SIZE)))
    ref = ref_forward(x, params)
    assert out.shape == (BATCH, OUTPUT_SIZE)
    assert jnp.allclose(out, ref, atol=1e-3, rtol=1e-3)

    # Also exercise the fc2 path with non-zero weights.
    params_nz = dict(params)
    params_nz["fc2_w"] = jax.random.uniform(
        wkey, (OUTPUT_SIZE, 32 * OUTPUT_SIZE), jnp.float32, -0.0625, 0.0625)
    params_nz["fc2_b"] = jax.random.uniform(
        bkey, (OUTPUT_SIZE,), jnp.float32, -0.0625, 0.0625)
    out_nz = jax.block_until_ready(forward(x, pack_params(params_nz, OUTPUT_SIZE)))
    ref_nz = ref_forward(x, params_nz)
    assert jnp.allclose(out_nz, ref_nz, atol=1e-3, rtol=1e-3)

    print("KERNEL_OK")
</pallas_src>

<mosaic_0001>
module attributes {stable_mosaic.version = 11 : i64} {
  func.func @_fused_kernel(%arg0: memref<2x1xf32, #tpu.memory_space<smem>>, %arg1: memref<200x5xf32, #tpu.memory_space<vmem>>, %arg2: memref<200x5xf32, #tpu.memory_space<vmem>>, %arg3: memref<5x8xf32, #tpu.memory_space<vmem>>, %arg4: memref<1x8xf32, #tpu.memory_space<vmem>>, %arg5: memref<5x8x16xf32, #tpu.memory_space<vmem>>, %arg6: memref<1x16xf32, #tpu.memory_space<vmem>>, %arg7: memref<5x16x32xf32, #tpu.memory_space<vmem>>, %arg8: memref<1x32xf32, #tpu.memory_space<vmem>>, %arg9: memref<8x32x8xf32, #tpu.memory_space<vmem>>, %arg10: memref<1x8xf32, #tpu.memory_space<vmem>>, %arg11: memref<2x8xf32, #tpu.memory_space<vmem>>, %arg12: memref<200x8xf32, #tpu.memory_space<vmem>>, %arg13: memref<40x16xf32, #tpu.memory_space<vmem>>, %arg14: memref<8x32xf32, #tpu.memory_space<vmem>>) attributes {dimension_semantics = [], scalar_prefetch = 0 : i64, scratch_operands = 3 : i64, tpu.core_type = #tpu.core_type<tc>} {
    %c0 = arith.constant 0 : index
    %c0_0 = arith.constant 0 : index
    %0 = vector.load %arg1[%c0, %c0_0] : memref<200x5xf32, #tpu.memory_space<vmem>>, vector<200x5xf32>
    %c0_1 = arith.constant 0 : index
    %c0_2 = arith.constant 0 : index
    %1 = vector.load %arg2[%c0_1, %c0_2] : memref<200x5xf32, #tpu.memory_space<vmem>>, vector<200x5xf32>
    %c0_3 = arith.constant 0 : index
    %c0_4 = arith.constant 0 : index
    %2 = vector.load %arg3[%c0_3, %c0_4] : memref<5x8xf32, #tpu.memory_space<vmem>>, vector<5x8xf32>
    %c0_5 = arith.constant 0 : index
    %c0_6 = arith.constant 0 : index
    %3 = vector.load %arg4[%c0_5, %c0_6] : memref<1x8xf32, #tpu.memory_space<vmem>>, vector<1x8xf32>
    %c0_7 = arith.constant 0 : index
    %c0_8 = arith.constant 0 : index
    %4 = vector.load %arg6[%c0_7, %c0_8] : memref<1x16xf32, #tpu.memory_space<vmem>>, vector<1x16xf32>
    %c0_9 = arith.constant 0 : index
    %c0_10 = arith.constant 0 : index
    %5 = vector.load %arg8[%c0_9, %c0_10] : memref<1x32xf32, #tpu.memory_space<vmem>>, vector<1x32xf32>
    %c0_11 = arith.constant 0 : index
    %c0_12 = arith.constant 0 : index
    %6 = vector.load %arg10[%c0_11, %c0_12] : memref<1x8xf32, #tpu.memory_space<vmem>>, vector<1x8xf32>
    %c0_13 = arith.constant 0 : index
    %c0_14 = arith.constant 0 : index
    %7 = memref.load %arg0[%c0_13, %c0_14] : memref<2x1xf32, #tpu.memory_space<smem>>
    %8 = vector.broadcast %7 : f32 to vector<200x5xf32>
    %9 = arith.mulf %8, %0 : vector<200x5xf32>
    %10 = arith.addf %9, %1 : vector<200x5xf32>
    %cst = arith.constant 0.000000e+00 : f32
    %11 = vector.broadcast %cst : f32 to vector<200x5xf32>
    %12 = arith.maximumf %10, %11 : vector<200x5xf32>
    %cst_15 = arith.constant dense<0.000000e+00> : vector<200x8xf32>
    %13 = tpu.matmul %12, %2, %cst_15 {dimension_numbers = #tpu.dot_dimension_numbers<[1], [0], [0], [1], [0, 0, 1, 1], [], []>} : vector<200x5xf32>, vector<5x8xf32>, vector<200x8xf32> -> vector<200x8xf32>
    %14 = vector.broadcast %3 : vector<1x8xf32> to vector<200x8xf32>
    %15 = arith.addf %13, %14 : vector<200x8xf32>
    %cst_16 = arith.constant 0.000000e+00 : f32
    %16 = vector.broadcast %cst_16 : f32 to vector<200x8xf32>
    %17 = arith.maximumf %15, %16 : vector<200x8xf32>
    %c0_17 = arith.constant 0 : index
    %c0_18 = arith.constant 0 : index
    %18 = vector.load %arg12[%c0_17, %c0_18] : memref<200x8xf32, #tpu.memory_space<vmem>>, vector<200x8xf32>
    tpu.vector_store %arg12[%c0_17, %c0_18], %17 {strides = array<i32>} : memref<200x8xf32, #tpu.memory_space<vmem>>, vector<200x8xf32>,
    %c0_19 = arith.constant 0 : index
    %c0_20 = arith.constant 0 : index
    %19 = vector.load %arg12[%c0_19, %c0_20] : memref<200x8xf32, #tpu.memory_space<vmem>>, vector<40x8xf32>
    %c0_21 = arith.constant 0 : index
    %c0_22 = arith.constant 0 : index
    %c0_23 = arith.constant 0 : index
    %20 = vector.load %arg5[%c0_21, %c0_22, %c0_23] : memref<5x8x16xf32, #tpu.memory_space<vmem>>, vector<1x8x16xf32>
    %21 = vector.shape_cast %20 : vector<1x8x16xf32> to vector<8x16xf32>
    %cst_24 = arith.constant dense<0.000000e+00> : vector<40x16xf32>
    %22 = tpu.matmul %19, %21, %cst_24 {dimension_numbers = #tpu.dot_dimension_numbers<[1], [0], [0], [1], [0, 0, 1, 1], [], []>} : vector<40x8xf32>, vector<8x16xf32>, vector<40x16xf32> -> vector<40x16xf32>
    %c40 = arith.constant 40 : index
    %c0_25 = arith.constant 0 : index
    %23 = vector.load %arg12[%c40, %c0_25] : memref<200x8xf32, #tpu.memory_space<vmem>>, vector<40x8xf32>
    %c1 = arith.constant 1 : index
    %c0_26 = arith.constant 0 : index
    %c0_27 = arith.constant 0 : index
    %24 = vector.load %arg5[%c1, %c0_26, %c0_27] : memref<5x8x16xf32, #tpu.memory_space<vmem>>, vector<1x8x16xf32>
    %25 = vector.shape_cast %24 : vector<1x8x16xf32> to vector<8x16xf32>
    %cst_28 = arith.constant dense<0.000000e+00> : vector<40x16xf32>
    %26 = tpu.matmul %23, %25, %cst_28 {dimension_numbers = #tpu.dot_dimension_numbers<[1], [0], [0], [1], [0, 0, 1, 1], [], []>} : vector<40x8xf32>, vector<8x16xf32>, vector<40x16xf32> -> vector<40x16xf32>
    %27 = arith.addf %22, %26 : vector<40x16xf32>
    %c80 = arith.constant 80 : index
    %c0_29 = arith.constant 0 : index
    %28 = vector.load %arg12[%c80, %c0_29] : memref<200x8xf32, #tpu.memory_space<vmem>>, vector<40x8xf32>
    %c2 = arith.constant 2 : index
    %c0_30 = arith.constant 0 : index
    %c0_31 = arith.constant 0 : index
    %29 = vector.load %arg5[%c2, %c0_30, %c0_31] : memref<5x8x16xf32, #tpu.memory_space<vmem>>, vector<1x8x16xf32>
    %30 = vector.shape_cast %29 : vector<1x8x16xf32> to vector<8x16xf32>
    %cst_32 = arith.constant dense<0.000000e+00> : vector<40x16xf32>
    %31 = tpu.matmul %28, %30, %cst_32 {dimension_numbers = #tpu.dot_dimension_numbers<[1], [0], [0], [1], [0, 0, 1, 1], [], []>} : vector<40x8xf32>, vector<8x16xf32>, vector<40x16xf32> -> vector<40x16xf32>
    %32 = arith.addf %27, %31 : vector<40x16xf32>
    %c120 = arith.constant 120 : index
    %c0_33 = arith.constant 0 : index
    %33 = vector.load %arg12[%c120, %c0_33] : memref<200x8xf32, #tpu.memory_space<vmem>>, vector<40x8xf32>
    %c3 = arith.constant 3 : index
    %c0_34 = arith.constant 0 : index
    %c0_35 = arith.constant 0 : index
    %34 = vector.load %arg5[%c3, %c0_34, %c0_35] : memref<5x8x16xf32, #tpu.memory_space<vmem>>, vector<1x8x16xf32>
    %35 = vector.shape_cast %34 : vector<1x8x16xf32> to vector<8x16xf32>
    %cst_36 = arith.constant dense<0.000000e+00> : vector<40x16xf32>
    %36 = tpu.matmul %33, %35, %cst_36 {dimension_numbers = #tpu.dot_dimension_numbers<[1], [0], [0], [1], [0, 0, 1, 1], [], []>} : vector<40x8xf32>, vector<8x16xf32>, vector<40x16xf32> -> vector<40x16xf32>
    %37 = arith.addf %32, %36 : vector<40x16xf32>
    %c160 = arith.constant 160 : index
    %c0_37 = arith.constant 0 : index
    %38 = vector.load %arg12[%c160, %c0_37] : memref<200x8xf32, #tpu.memory_space<vmem>>, vector<40x8xf32>
    %c4 = arith.constant 4 : index
    %c0_38 = arith.constant 0 : index
    %c0_39 = arith.constant 0 : index
    %39 = vector.load %arg5[%c4, %c0_38, %c0_39] : memref<5x8x16xf32, #tpu.memory_space<vmem>>, vector<1x8x16xf32>
    %40 = vector.shape_cast %39 : vector<1x8x16xf32> to vector<8x16xf32>
    %cst_40 = arith.constant dense<0.000000e+00> : vector<40x16xf32>
    %41 = tpu.matmul %38, %40, %cst_40 {dimension_numbers = #tpu.dot_dimension_numbers<[1], [0], [0], [1], [0, 0, 1, 1], [], []>} : vector<40x8xf32>, vector<8x16xf32>, vector<40x16xf32> -> vector<40x16xf32>
    %42 = arith.addf %37, %41 : vector<40x16xf32>
    %43 = vector.broadcast %4 : vector<1x16xf32> to vector<40x16xf32>
    %44 = arith.addf %42, %43 : vector<40x16xf32>
    %cst_41 = arith.constant 0.000000e+00 : f32
    %45 = vector.broadcast %cst_41 : f32 to vector<40x16xf32>
    %46 = arith.maximumf %44, %45 : vector<40x16xf32>
    %c0_42 = arith.constant 0 : index
    %c0_43 = arith.constant 0 : index
    %47 = vector.load %arg13[%c0_42, %c0_43] : memref<40x16xf32, #tpu.memory_space<vmem>>, vector<40x16xf32>
    tpu.vector_store %arg13[%c0_42, %c0_43], %46 {strides = array<i32>} : memref<40x16xf32, #tpu.memory_space<vmem>>, vector<40x16xf32>,
    %c0_44 = arith.constant 0 : index
    %c0_45 = arith.constant 0 : index
    %48 = vector.load %arg13[%c0_44, %c0_45] : memref<40x16xf32, #tpu.memory_space<vmem>>, vector<8x16xf32>
    %c0_46 = arith.constant 0 : index
    %c0_47 = arith.constant 0 : index
    %c0_48 = arith.constant 0 : index
    %49 = vector.load %arg7[%c0_46, %c0_47, %c0_48] : memref<5x16x32xf32, #tpu.memory_space<vmem>>, vector<1x16x32xf32>
    %50 = vector.shape_cast %49 : vector<1x16x32xf32> to vector<16x32xf32>
    %cst_49 = arith.constant dense<0.000000e+00> : vector<8x32xf32>
    %51 = tpu.matmul %48, %50, %cst_49 {dimension_numbers = #tpu.dot_dimension_numbers<[1], [0], [0], [1], [0, 0, 1, 1], [], []>} : vector<8x16xf32>, vector<16x32xf32>, vector<8x32xf32> -> vector<8x32xf32>
    %c8 = arith.constant 8 : index
    %c0_50 = arith.constant 0 : index
    %52 = vector.load %arg13[%c8, %c0_50] : memref<40x16xf32, #tpu.memory_space<vmem>>, vector<8x16xf32>
    %c1_51 = arith.constant 1 : index
    %c0_52 = arith.constant 0 : index
    %c0_53 = arith.constant 0 : index
    %53 = vector.load %arg7[%c1_51, %c0_52, %c0_53] : memref<5x16x32xf32, #tpu.memory_space<vmem>>, vector<1x16x32xf32>
    %54 = vector.shape_cast %53 : vector<1x16x32xf32> to vector<16x32xf32>
    %cst_54 = arith.constant dense<0.000000e+00> : vector<8x32xf32>
    %55 = tpu.matmul %52, %54, %cst_54 {dimension_numbers = #tpu.dot_dimension_numbers<[1], [0], [0], [1], [0, 0, 1, 1], [], []>} : vector<8x16xf32>, vector<16x32xf32>, vector<8x32xf32> -> vector<8x32xf32>
    %56 = arith.addf %51, %55 : vector<8x32xf32>
    %c16 = arith.constant 16 : index
    %c0_55 = arith.constant 0 : index
    %57 = vector.load %arg13[%c16, %c0_55] : memref<40x16xf32, #tpu.memory_space<vmem>>, vector<8x16xf32>
    %c2_56 = arith.constant 2 : index
    %c0_57 = arith.constant 0 : index
    %c0_58 = arith.constant 0 : index
    %58 = vector.load %arg7[%c2_56, %c0_57, %c0_58] : memref<5x16x32xf32, #tpu.memory_space<vmem>>, vector<1x16x32xf32>
    %59 = vector.shape_cast %58 : vector<1x16x32xf32> to vector<16x32xf32>
    %cst_59 = arith.constant dense<0.000000e+00> : vector<8x32xf32>
    %60 = tpu.matmul %57, %59, %cst_59 {dimension_numbers = #tpu.dot_dimension_numbers<[1], [0], [0], [1], [0, 0, 1, 1], [], []>} : vector<8x16xf32>, vector<16x32xf32>, vector<8x32xf32> -> vector<8x32xf32>
    %61 = arith.addf %56, %60 : vector<8x32xf32>
    %c24 = arith.constant 24 : index
    %c0_60 = arith.constant 0 : index
    %62 = vector.load %arg13[%c24, %c0_60] : memref<40x16xf32, #tpu.memory_space<vmem>>, vector<8x16xf32>
    %c3_61 = arith.constant 3 : index
    %c0_62 = arith.constant 0 : index
    %c0_63 = arith.constant 0 : index
    %63 = vector.load %arg7[%c3_61, %c0_62, %c0_63] : memref<5x16x32xf32, #tpu.memory_space<vmem>>, vector<1x16x32xf32>
    %64 = vector.shape_cast %63 : vector<1x16x32xf32> to vector<16x32xf32>
    %cst_64 = arith.constant dense<0.000000e+00> : vector<8x32xf32>
    %65 = tpu.matmul %62, %64, %cst_64 {dimension_numbers = #tpu.dot_dimension_numbers<[1], [0], [0], [1], [0, 0, 1, 1], [], []>} : vector<8x16xf32>, vector<16x32xf32>, vector<8x32xf32> -> vector<8x32xf32>
    %66 = arith.addf %61, %65 : vector<8x32xf32>
    %c32 = arith.constant 32 : index
    %c0_65 = arith.constant 0 : index
    %67 = vector.load %arg13[%c32, %c0_65] : memref<40x16xf32, #tpu.memory_space<vmem>>, vector<8x16xf32>
    %c4_66 = arith.constant 4 : index
    %c0_67 = arith.constant 0 : index
    %c0_68 = arith.constant 0 : index
    %68 = vector.load %arg7[%c4_66, %c0_67, %c0_68] : memref<5x16x32xf32, #tpu.memory_space<vmem>>, vector<1x16x32xf32>
    %69 = vector.shape_cast %68 : vector<1x16x32xf32> to vector<16x32xf32>
    %cst_69 = arith.constant dense<0.000000e+00> : vector<8x32xf32>
    %70 = tpu.matmul %67, %69, %cst_69 {dimension_numbers = #tpu.dot_dimension_numbers<[1], [0], [0], [1], [0, 0, 1, 1], [], []>} : vector<8x16xf32>, vector<16x32xf32>, vector<8x32xf32> -> vector<8x32xf32>
    %71 = arith.addf %66, %70 : vector<8x32xf32>
    %72 = vector.broadcast %5 : vector<1x32xf32> to vector<8x32xf32>
    %73 = arith.addf %71, %72 : vector<8x32xf32>
    %cst_70 = arith.constant 0.000000e+00 : f32
    %74 = vector.broadcast %cst_70 : f32 to vector<8x32xf32>
    %75 = arith.maximumf %73, %74 : vector<8x32xf32>
    %c0_71 = arith.constant 0 : index
    %c0_72 = arith.constant 0 : index
    %76 = vector.load %arg14[%c0_71, %c0_72] : memref<8x32xf32, #tpu.memory_space<vmem>>, vector<8x32xf32>
    tpu.vector_store %arg14[%c0_71, %c0_72], %75 {strides = array<i32>} : memref<8x32xf32, #tpu.memory_space<vmem>>, vector<8x32xf32>,
    %c0_73 = arith.constant 0 : index
    %c0_74 = arith.constant 0 : index
    %77 = vector.load %arg14[%c0_73, %c0_74] : memref<8x32xf32, #tpu.memory_space<vmem>>, vector<1x32xf32>
    %c0_75 = arith.constant 0 : index
    %c0_76 = arith.constant 0 : index
    %c0_77 = arith.constant 0 : index
    %78 = vector.load %arg9[%c0_75, %c0_76, %c0_77] : memref<8x32x8xf32, #tpu.memory_space<vmem>>, vector<1x32x8xf32>
    %79 = vector.shape_cast %78 : vector<1x32x8xf32> to vector<32x8xf32>
    %cst_78 = arith.constant dense<0.000000e+00> : vector<1x8xf32>
    %80 = tpu.matmul %77, %79, %cst_78 {dimension_numbers = #tpu.dot_dimension_numbers<[1], [0], [0], [1], [0, 0, 1, 1], [], []>} : vector<1x32xf32>, vector<32x8xf32>, vector<1x8xf32> -> vector<1x8xf32>
    %c1_79 = arith.constant 1 : index
    %c0_80 = arith.constant 0 : index
    %81 = vector.load %arg14[%c1_79, %c0_80] : memref<8x32xf32, #tpu.memory_space<vmem>>, vector<1x32xf32>
    %c1_81 = arith.constant 1 : index
    %c0_82 = arith.constant 0 : index
    %c0_83 = arith.constant 0 : index
    %82 = vector.load %arg9[%c1_81, %c0_82, %c0_83] : memref<8x32x8xf32, #tpu.memory_space<vmem>>, vector<1x32x8xf32>
    %83 = vector.shape_cast %82 : vector<1x32x8xf32> to vector<32x8xf32>
    %cst_84 = arith.constant dense<0.000000e+00> : vector<1x8xf32>
    %84 = tpu.matmul %81, %83, %cst_84 {dimension_numbers = #tpu.dot_dimension_numbers<[1], [0], [0], [1], [0, 0, 1, 1], [], []>} : vector<1x32xf32>, vector<32x8xf32>, vector<1x8xf32> -> vector<1x8xf32>
    %85 = arith.addf %80, %84 : vector<1x8xf32>
    %c2_85 = arith.constant 2 : index
    %c0_86 = arith.constant 0 : index
    %86 = vector.load %arg14[%c2_85, %c0_86] : memref<8x32xf32, #tpu.memory_space<vmem>>, vector<1x32xf32>
    %c2_87 = arith.constant 2 : index
    %c0_88 = arith.constant 0 : index
    %c0_89 = arith.constant 0 : index
    %87 = vector.load %arg9[%c2_87, %c0_88, %c0_89] : memref<8x32x8xf32, #tpu.memory_space<vmem>>, vector<1x32x8xf32>
    %88 = vector.shape_cast %87 : vector<1x32x8xf32> to vector<32x8xf32>
    %cst_90 = arith.constant dense<0.000000e+00> : vector<1x8xf32>
    %89 = tpu.matmul %86, %88, %cst_90 {dimension_numbers = #tpu.dot_dimension_numbers<[1], [0], [0], [1], [0, 0, 1, 1], [], []>} : vector<1x32xf32>, vector<32x8xf32>, vector<1x8xf32> -> vector<1x8xf32>
    %90 = arith.addf %85, %89 : vector<1x8xf32>
    %c3_91 = arith.constant 3 : index
    %c0_92 = arith.constant 0 : index
    %91 = vector.load %arg14[%c3_91, %c0_92] : memref<8x32xf32, #tpu.memory_space<vmem>>, vector<1x32xf32>
    %c3_93 = arith.constant 3 : index
    %c0_94 = arith.constant 0 : index
    %c0_95 = arith.constant 0 : index
    %92 = vector.load %arg9[%c3_93, %c0_94, %c0_95] : memref<8x32x8xf32, #tpu.memory_space<vmem>>, vector<1x32x8xf32>
    %93 = vector.shape_cast %92 : vector<1x32x8xf32> to vector<32x8xf32>
    %cst_96 = arith.constant dense<0.000000e+00> : vector<1x8xf32>
    %94 = tpu.matmul %91, %93, %cst_96 {dimension_numbers = #tpu.dot_dimension_numbers<[1], [0], [0], [1], [0, 0, 1, 1], [], []>} : vector<1x32xf32>, vector<32x8xf32>, vector<1x8xf32> -> vector<1x8xf32>
    %95 = arith.addf %90, %94 : vector<1x8xf32>
    %c4_97 = arith.constant 4 : index
    %c0_98 = arith.constant 0 : index
    %96 = vector.load %arg14[%c4_97, %c0_98] : memref<8x32xf32, #tpu.memory_space<vmem>>, vector<1x32xf32>
    %c4_99 = arith.constant 4 : index
    %c0_100 = arith.constant 0 : index
    %c0_101 = arith.constant 0 : index
    %97 = vector.load %arg9[%c4_99, %c0_100, %c0_101] : memref<8x32x8xf32, #tpu.memory_space<vmem>>, vector<1x32x8xf32>
    %98 = vector.shape_cast %97 : vector<1x32x8xf32> to vector<32x8xf32>
    %cst_102 = arith.constant dense<0.000000e+00> : vector<1x8xf32>
    %99 = tpu.matmul %96, %98, %cst_102 {dimension_numbers = #tpu.dot_dimension_numbers<[1], [0], [0], [1], [0, 0, 1, 1], [], []>} : vector<1x32xf32>, vector<32x8xf32>, vector<1x8xf32> -> vector<1x8xf32>
    %100 = arith.addf %95, %99 : vector<1x8xf32>
    %c5 = arith.constant 5 : index
    %c0_103 = arith.constant 0 : index
    %101 = vector.load %arg14[%c5, %c0_103] : memref<8x32xf32, #tpu.memory_space<vmem>>, vector<1x32xf32>
    %c5_104 = arith.constant 5 : index
    %c0_105 = arith.constant 0 : index
    %c0_106 = arith.constant 0 : index
    %102 = vector.load %arg9[%c5_104, %c0_105, %c0_106] : memref<8x32x8xf32, #tpu.memory_space<vmem>>, vector<1x32x8xf32>
    %103 = vector.shape_cast %102 : vector<1x32x8xf32> to vector<32x8xf32>
    %cst_107 = arith.constant dense<0.000000e+00> : vector<1x8xf32>
    %104 = tpu.matmul %101, %103, %cst_107 {dimension_numbers = #tpu.dot_dimension_numbers<[1], [0], [0], [1], [0, 0, 1, 1], [], []>} : vector<1x32xf32>, vector<32x8xf32>, vector<1x8xf32> -> vector<1x8xf32>
    %105 = arith.addf %100, %104 : vector<1x8xf32>
    %c6 = arith.constant 6 : index
    %c0_108 = arith.constant 0 : index
    %106 = vector.load %arg14[%c6, %c0_108] : memref<8x32xf32, #tpu.memory_space<vmem>>, vector<1x32xf32>
    %c6_109 = arith.constant 6 : index
    %c0_110 = arith.constant 0 : index
    %c0_111 = arith.constant 0 : index
    %107 = vector.load %arg9[%c6_109, %c0_110, %c0_111] : memref<8x32x8xf32, #tpu.memory_space<vmem>>, vector<1x32x8xf32>
    %108 = vector.shape_cast %107 : vector<1x32x8xf32> to vector<32x8xf32>
    %cst_112 = arith.constant dense<0.000000e+00> : vector<1x8xf32>
    %109 = tpu.matmul %106, %108, %cst_112 {dimension_numbers = #tpu.dot_dimension_numbers<[1], [0], [0], [1], [0, 0, 1, 1], [], []>} : vector<1x32xf32>, vector<32x8xf32>, vector<1x8xf32> -> vector<1x8xf32>
    %110 = arith.addf %105, %109 : vector<1x8xf32>
    %c7 = arith.constant 7 : index
    %c0_113 = arith.constant 0 : index
    %111 = vector.load %arg14[%c7, %c0_113] : memref<8x32xf32, #tpu.memory_space<vmem>>, vector<1x32xf32>
    %c7_114 = arith.constant 7 : index
    %c0_115 = arith.constant 0 : index
    %c0_116 = arith.constant 0 : index
    %112 = vector.load %arg9[%c7_114, %c0_115, %c0_116] : memref<8x32x8xf32, #tpu.memory_space<vmem>>, vector<1x32x8xf32>
    %113 = vector.shape_cast %112 : vector<1x32x8xf32> to vector<32x8xf32>
    %cst_117 = arith.constant dense<0.000000e+00> : vector<1x8xf32>
    %114 = tpu.matmul %111, %113, %cst_117 {dimension_numbers = #tpu.dot_dimension_numbers<[1], [0], [0], [1], [0, 0, 1, 1], [], []>} : vector<1x32xf32>, vector<32x8xf32>, vector<1x8xf32> -> vector<1x8xf32>
    %115 = arith.addf %110, %114 : vector<1x8xf32>
    %116 = arith.addf %115, %6 : vector<1x8xf32>
    %c1_118 = arith.constant 1 : index
    %c0_119 = arith.constant 0 : index
    %117 = memref.load %arg0[%c1_118, %c0_119] : memref<2x1xf32, #tpu.memory_space<smem>>
    %118 = vector.broadcast %117 : f32 to vector<200x5xf32>
    %119 = arith.mulf %118, %0 : vector<200x5xf32>
    %120 = arith.addf %119, %1 : vector<200x5xf32>
    %cst_120 = arith.constant 0.000000e+00 : f32
    %121 = vector.broadcast %cst_120 : f32 to vector<200x5xf32>
    %122 = arith.maximumf %120, %121 : vector<200x5xf32>
    %cst_121 = arith.constant dense<0.000000e+00> : vector<200x8xf32>
    %123 = tpu.matmul %122, %2, %cst_121 {dimension_numbers = #tpu.dot_dimension_numbers<[1], [0], [0], [1], [0, 0, 1, 1], [], []>} : vector<200x5xf32>, vector<5x8xf32>, vector<200x8xf32> -> vector<200x8xf32>
    %124 = vector.broadcast %3 : vector<1x8xf32> to vector<200x8xf32>
    %125 = arith.addf %123, %124 : vector<200x8xf32>
    %cst_122 = arith.constant 0.000000e+00 : f32
    %126 = vector.broadcast %cst_122 : f32 to vector<200x8xf32>
    %127 = arith.maximumf %125, %126 : vector<200x8xf32>
    %c0_123 = arith.constant 0 : index
    %c0_124 = arith.constant 0 : index
    %128 = vector.load %arg12[%c0_123, %c0_124] : memref<200x8xf32, #tpu.memory_space<vmem>>, vector<200x8xf32>
    tpu.vector_store %arg12[%c0_123, %c0_124], %127 {strides = array<i32>} : memref<200x8xf32, #tpu.memory_space<vmem>>, vector<200x8xf32>,
    %c0_125 = arith.constant 0 : index
    %c0_126 = arith.constant 0 : index
    %129 = vector.load %arg12[%c0_125, %c0_126] : memref<200x8xf32, #tpu.memory_space<vmem>>, vector<40x8xf32>
    %c0_127 = arith.constant 0 : index
    %c0_128 = arith.constant 0 : index
    %c0_129 = arith.constant 0 : index
    %130 = vector.load %arg5[%c0_127, %c0_128, %c0_129] : memref<5x8x16xf32, #tpu.memory_space<vmem>>, vector<1x8x16xf32>
    %131 = vector.shape_cast %130 : vector<1x8x16xf32> to vector<8x16xf32>
    %cst_130 = arith.constant dense<0.000000e+00> : vector<40x16xf32>
    %132 = tpu.matmul %129, %131, %cst_130 {dimension_numbers = #tpu.dot_dimension_numbers<[1], [0], [0], [1], [0, 0, 1, 1], [], []>} : vector<40x8xf32>, vector<8x16xf32>, vector<40x16xf32> -> vector<40x16xf32>
    %c40_131 = arith.constant 40 : index
    %c0_132 = arith.constant 0 : index
    %133 = vector.load %arg12[%c40_131, %c0_132] : memref<200x8xf32, #tpu.memory_space<vmem>>, vector<40x8xf32>
    %c1_133 = arith.constant 1 : index
    %c0_134 = arith.constant 0 : index
    %c0_135 = arith.constant 0 : index
    %134 = vector.load %arg5[%c1_133, %c0_134, %c0_135] : memref<5x8x16xf32, #tpu.memory_space<vmem>>, vector<1x8x16xf32>
    %135 = vector.shape_cast %134 : vector<1x8x16xf32> to vector<8x16xf32>
    %cst_136 = arith.constant dense<0.000000e+00> : vector<40x16xf32>
    %136 = tpu.matmul %133, %135, %cst_136 {dimension_numbers = #tpu.dot_dimension_numbers<[1], [0], [0], [1], [0, 0, 1, 1], [], []>} : vector<40x8xf32>, vector<8x16xf32>, vector<40x16xf32> -> vector<40x16xf32>
    %137 = arith.addf %132, %136 : vector<40x16xf32>
    %c80_137 = arith.constant 80 : index
    %c0_138 = arith.constant 0 : index
    %138 = vector.load %arg12[%c80_137, %c0_138] : memref<200x8xf32, #tpu.memory_space<vmem>>, vector<40x8xf32>
    %c2_139 = arith.constant 2 : index
    %c0_140 = arith.constant 0 : index
    %c0_141 = arith.constant 0 : index
    %139 = vector.load %arg5[%c2_139, %c0_140, %c0_141] : memref<5x8x16xf32, #tpu.memory_space<vmem>>, vector<1x8x16xf32>
    %140 = vector.shape_cast %139 : vector<1x8x16xf32> to vector<8x16xf32>
    %cst_142 = arith.constant dense<0.000000e+00> : vector<40x16xf32>
    %141 = tpu.matmul %138, %140, %cst_142 {dimension_numbers = #tpu.dot_dimension_numbers<[1], [0], [0], [1], [0, 0, 1, 1], [], []>} : vector<40x8xf32>, vector<8x16xf32>, vector<40x16xf32> -> vector<40x16xf32>
    %142 = arith.addf %137, %141 : vector<40x16xf32>
    %c120_143 = arith.constant 120 : index
    %c0_144 = arith.constant 0 : index
    %143 = vector.load %arg12[%c120_143, %c0_144] : memref<200x8xf32, #tpu.memory_space<vmem>>, vector<40x8xf32>
    %c3_145 = arith.constant 3 : index
    %c0_146 = arith.constant 0 : index
    %c0_147 = arith.constant 0 : index
    %144 = vector.load %arg5[%c3_145, %c0_146, %c0_147] : memref<5x8x16xf32, #tpu.memory_space<vmem>>, vector<1x8x16xf32>
    %145 = vector.shape_cast %144 : vector<1x8x16xf32> to vector<8x16xf32>
    %cst_148 = arith.constant dense<0.000000e+00> : vector<40x16xf32>
    %146 = tpu.matmul %143, %145, %cst_148 {dimension_numbers = #tpu.dot_dimension_numbers<[1], [0], [0], [1], [0, 0, 1, 1], [], []>} : vector<40x8xf32>, vector<8x16xf32>, vector<40x16xf32> -> vector<40x16xf32>
    %147 = arith.addf %142, %146 : vector<40x16xf32>
    %c160_149 = arith.constant 160 : index
    %c0_150 = arith.constant 0 : index
    %148 = vector.load %arg12[%c160_149, %c0_150] : memref<200x8xf32, #tpu.memory_space<vmem>>, vector<40x8xf32>
    %c4_151 = arith.constant 4 : index
    %c0_152 = arith.constant 0 : index
    %c0_153 = arith.constant 0 : index
    %149 = vector.load %arg5[%c4_151, %c0_152, %c0_153] : memref<5x8x16xf32, #tpu.memory_space<vmem>>, vector<1x8x16xf32>
    %150 = vector.shape_cast %149 : vector<1x8x16xf32> to vector<8x16xf32>
    %cst_154 = arith.constant dense<0.000000e+00> : vector<40x16xf32>
    %151 = tpu.matmul %148, %150, %cst_154 {dimension_numbers = #tpu.dot_dimension_numbers<[1], [0], [0], [1], [0, 0, 1, 1], [], []>} : vector<40x8xf32>, vector<8x16xf32>, vector<40x16xf32> -> vector<40x16xf32>
    %152 = arith.addf %147, %151 : vector<40x16xf32>
    %153 = vector.broadcast %4 : vector<1x16xf32> to vector<40x16xf32>
    %154 = arith.addf %152, %153 : vector<40x16xf32>
    %cst_155 = arith.constant 0.000000e+00 : f32
    %155 = vector.broadcast %cst_155 : f32 to vector<40x16xf32>
    %156 = arith.maximumf %154, %155 : vector<40x16xf32>
    %c0_156 = arith.constant 0 : index
    %c0_157 = arith.constant 0 : index
    %157 = vector.load %arg13[%c0_156, %c0_157] : memref<40x16xf32, #tpu.memory_space<vmem>>, vector<40x16xf32>
    tpu.vector_store %arg13[%c0_156, %c0_157], %156 {strides = array<i32>} : memref<40x16xf32, #tpu.memory_space<vmem>>, vector<40x16xf32>,
    %c0_158 = arith.constant 0 : index
    %c0_159 = arith.constant 0 : index
    %158 = vector.load %arg13[%c0_158, %c0_159] : memref<40x16xf32, #tpu.memory_space<vmem>>, vector<8x16xf32>
    %c0_160 = arith.constant 0 : index
    %c0_161 = arith.constant 0 : index
    %c0_162 = arith.constant 0 : index
    %159 = vector.load %arg7[%c0_160, %c0_161, %c0_162] : memref<5x16x32xf32, #tpu.memory_space<vmem>>, vector<1x16x32xf32>
    %160 = vector.shape_cast %159 : vector<1x16x32xf32> to vector<16x32xf32>
    %cst_163 = arith.constant dense<0.000000e+00> : vector<8x32xf32>
    %161 = tpu.matmul %158, %160, %cst_163 {dimension_numbers = #tpu.dot_dimension_numbers<[1], [0], [0], [1], [0, 0, 1, 1], [], []>} : vector<8x16xf32>, vector<16x32xf32>, vector<8x32xf32> -> vector<8x32xf32>
    %c8_164 = arith.constant 8 : index
    %c0_165 = arith.constant 0 : index
    %162 = vector.load %arg13[%c8_164, %c0_165] : memref<40x16xf32, #tpu.memory_space<vmem>>, vector<8x16xf32>
    %c1_166 = arith.constant 1 : index
    %c0_167 = arith.constant 0 : index
    %c0_168 = arith.constant 0 : index
    %163 = vector.load %arg7[%c1_166, %c0_167, %c0_168] : memref<5x16x32xf32, #tpu.memory_space<vmem>>, vector<1x16x32xf32>
    %164 = vector.shape_cast %163 : vector<1x16x32xf32> to vector<16x32xf32>
    %cst_169 = arith.constant dense<0.000000e+00> : vector<8x32xf32>
    %165 = tpu.matmul %162, %164, %cst_169 {dimension_numbers = #tpu.dot_dimension_numbers<[1], [0], [0], [1], [0, 0, 1, 1], [], []>} : vector<8x16xf32>, vector<16x32xf32>, vector<8x32xf32> -> vector<8x32xf32>
    %166 = arith.addf %161, %165 : vector<8x32xf32>
    %c16_170 = arith.constant 16 : index
    %c0_171 = arith.constant 0 : index
    %167 = vector.load %arg13[%c16_170, %c0_171] : memref<40x16xf32, #tpu.memory_space<vmem>>, vector<8x16xf32>
    %c2_172 = arith.constant 2 : index
    %c0_173 = arith.constant 0 : index
    %c0_174 = arith.constant 0 : index
    %168 = vector.load %arg7[%c2_172, %c0_173, %c0_174] : memref<5x16x32xf32, #tpu.memory_space<vmem>>, vector<1x16x32xf32>
    %169 = vector.shape_cast %168 : vector<1x16x32xf32> to vector<16x32xf32>
    %cst_175 = arith.constant dense<0.000000e+00> : vector<8x32xf32>
    %170 = tpu.matmul %167, %169, %cst_175 {dimension_numbers = #tpu.dot_dimension_numbers<[1], [0], [0], [1], [0, 0, 1, 1], [], []>} : vector<8x16xf32>, vector<16x32xf32>, vector<8x32xf32> -> vector<8x32xf32>
    %171 = arith.addf %166, %170 : vector<8x32xf32>
    %c24_176 = arith.constant 24 : index
    %c0_177 = arith.constant 0 : index
    %172 = vector.load %arg13[%c24_176, %c0_177] : memref<40x16xf32, #tpu.memory_space<vmem>>, vector<8x16xf32>
    %c3_178 = arith.constant 3 : index
    %c0_179 = arith.constant 0 : index
    %c0_180 = arith.constant 0 : index
    %173 = vector.load %arg7[%c3_178, %c0_179, %c0_180] : memref<5x16x32xf32, #tpu.memory_space<vmem>>, vector<1x16x32xf32>
    %174 = vector.shape_cast %173 : vector<1x16x32xf32> to vector<16x32xf32>
    %cst_181 = arith.constant dense<0.000000e+00> : vector<8x32xf32>
    %175 = tpu.matmul %172, %174, %cst_181 {dimension_numbers = #tpu.dot_dimension_numbers<[1], [0], [0], [1], [0, 0, 1, 1], [], []>} : vector<8x16xf32>, vector<16x32xf32>, vector<8x32xf32> -> vector<8x32xf32>
    %176 = arith.addf %171, %175 : vector<8x32xf32>
    %c32_182 = arith.constant 32 : index
    %c0_183 = arith.constant 0 : index
    %177 = vector.load %arg13[%c32_182, %c0_183] : memref<40x16xf32, #tpu.memory_space<vmem>>, vector<8x16xf32>
    %c4_184 = arith.constant 4 : index
    %c0_185 = arith.constant 0 : index
    %c0_186 = arith.constant 0 : index
    %178 = vector.load %arg7[%c4_184, %c0_185, %c0_186] : memref<5x16x32xf32, #tpu.memory_space<vmem>>, vector<1x16x32xf32>
    %179 = vector.shape_cast %178 : vector<1x16x32xf32> to vector<16x32xf32>
    %cst_187 = arith.constant dense<0.000000e+00> : vector<8x32xf32>
    %180 = tpu.matmul %177, %179, %cst_187 {dimension_numbers = #tpu.dot_dimension_numbers<[1], [0], [0], [1], [0, 0, 1, 1], [], []>} : vector<8x16xf32>, vector<16x32xf32>, vector<8x32xf32> -> vector<8x32xf32>
    %181 = arith.addf %176, %180 : vector<8x32xf32>
    %182 = vector.broadcast %5 : vector<1x32xf32> to vector<8x32xf32>
    %183 = arith.addf %181, %182 : vector<8x32xf32>
    %cst_188 = arith.constant 0.000000e+00 : f32
    %184 = vector.broadcast %cst_188 : f32 to vector<8x32xf32>
    %185 = arith.maximumf %183, %184 : vector<8x32xf32>
    %c0_189 = arith.constant 0 : index
    %c0_190 = arith.constant 0 : index
    %186 = vector.load %arg14[%c0_189, %c0_190] : memref<8x32xf32, #tpu.memory_space<vmem>>, vector<8x32xf32>
    tpu.vector_store %arg14[%c0_189, %c0_190], %185 {strides = array<i32>} : memref<8x32xf32, #tpu.memory_space<vmem>>, vector<8x32xf32>,
    %c0_191 = arith.constant 0 : index
    %c0_192 = arith.constant 0 : index
    %187 = vector.load %arg14[%c0_191, %c0_192] : memref<8x32xf32, #tpu.memory_space<vmem>>, vector<1x32xf32>
    %c0_193 = arith.constant 0 : index
    %c0_194 = arith.constant 0 : index
    %c0_195 = arith.constant 0 : index
    %188 = vector.load %arg9[%c0_193, %c0_194, %c0_195] : memref<8x32x8xf32, #tpu.memory_space<vmem>>, vector<1x32x8xf32>
    %189 = vector.shape_cast %188 : vector<1x32x8xf32> to vector<32x8xf32>
    %cst_196 = arith.constant dense<0.000000e+00> : vector<1x8xf32>
    %190 = tpu.matmul %187, %189, %cst_196 {dimension_numbers = #tpu.dot_dimension_numbers<[1], [0], [0], [1], [0, 0, 1, 1], [], []>} : vector<1x32xf32>, vector<32x8xf32>, vector<1x8xf32> -> vector<1x8xf32>
    %c1_197 = arith.constant 1 : index
    %c0_198 = arith.constant 0 : index
    %191 = vector.load %arg14[%c1_197, %c0_198] : memref<8x32xf32, #tpu.memory_space<vmem>>, vector<1x32xf32>
    %c1_199 = arith.constant 1 : index
    %c0_200 = arith.constant 0 : index
    %c0_201 = arith.constant 0 : index
    %192 = vector.load %arg9[%c1_199, %c0_200, %c0_201] : memref<8x32x8xf32, #tpu.memory_space<vmem>>, vector<1x32x8xf32>
    %193 = vector.shape_cast %192 : vector<1x32x8xf32> to vector<32x8xf32>
    %cst_202 = arith.constant dense<0.000000e+00> : vector<1x8xf32>
    %194 = tpu.matmul %191, %193, %cst_202 {dimension_numbers = #tpu.dot_dimension_numbers<[1], [0], [0], [1], [0, 0, 1, 1], [], []>} : vector<1x32xf32>, vector<32x8xf32>, vector<1x8xf32> -> vector<1x8xf32>
    %195 = arith.addf %190, %194 : vector<1x8xf32>
    %c2_203 = arith.constant 2 : index
    %c0_204 = arith.constant 0 : index
    %196 = vector.load %arg14[%c2_203, %c0_204] : memref<8x32xf32, #tpu.memory_space<vmem>>, vector<1x32xf32>
    %c2_205 = arith.constant 2 : index
    %c0_206 = arith.constant 0 : index
    %c0_207 = arith.constant 0 : index
    %197 = vector.load %arg9[%c2_205, %c0_206, %c0_207] : memref<8x32x8xf32, #tpu.memory_space<vmem>>, vector<1x32x8xf32>
    %198 = vector.shape_cast %197 : vector<1x32x8xf32> to vector<32x8xf32>
    %cst_208 = arith.constant dense<0.000000e+00> : vector<1x8xf32>
    %199 = tpu.matmul %196, %198, %cst_208 {dimension_numbers = #tpu.dot_dimension_numbers<[1], [0], [0], [1], [0, 0, 1, 1], [], []>} : vector<1x32xf32>, vector<32x8xf32>, vector<1x8xf32> -> vector<1x8xf32>
    %200 = arith.addf %195, %199 : vector<1x8xf32>
    %c3_209 = arith.constant 3 : index
    %c0_210 = arith.constant 0 : index
    %201 = vector.load %arg14[%c3_209, %c0_210] : memref<8x32xf32, #tpu.memory_space<vmem>>, vector<1x32xf32>
    %c3_211 = arith.constant 3 : index
    %c0_212 = arith.constant 0 : index
    %c0_213 = arith.constant 0 : index
    %202 = vector.load %arg9[%c3_211, %c0_212, %c0_213] : memref<8x32x8xf32, #tpu.memory_space<vmem>>, vector<1x32x8xf32>
    %203 = vector.shape_cast %202 : vector<1x32x8xf32> to vector<32x8xf32>
    %cst_214 = arith.constant dense<0.000000e+00> : vector<1x8xf32>
    %204 = tpu.matmul %201, %203, %cst_214 {dimension_numbers = #tpu.dot_dimension_numbers<[1], [0], [0], [1], [0, 0, 1, 1], [], []>} : vector<1x32xf32>, vector<32x8xf32>, vector<1x8xf32> -> vector<1x8xf32>
    %205 = arith.addf %200, %204 : vector<1x8xf32>
    %c4_215 = arith.constant 4 : index
    %c0_216 = arith.constant 0 : index
    %206 = vector.load %arg14[%c4_215, %c0_216] : memref<8x32xf32, #tpu.memory_space<vmem>>, vector<1x32xf32>
    %c4_217 = arith.constant 4 : index
    %c0_218 = arith.constant 0 : index
    %c0_219 = arith.constant 0 : index
    %207 = vector.load %arg9[%c4_217, %c0_218, %c0_219] : memref<8x32x8xf32, #tpu.memory_space<vmem>>, vector<1x32x8xf32>
    %208 = vector.shape_cast %207 : vector<1x32x8xf32> to vector<32x8xf32>
    %cst_220 = arith.constant dense<0.000000e+00> : vector<1x8xf32>
    %209 = tpu.matmul %206, %208, %cst_220 {dimension_numbers = #tpu.dot_dimension_numbers<[1], [0], [0], [1], [0, 0, 1, 1], [], []>} : vector<1x32xf32>, vector<32x8xf32>, vector<1x8xf32> -> vector<1x8xf32>
    %210 = arith.addf %205, %209 : vector<1x8xf32>
    %c5_221 = arith.constant 5 : index
    %c0_222 = arith.constant 0 : index
    %211 = vector.load %arg14[%c5_221, %c0_222] : memref<8x32xf32, #tpu.memory_space<vmem>>, vector<1x32xf32>
    %c5_223 = arith.constant 5 : index
    %c0_224 = arith.constant 0 : index
    %c0_225 = arith.constant 0 : index
    %212 = vector.load %arg9[%c5_223, %c0_224, %c0_225] : memref<8x32x8xf32, #tpu.memory_space<vmem>>, vector<1x32x8xf32>
    %213 = vector.shape_cast %212 : vector<1x32x8xf32> to vector<32x8xf32>
    %cst_226 = arith.constant dense<0.000000e+00> : vector<1x8xf32>
    %214 = tpu.matmul %211, %213, %cst_226 {dimension_numbers = #tpu.dot_dimension_numbers<[1], [0], [0], [1], [0, 0, 1, 1], [], []>} : vector<1x32xf32>, vector<32x8xf32>, vector<1x8xf32> -> vector<1x8xf32>
    %215 = arith.addf %210, %214 : vector<1x8xf32>
    %c6_227 = arith.constant 6 : index
    %c0_228 = arith.constant 0 : index
    %216 = vector.load %arg14[%c6_227, %c0_228] : memref<8x32xf32, #tpu.memory_space<vmem>>, vector<1x32xf32>
    %c6_229 = arith.constant 6 : index
    %c0_230 = arith.constant 0 : index
    %c0_231 = arith.constant 0 : index
    %217 = vector.load %arg9[%c6_229, %c0_230, %c0_231] : memref<8x32x8xf32, #tpu.memory_space<vmem>>, vector<1x32x8xf32>
    %218 = vector.shape_cast %217 : vector<1x32x8xf32> to vector<32x8xf32>
    %cst_232 = arith.constant dense<0.000000e+00> : vector<1x8xf32>
    %219 = tpu.matmul %216, %218, %cst_232 {dimension_numbers = #tpu.dot_dimension_numbers<[1], [0], [0], [1], [0, 0, 1, 1], [], []>} : vector<1x32xf32>, vector<32x8xf32>, vector<1x8xf32> -> vector<1x8xf32>
    %220 = arith.addf %215, %219 : vector<1x8xf32>
    %c7_233 = arith.constant 7 : index
    %c0_234 = arith.constant 0 : index
    %221 = vector.load %arg14[%c7_233, %c0_234] : memref<8x32xf32, #tpu.memory_space<vmem>>, vector<1x32xf32>
    %c7_235 = arith.constant 7 : index
    %c0_236 = arith.constant 0 : index
    %c0_237 = arith.constant 0 : index
    %222 = vector.load %arg9[%c7_235, %c0_236, %c0_237] : memref<8x32x8xf32, #tpu.memory_space<vmem>>, vector<1x32x8xf32>
    %223 = vector.shape_cast %222 : vector<1x32x8xf32> to vector<32x8xf32>
    %cst_238 = arith.constant dense<0.000000e+00> : vector<1x8xf32>
    %224 = tpu.matmul %221, %223, %cst_238 {dimension_numbers = #tpu.dot_dimension_numbers<[1], [0], [0], [1], [0, 0, 1, 1], [], []>} : vector<1x32xf32>, vector<32x8xf32>, vector<1x8xf32> -> vector<1x8xf32>
    %225 = arith.addf %220, %224 : vector<1x8xf32>
    %226 = arith.addf %225, %6 : vector<1x8xf32>
    %227 = tpu.concatenate %116, %226 in 0 : vector<1x8xf32>, vector<1x8xf32> -> vector<2x8xf32>
    %c0_239 = arith.constant 0 : index
    %c0_240 = arith.constant 0 : index
    %228 = vector.load %arg11[%c0_239, %c0_240] : memref<2x8xf32, #tpu.memory_space<vmem>>, vector<2x8xf32>
    tpu.vector_store %arg11[%c0_239, %c0_240], %227 {strides = array<i32>} : memref<2x8xf32, #tpu.memory_space<vmem>>, vector<2x8xf32>,
    return
  }
}

</mosaic_0001>

<llo_original>
// kernel: forward.1
$region0: #{forward.1}
  #allocation0 [shape = 'u32[]', space=smem, size = 0x4, offset = 0x4, fixed_abs, tag = 'smem constant byte address 0x4 - core index']
  #allocation1 [shape = 'u32[144,128]{1,0:T(1,128)}', space=vmem, size = 0x12000, scoped, tag = 'internal scratch']
  #allocation2 [shape = 'f32[200,8]{1,0:T(8,128)}', space=vmem, size = 0x19000, scoped, tag = 'scratch operand']
  #allocation3 [shape = 'f32[40,16]{1,0:T(8,128)}', space=vmem, size = 0x5000, scoped, tag = 'scratch operand']
  #allocation4 [shape = 'f32[8,32]{1,0:T(8,128)}', space=vmem, size = 0x1000, scoped, tag = 'scratch operand']
  %s0 = inlined_call_operand.vmem [shape: f32[2,1], index: 0, kind: input, shape index: {}]
  %s1 = inlined_call_operand.vmem [shape: f32[200,5], index: 1, kind: input, shape index: {}]
  %s2 = inlined_call_operand.vmem [shape: f32[200,5], index: 2, kind: input, shape index: {}]
  %s3 = inlined_call_operand.vmem [shape: f32[5,8], index: 3, kind: input, shape index: {}]
  %s4 = inlined_call_operand.vmem [shape: f32[1,8], index: 4, kind: input, shape index: {}]
  %s5 = inlined_call_operand.vmem [shape: f32[5,8,16], index: 5, kind: input, shape index: {}]
  %s6 = inlined_call_operand.vmem [shape: f32[1,16], index: 6, kind: input, shape index: {}]
  %s7 = inlined_call_operand.vmem [shape: f32[5,16,32], index: 7, kind: input, shape index: {}]
  %s8 = inlined_call_operand.vmem [shape: f32[1,32], index: 8, kind: input, shape index: {}]
  %s9 = inlined_call_operand.vmem [shape: f32[8,32,8], index: 9, kind: input, shape index: {}]
  %s10 = inlined_call_operand.vmem [shape: f32[1,8], index: 10, kind: input, shape index: {}]
  %s11 = inlined_call_operand.hbm [shape: f32[2,8], index: 11, kind: output, shape index: {}]
  %s12 = sld [smem:[#allocation0]]
  $region58: #{forward.1} parent=0
    _
  %s14 = ssub.s32 1, %s12
  %s15 = scalar_select 0, %s14, %s12
  $region1: #{forward.1} parent=0
    #allocation5 [shape = 'u8[1024]{0}', space=smem, size = 0x400, scoped, tag = 'input window, operand 0, single buffered']
    #allocation6 [shape = 's32[1]{0}', space=sflag, size = 0x4, scoped, tag = 'scoped memory for forward.1']
    #allocation7 [shape = 's32[1]{0}', space=sflag, size = 0x4, scoped, tag = 'scoped memory for forward.1']
    #allocation8 [shape = 'u8[1024]{0}', space=vmem, size = 0x400, scoped, tag = 'output window, operand 0, single buffered']
    %16 = vsyncpa [#allocation7], 0
    %17 = vsyncpa [#allocation6], 0
    // Predicated region
    $region2: #{forward.1} parent=1 // pred_check
      _
    $region3: #{forward.1} parent=1 // pred_check_branch
      %19 = sbr.rel (0) target = $region5
    $region4: #{forward.1} parent=1 // pred_region
      %s21 = ssub.s32 32, 32
      %22 = vsyncadd [#allocation7], %s21
      %s24 = sshll.u32 %s0, 4
      %s25 = int_to_ptr.vmem [resolvable:$true] %s24
      %27 = dma.vmem_to_smem %s25, 32, [#allocation5], [#allocation7]
    $region5: #{forward.1} parent=1 // pred_fallthru
      _
    // Predicated region
    $region6: #{forward.1} parent=1 // pred_check
      _
    $region7: #{forward.1} parent=1 // pred_check_branch
      %29 = sbr.rel (0) target = $region9
    $region8: #{forward.1} parent=1 // pred_region
      _
    $region9: #{forward.1} parent=1 // pred_fallthru
      _
    // Predicated region
    $region10: #{forward.1} parent=1 // pred_check
      _
    $region11: #{forward.1} parent=1 // pred_check_branch
      %31 = sbr.rel (0) target = $region13
    $region12: #{forward.1} parent=1 // pred_region
      _
    $region13: #{forward.1} parent=1 // pred_fallthru
      _
    // Predicated region
    $region14: #{forward.1} parent=1 // pred_check
      _
    $region15: #{forward.1} parent=1 // pred_check_branch
      %33 = sbr.rel (0) target = $region17
    $region16: #{forward.1} parent=1 // pred_region
      _
    $region17: #{forward.1} parent=1 // pred_fallthru
      _
    // Predicated region
    $region18: #{forward.1} parent=1 // pred_check
      _
    $region19: #{forward.1} parent=1 // pred_check_branch
      %35 = sbr.rel (0) target = $region21
    $region20: #{forward.1} parent=1 // pred_region
      _
    $region21: #{forward.1} parent=1 // pred_fallthru
      _
    // Predicated region
    $region22: #{forward.1} parent=1 // pred_check
      _
    $region23: #{forward.1} parent=1 // pred_check_branch
      %37 = sbr.rel (0) target = $region25
    $region24: #{forward.1} parent=1 // pred_region
      _
    $region25: #{forward.1} parent=1 // pred_fallthru
      _
    // Predicated region
    $region26: #{forward.1} parent=1 // pred_check
      _
    $region27: #{forward.1} parent=1 // pred_check_branch
      %39 = sbr.rel (0) target = $region29
    $region28: #{forward.1} parent=1 // pred_region
      _
    $region29: #{forward.1} parent=1 // pred_fallthru
      _
    // Predicated region
    $region30: #{forward.1} parent=1 // pred_check
      _
    $region31: #{forward.1} parent=1 // pred_check_branch
      %41 = sbr.rel (0) target = $region33
    $region32: #{forward.1} parent=1 // pred_region
      _
    $region33: #{forward.1} parent=1 // pred_fallthru
      _
    // Predicated region
    $region34: #{forward.1} parent=1 // pred_check
      _
    $region35: #{forward.1} parent=1 // pred_check_branch
      %43 = sbr.rel (0) target = $region37
    $region36: #{forward.1} parent=1 // pred_region
      _
    $region37: #{forward.1} parent=1 // pred_fallthru
      _
    // Predicated region
    $region38: #{forward.1} parent=1 // pred_check
      _
    $region39: #{forward.1} parent=1 // pred_check_branch
      %45 = sbr.rel (0) target = $region41
    $region40: #{forward.1} parent=1 // pred_region
      _
    $region41: #{forward.1} parent=1 // pred_fallthru
      _
    // Predicated region
    $region42: #{forward.1} parent=1 // pred_check
      _
    $region43: #{forward.1} parent=1 // pred_check_branch
      %47 = sbr.rel (0) target = $region45
    $region44: #{forward.1} parent=1 // pred_region
      _
    $region45: #{forward.1} parent=1 // pred_fallthru
      _
    // Predicated region
    $region46: #{forward.1} parent=1 // pred_check
      _
    $region47: #{forward.1} parent=1 // pred_check_branch
      %49 = sbr.rel (0) target = $region49
    $region48: #{forward.1} parent=1 // pred_region
      %50 = dma.done [#allocation7], 32
    $region49: #{forward.1} parent=1 // pred_fallthru
      _
    %51 = sfence
    %v52 = vld [vmem:[%s1] sm:$0xff]
    %v53 = vld [vmem:[%s1 + $0x8] sm:$0xff]
    %v54 = vld [vmem:[%s1 + $0x10] sm:$0xff]
    %v55 = vld [vmem:[%s1 + $0x18] sm:$0xff]
    %v56 = vld [vmem:[%s1 + $0x20] sm:$0xff]
    %v57 = vld [vmem:[%s1 + $0x28] sm:$0xff]
    %v58 = vld [vmem:[%s1 + $0x30] sm:$0xff]
    %v59 = vld [vmem:[%s1 + $0x38] sm:$0xff]
    %v60 = vld [vmem:[%s1 + $0x40] sm:$0xff]
    %v61 = vld [vmem:[%s1 + $0x48] sm:$0xff]
    %v62 = vld [vmem:[%s1 + $0x50] sm:$0xff]
    %v63 = vld [vmem:[%s1 + $0x58] sm:$0xff]
    %v64 = vld [vmem:[%s1 + $0x60] sm:$0xff]
    %v65 = vld [vmem:[%s1 + $0x68] sm:$0xff]
    %v66 = vld [vmem:[%s1 + $0x70] sm:$0xff]
    %v67 = vld [vmem:[%s1 + $0x78] sm:$0xff]
    %v68 = vld [vmem:[%s1 + $0x80] sm:$0xff]
    %v69 = vld [vmem:[%s1 + $0x88] sm:$0xff]
    %v70 = vld [vmem:[%s1 + $0x90] sm:$0xff]
    %v71 = vld [vmem:[%s1 + $0x98] sm:$0xff]
    %v72 = vld [vmem:[%s1 + $0xa0] sm:$0xff]
    %v73 = vld [vmem:[%s1 + $0xa8] sm:$0xff]
    %v74 = vld [vmem:[%s1 + $0xb0] sm:$0xff]
    %v75 = vld [vmem:[%s1 + $0xb8] sm:$0xff]
    %v76 = vld [vmem:[%s1 + $0xc0] sm:$0xff]
    %v77 = vld [vmem:[%s2] sm:$0xff]
    %v78 = vld [vmem:[%s2 + $0x8] sm:$0xff]
    %v79 = vld [vmem:[%s2 + $0x10] sm:$0xff]
    %v80 = vld [vmem:[%s2 + $0x18] sm:$0xff]
    %v81 = vld [vmem:[%s2 + $0x20] sm:$0xff]
    %v82 = vld [vmem:[%s2 + $0x28] sm:$0xff]
    %v83 = vld [vmem:[%s2 + $0x30] sm:$0xff]
    %v84 = vld [vmem:[%s2 + $0x38] sm:$0xff]
    %v85 = vld [vmem:[%s2 + $0x40] sm:$0xff]
    %v86 = vld [vmem:[%s2 + $0x48] sm:$0xff]
    %v87 = vld [vmem:[%s2 + $0x50] sm:$0xff]
    %v88 = vld [vmem:[%s2 + $0x58] sm:$0xff]
    %v89 = vld [vmem:[%s2 + $0x60] sm:$0xff]
    %v90 = vld [vmem:[%s2 + $0x68] sm:$0xff]
    %v91 = vld [vmem:[%s2 + $0x70] sm:$0xff]
    %v92 = vld [vmem:[%s2 + $0x78] sm:$0xff]
    %v93 = vld [vmem:[%s2 + $0x80] sm:$0xff]
    %v94 = vld [vmem:[%s2 + $0x88] sm:$0xff]
    %v95 = vld [vmem:[%s2 + $0x90] sm:$0xff]
    %v96 = vld [vmem:[%s2 + $0x98] sm:$0xff]
    %v97 = vld [vmem:[%s2 + $0xa0] sm:$0xff]
    %v98 = vld [vmem:[%s2 + $0xa8] sm:$0xff]
    %v99 = vld [vmem:[%s2 + $0xb0] sm:$0xff]
    %v100 = vld [vmem:[%s2 + $0xb8] sm:$0xff]
    %v101 = vld [vmem:[%s2 + $0xc0] sm:$0xff]
    %v102 = vld [vmem:[%s3] sm:$0x1f]
    %v103 = vld [vmem:[%s4] sm:$0x1]
    %v104 = vld [vmem:[%s6] sm:$0x1]
    %v105 = vld [vmem:[%s8] sm:$0x1]
    %v106 = vld [vmem:[%s10] sm:$0x1]
    %s107 = sld [smem:[#allocation5]]
    %v108 = vstv %s107
    %v109 = vmul.f32 %v108, %v52
    %v110 = vmul.f32 %v108, %v53
    %v111 = vmul.f32 %v108, %v54
    %v112 = vmul.f32 %v108, %v55
    %v113 = vmul.f32 %v108, %v56
    %v114 = vmul.f32 %v108, %v57
    %v115 = vmul.f32 %v108, %v58
    %v116 = vmul.f32 %v108, %v59
    %v117 = vmul.f32 %v108, %v60
    %v118 = vmul.f32 %v108, %v61
    %v119 = vmul.f32 %v108, %v62
    %v120 = vmul.f32 %v108, %v63
    %v121 = vmul.f32 %v108, %v64
    %v122 = vmul.f32 %v108, %v65
    %v123 = vmul.f32 %v108, %v66
    %v124 = vmul.f32 %v108, %v67
    %v125 = vmul.f32 %v108, %v68
    %v126 = vmul.f32 %v108, %v69
    %v127 = vmul.f32 %v108, %v70
    %v128 = vmul.f32 %v108, %v71
    %v129 = vmul.f32 %v108, %v72
    %v130 = vmul.f32 %v108, %v73
    %v131 = vmul.f32 %v108, %v74
    %v132 = vmul.f32 %v108, %v75
    %v133 = vmul.f32 %v108, %v76
    %v134 = vadd.f32 %v109, %v77
    %v135 = vadd.f32 %v110, %v78
    %v136 = vadd.f32 %v111, %v79
    %v137 = vadd.f32 %v112, %v80
    %v138 = vadd.f32 %v113, %v81
    %v139 = vadd.f32 %v114, %v82
    %v140 = vadd.f32 %v115, %v83
    %v141 = vadd.f32 %v116, %v84
    %v142 = vadd.f32 %v117, %v85
    %v143 = vadd.f32 %v118, %v86
    %v144 = vadd.f32 %v119, %v87
    %v145 = vadd.f32 %v120, %v88
    %v146 = vadd.f32 %v121, %v89
    %v147 = vadd.f32 %v122, %v90
    %v148 = vadd.f32 %v123, %v91
    %v149 = vadd.f32 %v124, %v92
    %v150 = vadd.f32 %v125, %v93
    %v151 = vadd.f32 %v126, %v94
    %v152 = vadd.f32 %v127, %v95
    %v153 = vadd.f32 %v128, %v96
    %v154 = vadd.f32 %v129, %v97
    %v155 = vadd.f32 %v130, %v98
    %v156 = vadd.f32 %v131, %v99
    %v157 = vadd.f32 %v132, %v100
    %v158 = vadd.f32 %v133, %v101
    %v159 = vmax.f32 %v134, 0.0
    %v160 = vmax.f32 %v135, 0.0
    %v161 = vmax.f32 %v136, 0.0
    %v162 = vmax.f32 %v137, 0.0
    %v163 = vmax.f32 %v138, 0.0
    %v164 = vmax.f32 %v139, 0.0
    %v165 = vmax.f32 %v140, 0.0
    %v166 = vmax.f32 %v141, 0.0
    %v167 = vmax.f32 %v142, 0.0
    %v168 = vmax.f32 %v143, 0.0
    %v169 = vmax.f32 %v144, 0.0
    %v170 = vmax.f32 %v145, 0.0
    %v171 = vmax.f32 %v146, 0.0
    %v172 = vmax.f32 %v147, 0.0
    %v173 = vmax.f32 %v148, 0.0
    %v174 = vmax.f32 %v149, 0.0
    %v175 = vmax.f32 %v150, 0.0
    %v176 = vmax.f32 %v151, 0.0
    %v177 = vmax.f32 %v152, 0.0
    %v178 = vmax.f32 %v153, 0.0
    %v179 = vmax.f32 %v154, 0.0
    %v180 = vmax.f32 %v155, 0.0
    %v181 = vmax.f32 %v156, 0.0
    %v182 = vmax.f32 %v157, 0.0
    %v183 = vmax.f32 %v158, 0.0
    %v185 = vlaneseq
    %v186 = vshrl.u32 %v185, 7
    %v187 = vsub.s32 0, %v186
    %v188 = vrot.slane %v103, %v187
    %vm190 = vcmask 39936
    %v192 = vsel %vm190, %v159, 0
    %v195 = vsel %vm190, %v160, 0
    %v198 = vsel %vm190, %v161, 0
    %v201 = vsel %vm190, %v162, 0
    %v204 = vsel %vm190, %v163, 0
    %v207 = vsel %vm190, %v164, 0
    %v210 = vsel %vm190, %v165, 0
    %v213 = vsel %vm190, %v166, 0
    %v216 = vsel %vm190, %v167, 0
    %v219 = vsel %vm190, %v168, 0
    %v222 = vsel %vm190, %v169, 0
    %v225 = vsel %vm190, %v170, 0
    %v228 = vsel %vm190, %v171, 0
    %v231 = vsel %vm190, %v172, 0
    %v234 = vsel %vm190, %v173, 0
    %v237 = vsel %vm190, %v174, 0
    %v240 = vsel %vm190, %v175, 0
    %v243 = vsel %vm190, %v176, 0
    %v246 = vsel %vm190, %v177, 0
    %v249 = vsel %vm190, %v178, 0
    %v252 = vsel %vm190, %v179, 0
    %v255 = vsel %vm190, %v180, 0
    %v258 = vsel %vm190, %v181, 0
    %v261 = vsel %vm190, %v182, 0
    %v264 = vsel %vm190, %v183, 0
    %vm266 = vcmask 1044480
    %v268 = vsel %vm266, %v102, 0
    %270 = vmatprep.subr.mxu0 0.0
    %271 = vmatpush1.msra.mxu0 %v268
    %272 = vmatprep.subr.mxu0 0.0
    %273 = vmatpush1.msra.mxu0 0.0
    %274 = vmatprep.subr.mxu0 0.0
    %275 = vmatpush1.msra.mxu0 0.0
    %276 = vmatprep.subr.mxu0 0.0
    %277 = vmatpush1.msra.mxu0 0.0
    %278 = vmatprep.subr.mxu0 0.0
    %279 = vmatpush1.msra.mxu0 0.0
    %280 = vmatprep.subr.mxu0 0.0
    %281 = vmatpush1.msra.mxu0 0.0
    %282 = vmatprep.subr.mxu0 0.0
    %283 = vmatpush1.msra.mxu0 0.0
    %284 = vmatprep.subr.mxu0 0.0
    %285 = vmatpush1.msra.mxu0 0.0
    %286 = vmatprep.subr.mxu0 0.0
    %287 = vmatpush1.msra.mxu0 0.0
    %288 = vmatprep.subr.mxu0 0.0
    %289 = vmatpush1.msra.mxu0 0.0
    %290 = vmatprep.subr.mxu0 0.0
    %291 = vmatpush1.msra.mxu0 0.0
    %292 = vmatprep.subr.mxu0 0.0
    %293 = vmatpush1.msra.mxu0 0.0
    %294 = vmatprep.subr.mxu0 0.0
    %295 = vmatpush1.msra.mxu0 0.0
    %296 = vmatprep.subr.mxu0 0.0
    %297 = vmatpush1.msra.mxu0 0.0
    %298 = vmatprep.subr.mxu0 0.0
    %299 = vmatpush1.msra.mxu0 0.0
    %300 = vmatprep.subr.mxu0 0.0
    %301 = vmatpush1.msra.mxu0 0.0
    %302 = vmatprep.subr.mxu0 0.0
    %303 = vmatpush1.msra.mxu0 0.0
    %304 = vmatprep.subr.mxu0 0.0
    %305 = vmatpush1.msra.mxu0 0.0
    %306 = vmatprep.subr.mxu0 0.0
    %307 = vmatpush1.msra.mxu0 0.0
    %308 = vmatprep.subr.mxu0 0.0
    %309 = vmatpush1.msra.mxu0 0.0
    %310 = vmatprep.subr.mxu0 0.0
    %311 = vmatpush1.msra.mxu0 0.0
    %312 = vmatprep.subr.mxu0 0.0
    %313 = vmatpush1.msra.mxu0 0.0
    %314 = vmatprep.subr.mxu0 0.0
    %315 = vmatpush1.msra.mxu0 0.0
    %316 = vmatprep.subr.mxu0 0.0
    %317 = vmatpush1.msra.mxu0 0.0
    %318 = vmatprep.subr.mxu0 0.0
    %319 = vmatpush1.msra.mxu0 0.0
    %320 = vmatprep.subr.mxu0 0.0
    %321 = vmatpush1.msra.mxu0 0.0
    %322 = vmatprep.subr.mxu0 0.0
    %323 = vmatpush1.msra.mxu0 0.0
    %324 = vmatprep.subr.mxu0 0.0
    %325 = vmatpush1.msra.mxu0 0.0
    %326 = vmatprep.subr.mxu0 0.0
    %327 = vmatpush1.msra.mxu0 0.0
    %328 = vmatprep.subr.mxu0 0.0
    %329 = vmatpush1.msra.mxu0 0.0
    %330 = vmatprep.subr.mxu0 0.0
    %331 = vmatpush1.msra.mxu0 0.0
    %332 = vmatprep.subr.mxu0 0.0
    %333 = vmatpush1.msra.mxu0 0.0
    %334 = vmatprep.mubr.f32.mxu0 0.0
    %335 = vmatmul.mubr.f32.gmra.mrb[0].mxu0 %v192
    %v336 = vpop.f32.mrb[0].mxu0
    %v337 = vadd.f32 %v188, %v336
    %v338 = vpop.f32.mrb[0].mxu0
    %339 = vmatprep.mubr.f32.mxu0 0.0
    %340 = vmatmul.mubr.f32.gmra.mrb[0].mxu0 %v195
    %v341 = vpop.f32.mrb[0].mxu0
    %v342 = vadd.f32 %v188, %v341
    %v343 = vpop.f32.mrb[0].mxu0
    %344 = vmatprep.mubr.f32.mxu0 0.0
    %345 = vmatmul.mubr.f32.gmra.mrb[0].mxu0 %v198
    %v346 = vpop.f32.mrb[0].mxu0
    %v347 = vadd.f32 %v188, %v346
    %v348 = vpop.f32.mrb[0].mxu0
    %349 = vmatprep.mubr.f32.mxu0 0.0
    %350 = vmatmul.mubr.f32.gmra.mrb[0].mxu0 %v201
    %v351 = vpop.f32.mrb[0].mxu0
    %v352 = vadd.f32 %v188, %v351
    %v353 = vpop.f32.mrb[0].mxu0
    %354 = vmatprep.mubr.f32.mxu0 0.0
    %355 = vmatmul.mubr.f32.gmra.mrb[0].mxu0 %v204
    %v356 = vpop.f32.mrb[0].mxu0
    %v357 = vadd.f32 %v188, %v356
    %v358 = vpop.f32.mrb[0].mxu0
    %359 = vmatprep.mubr.f32.mxu0 0.0
    %360 = vmatmul.mubr.f32.gmra.mrb[0].mxu0 %v207
    %v361 = vpop.f32.mrb[0].mxu0
    %v362 = vadd.f32 %v188, %v361
    %v363 = vpop.f32.mrb[0].mxu0
    %364 = vmatprep.mubr.f32.mxu0 0.0
    %365 = vmatmul.mubr.f32.gmra.mrb[0].mxu0 %v210
    %v366 = vpop.f32.mrb[0].mxu0
    %v367 = vadd.f32 %v188, %v366
    %v368 = vpop.f32.mrb[0].mxu0
    %369 = vmatprep.mubr.f32.mxu0 0.0
    %370 = vmatmul.mubr.f32.gmra.mrb[0].mxu0 %v213
    %v371 = vpop.f32.mrb[0].mxu0
    %v372 = vadd.f32 %v188, %v371
    %v373 = vpop.f32.mrb[0].mxu0
    %374 = vmatprep.mubr.f32.mxu0 0.0
    %375 = vmatmul.mubr.f32.gmra.mrb[0].mxu0 %v216
    %v376 = vpop.f32.mrb[0].mxu0
    %v377 = vadd.f32 %v188, %v376
    %v378 = vpop.f32.mrb[0].mxu0
    %379 = vmatprep.mubr.f32.mxu0 0.0
    %380 = vmatmul.mubr.f32.gmra.mrb[0].mxu0 %v219
    %v381 = vpop.f32.mrb[0].mxu0
    %v382 = vadd.f32 %v188, %v381
    %v383 = vpop.f32.mrb[0].mxu0
    %384 = vmatprep.mubr.f32.mxu0 0.0
    %385 = vmatmul.mubr.f32.gmra.mrb[0].mxu0 %v222
    %v386 = vpop.f32.mrb[0].mxu0
    %v387 = vadd.f32 %v188, %v386
    %v388 = vpop.f32.mrb[0].mxu0
    %389 = vmatprep.mubr.f32.mxu0 0.0
    %390 = vmatmul.mubr.f32.gmra.mrb[0].mxu0 %v225
    %v391 = vpop.f32.mrb[0].mxu0
    %v392 = vadd.f32 %v188, %v391
    %v393 = vpop.f32.mrb[0].mxu0
    %394 = vmatprep.mubr.f32.mxu0 0.0
    %395 = vmatmul.mubr.f32.gmra.mrb[0].mxu0 %v228
    %v396 = vpop.f32.mrb[0].mxu0
    %v397 = vadd.f32 %v188, %v396
    %v398 = vpop.f32.mrb[0].mxu0
    %399 = vmatprep.mubr.f32.mxu0 0.0
    %400 = vmatmul.mubr.f32.gmra.mrb[0].mxu0 %v231
    %v401 = vpop.f32.mrb[0].mxu0
    %v402 = vadd.f32 %v188, %v401
    %v403 = vpop.f32.mrb[0].mxu0
    %404 = vmatprep.mubr.f32.mxu0 0.0
    %405 = vmatmul.mubr.f32.gmra.mrb[0].mxu0 %v234
    %v406 = vpop.f32.mrb[0].mxu0
    %v407 = vadd.f32 %v188, %v406
    %v408 = vpop.f32.mrb[0].mxu0
    %409 = vmatprep.mubr.f32.mxu0 0.0
    %410 = vmatmul.mubr.f32.gmra.mrb[0].mxu0 %v237
    %v411 = vpop.f32.mrb[0].mxu0
    %v412 = vadd.f32 %v188, %v411
    %v413 = vpop.f32.mrb[0].mxu0
    %414 = vmatprep.mubr.f32.mxu0 0.0
    %415 = vmatmul.mubr.f32.gmra.mrb[0].mxu0 %v240
    %v416 = vpop.f32.mrb[0].mxu0
    %v417 = vadd.f32 %v188, %v416
    %v418 = vpop.f32.mrb[0].mxu0
    %419 = vmatprep.mubr.f32.mxu0 0.0
    %420 = vmatmul.mubr.f32.gmra.mrb[0].mxu0 %v243
    %v421 = vpop.f32.mrb[0].mxu0
    %v422 = vadd.f32 %v188, %v421
    %v423 = vpop.f32.mrb[0].mxu0
    %424 = vmatprep.mubr.f32.mxu0 0.0
    %425 = vmatmul.mubr.f32.gmra.mrb[0].mxu0 %v246
    %v426 = vpop.f32.mrb[0].mxu0
    %v427 = vadd.f32 %v188, %v426
    %v428 = vpop.f32.mrb[0].mxu0
    %429 = vmatprep.mubr.f32.mxu0 0.0
    %430 = vmatmul.mubr.f32.gmra.mrb[0].mxu0 %v249
    %v431 = vpop.f32.mrb[0].mxu0
    %v432 = vadd.f32 %v188, %v431
    %v433 = vpop.f32.mrb[0].mxu0
    %434 = vmatprep.mubr.f32.mxu0 0.0
    %435 = vmatmul.mubr.f32.gmra.mrb[0].mxu0 %v252
    %v436 = vpop.f32.mrb[0].mxu0
    %v437 = vadd.f32 %v188, %v436
    %v438 = vpop.f32.mrb[0].mxu0
    %439 = vmatprep.mubr.f32.mxu0 0.0
    %440 = vmatmul.mubr.f32.gmra.mrb[0].mxu0 %v255
    %v441 = vpop.f32.mrb[0].mxu0
    %v442 = vadd.f32 %v188, %v441
    %v443 = vpop.f32.mrb[0].mxu0
    %444 = vmatprep.mubr.f32.mxu0 0.0
    %445 = vmatmul.mubr.f32.gmra.mrb[0].mxu0 %v258
    %v446 = vpop.f32.mrb[0].mxu0
    %v447 = vadd.f32 %v188, %v446
    %v448 = vpop.f32.mrb[0].mxu0
    %449 = vmatprep.mubr.f32.mxu0 0.0
    %450 = vmatmul.mubr.f32.gmra.mrb[0].mxu0 %v261
    %v451 = vpop.f32.mrb[0].mxu0
    %v452 = vadd.f32 %v188, %v451
    %v453 = vpop.f32.mrb[0].mxu0
    %454 = vmatprep.mubr.f32.mxu0 0.0
    %455 = vmatmul.mubr.f32.gmra.mrb[0].mxu0 %v264
    %v456 = vpop.f32.mrb[0].mxu0
    %v457 = vadd.f32 %v188, %v456
    %v458 = vpop.f32.mrb[0].mxu0
    %459 = vdwg.mxu0
    %v460 = vmax.f32 %v337, 0.0
    %v461 = vmax.f32 %v342, 0.0
    %v462 = vmax.f32 %v347, 0.0
    %v463 = vmax.f32 %v352, 0.0
    %v464 = vmax.f32 %v357, 0.0
    %v465 = vmax.f32 %v362, 0.0
    %v466 = vmax.f32 %v367, 0.0
    %v467 = vmax.f32 %v372, 0.0
    %v468 = vmax.f32 %v377, 0.0
    %v469 = vmax.f32 %v382, 0.0
    %v470 = vmax.f32 %v387, 0.0
    %v471 = vmax.f32 %v392, 0.0
    %v472 = vmax.f32 %v397, 0.0
    %v473 = vmax.f32 %v402, 0.0
    %v474 = vmax.f32 %v407, 0.0
    %v475 = vmax.f32 %v412, 0.0
    %v476 = vmax.f32 %v417, 0.0
    %v477 = vmax.f32 %v422, 0.0
    %v478 = vmax.f32 %v427, 0.0
    %v479 = vmax.f32 %v432, 0.0
    %v480 = vmax.f32 %v437, 0.0
    %v481 = vmax.f32 %v442, 0.0
    %v482 = vmax.f32 %v447, 0.0
    %v483 = vmax.f32 %v452, 0.0
    %v484 = vmax.f32 %v457, 0.0
    %vm485 = vcmask 64512
    %486 = vst.msk [vmem:[#allocation2] sm:$0xff] %vm485, %v460
    %487 = vst.msk [vmem:[#allocation2 + $0x8] sm:$0xff] %vm485, %v461
    %488 = vst.msk [vmem:[#allocation2 + $0x10] sm:$0xff] %vm485, %v462
    %489 = vst.msk [vmem:[#allocation2 + $0x18] sm:$0xff] %vm485, %v463
    %490 = vst.msk [vmem:[#allocation2 + $0x20] sm:$0xff] %vm485, %v464
    %491 = vst.msk [vmem:[#allocation2 + $0x28] sm:$0xff] %vm485, %v465
    %492 = vst.msk [vmem:[#allocation2 + $0x30] sm:$0xff] %vm485, %v466
    %493 = vst.msk [vmem:[#allocation2 + $0x38] sm:$0xff] %vm485, %v467
    %494 = vst.msk [vmem:[#allocation2 + $0x40] sm:$0xff] %vm485, %v468
    %495 = vst.msk [vmem:[#allocation2 + $0x48] sm:$0xff] %vm485, %v469
    %496 = vst.msk [vmem:[#allocation2 + $0x50] sm:$0xff] %vm485, %v470
    %497 = vst.msk [vmem:[#allocation2 + $0x58] sm:$0xff] %vm485, %v471
    %498 = vst.msk [vmem:[#allocation2 + $0x60] sm:$0xff] %vm485, %v472
    %499 = vst.msk [vmem:[#allocation2 + $0x68] sm:$0xff] %vm485, %v473
    %500 = vst.msk [vmem:[#allocation2 + $0x70] sm:$0xff] %vm485, %v474
    %501 = vst.msk [vmem:[#allocation2 + $0x78] sm:$0xff] %vm485, %v475
    %502 = vst.msk [vmem:[#allocation2 + $0x80] sm:$0xff] %vm485, %v476
    %503 = vst.msk [vmem:[#allocation2 + $0x88] sm:$0xff] %vm485, %v477
    %504 = vst.msk [vmem:[#allocation2 + $0x90] sm:$0xff] %vm485, %v478
    %505 = vst.msk [vmem:[#allocation2 + $0x98] sm:$0xff] %vm485, %v479
    %506 = vst.msk [vmem:[#allocation2 + $0xa0] sm:$0xff] %vm485, %v480
    %507 = vst.msk [vmem:[#allocation2 + $0xa8] sm:$0xff] %vm485, %v481
    %508 = vst.msk [vmem:[#allocation2 + $0xb0] sm:$0xff] %vm485, %v482
    %509 = vst.msk [vmem:[#allocation2 + $0xb8] sm:$0xff] %vm485, %v483
    %510 = vst.msk [vmem:[#allocation2 + $0xc0] sm:$0xff] %vm485, %v484
    %v511 = vld [vmem:[#allocation2] sm:$0xff]
    %v512 = vld [vmem:[#allocation2 + $0x8] sm:$0xff]
    %v513 = vld [vmem:[#allocation2 + $0x10] sm:$0xff]
    %v514 = vld [vmem:[#allocation2 + $0x18] sm:$0xff]
    %v515 = vld [vmem:[#allocation2 + $0x20] sm:$0xff]
    %v516 = vld [vmem:[%s5] sm:$0xff]
    %v517 = vld [vmem:[#allocation2 + $0x28] sm:$0xff]
    %v518 = vld [vmem:[#allocation2 + $0x30] sm:$0xff]
    %v519 = vld [vmem:[#allocation2 + $0x38] sm:$0xff]
    %v520 = vld [vmem:[#allocation2 + $0x40] sm:$0xff]
    %v521 = vld [vmem:[#allocation2 + $0x48] sm:$0xff]
    %s522 = scalar_lea.vmem %s5, 8
    %v523 = vld [vmem:[%s522] sm:$0xff]
    %v525 = vsel %vm485, %v517, 0
    %v528 = vsel %vm485, %v518, 0
    %v531 = vsel %vm485, %v519, 0
    %v534 = vsel %vm485, %v520, 0
    %v537 = vsel %vm485, %v521, 0
    %539 = vmatprep.subr.mxu0 0.0
    %540 = vmatpush1.msra.mxu0 %v523
    %541 = vmatprep.subr.mxu0 0.0
    %542 = vmatpush1.msra.mxu0 0.0
    %543 = vmatprep.subr.mxu0 0.0
    %544 = vmatpush1.msra.mxu0 0.0
    %545 = vmatprep.subr.mxu0 0.0
    %546 = vmatpush1.msra.mxu0 0.0
    %547 = vmatprep.subr.mxu0 0.0
    %548 = vmatpush1.msra.mxu0 0.0
    %549 = vmatprep.subr.mxu0 0.0
    %550 = vmatpush1.msra.mxu0 0.0
    %551 = vmatprep.subr.mxu0 0.0
    %552 = vmatpush1.msra.mxu0 0.0
    %553 = vmatprep.subr.mxu0 0.0
    %554 = vmatpush1.msra.mxu0 0.0
    %555 = vmatprep.subr.mxu0 0.0
    %556 = vmatpush1.msra.mxu0 0.0
    %557 = vmatprep.subr.mxu0 0.0
    %558 = vmatpush1.msra.mxu0 0.0
    %559 = vmatprep.subr.mxu0 0.0
    %560 = vmatpush1.msra.mxu0 0.0
    %561 = vmatprep.subr.mxu0 0.0
    %562 = vmatpush1.msra.mxu0 0.0
    %563 = vmatprep.subr.mxu0 0.0
    %564 = vmatpush1.msra.mxu0 0.0
    %565 = vmatprep.subr.mxu0 0.0
    %566 = vmatpush1.msra.mxu0 0.0
    %567 = vmatprep.subr.mxu0 0.0
    %568 = vmatpush1.msra.mxu0 0.0
    %569 = vmatprep.subr.mxu0 0.0
    %570 = vmatpush1.msra.mxu0 0.0
    %571 = vmatprep.subr.mxu0 0.0
    %572 = vmatpush1.msra.mxu0 0.0
    %573 = vmatprep.subr.mxu0 0.0
    %574 = vmatpush1.msra.mxu0 0.0
    %575 = vmatprep.subr.mxu0 0.0
    %576 = vmatpush1.msra.mxu0 0.0
    %577 = vmatprep.subr.mxu0 0.0
    %578 = vmatpush1.msra.mxu0 0.0
    %579 = vmatprep.subr.mxu0 0.0
    %580 = vmatpush1.msra.mxu0 0.0
    %581 = vmatprep.subr.mxu0 0.0
    %582 = vmatpush1.msra.mxu0 0.0
    %583 = vmatprep.subr.mxu0 0.0
    %584 = vmatpush1.msra.mxu0 0.0
    %585 = vmatprep.subr.mxu0 0.0
    %586 = vmatpush1.msra.mxu0 0.0
    %587 = vmatprep.subr.mxu0 0.0
    %588 = vmatpush1.msra.mxu0 0.0
    %589 = vmatprep.subr.mxu0 0.0
    %590 = vmatpush1.msra.mxu0 0.0
    %591 = vmatprep.subr.mxu0 0.0
    %592 = vmatpush1.msra.mxu0 0.0
    %593 = vmatprep.subr.mxu0 0.0
    %594 = vmatpush1.msra.mxu0 0.0
    %595 = vmatprep.subr.mxu0 0.0
    %596 = vmatpush1.msra.mxu0 0.0
    %597 = vmatprep.subr.mxu0 0.0
    %598 = vmatpush1.msra.mxu0 0.0
    %599 = vmatprep.subr.mxu0 0.0
    %600 = vmatpush1.msra.mxu0 0.0
    %601 = vmatprep.subr.mxu0 0.0
    %602 = vmatpush1.msra.mxu0 0.0
    %603 = vmatprep.mubr.f32.mxu0 0.0
    %604 = vmatmul.mubr.f32.gmra.mrb[0].mxu0 %v525
    %v605 = vpop.f32.mrb[0].mxu0
    %v606 = vadd.f32 0.0, %v605
    %v607 = vpop.f32.mrb[0].mxu0
    %608 = vmatprep.mubr.f32.mxu0 0.0
    %609 = vmatmul.mubr.f32.gmra.mrb[0].mxu0 %v528
    %v610 = vpop.f32.mrb[0].mxu0
    %v611 = vadd.f32 0.0, %v610
    %v612 = vpop.f32.mrb[0].mxu0
    %613 = vmatprep.mubr.f32.mxu0 0.0
    %614 = vmatmul.mubr.f32.gmra.mrb[0].mxu0 %v531
    %v615 = vpop.f32.mrb[0].mxu0
    %v616 = vadd.f32 0.0, %v615
    %v617 = vpop.f32.mrb[0].mxu0
    %618 = vmatprep.mubr.f32.mxu0 0.0
    %619 = vmatmul.mubr.f32.gmra.mrb[0].mxu0 %v534
    %v620 = vpop.f32.mrb[0].mxu0
    %v621 = vadd.f32 0.0, %v620
    %v622 = vpop.f32.mrb[0].mxu0
    %623 = vmatprep.mubr.f32.mxu0 0.0
    %624 = vmatmul.mubr.f32.gmra.mrb[0].mxu0 %v537
    %v625 = vpop.f32.mrb[0].mxu0
    %v626 = vadd.f32 0.0, %v625
    %v627 = vpop.f32.mrb[0].mxu0
    %628 = vdwg.mxu0
    %v630 = vsel %vm485, %v511, 0
    %v633 = vsel %vm485, %v512, 0
    %v636 = vsel %vm485, %v513, 0
    %v639 = vsel %vm485, %v514, 0
    %v642 = vsel %vm485, %v515, 0
    %644 = vmatprep.subr.mxu0 0.0
    %645 = vmatpush1.msra.mxu0 %v516
    %646 = vmatprep.subr.mxu0 0.0
    %647 = vmatpush1.msra.mxu0 0.0
    %648 = vmatprep.subr.mxu0 0.0
    %649 = vmatpush1.msra.mxu0 0.0
    %650 = vmatprep.subr.mxu0 0.0
    %651 = vmatpush1.msra.mxu0 0.0
    %652 = vmatprep.subr.mxu0 0.0
    %653 = vmatpush1.msra.mxu0 0.0
    %654 = vmatprep.subr.mxu0 0.0
    %655 = vmatpush1.msra.mxu0 0.0
    %656 = vmatprep.subr.mxu0 0.0
    %657 = vmatpush1.msra.mxu0 0.0
    %658 = vmatprep.subr.mxu0 0.0
    %659 = vmatpush1.msra.mxu0 0.0
    %660 = vmatprep.subr.mxu0 0.0
    %661 = vmatpush1.msra.mxu0 0.0
    %662 = vmatprep.subr.mxu0 0.0
    %663 = vmatpush1.msra.mxu0 0.0
    %664 = vmatprep.subr.mxu0 0.0
    %665 = vmatpush1.msra.mxu0 0.0
    %666 = vmatprep.subr.mxu0 0.0
    %667 = vmatpush1.msra.mxu0 0.0
    %668 = vmatprep.subr.mxu0 0.0
    %669 = vmatpush1.msra.mxu0 0.0
    %670 = vmatprep.subr.mxu0 0.0
    %671 = vmatpush1.msra.mxu0 0.0
    %672 = vmatprep.subr.mxu0 0.0
    %673 = vmatpush1.msra.mxu0 0.0
    %674 = vmatprep.subr.mxu0 0.0
    %675 = vmatpush1.msra.mxu0 0.0
    %676 = vmatprep.subr.mxu0 0.0
    %677 = vmatpush1.msra.mxu0 0.0
    %678 = vmatprep.subr.mxu0 0.0
    %679 = vmatpush1.msra.mxu0 0.0
    %680 = vmatprep.subr.mxu0 0.0
    %681 = vmatpush1.msra.mxu0 0.0
    %682 = vmatprep.subr.mxu0 0.0
    %683 = vmatpush1.msra.mxu0 0.0
    %684 = vmatprep.subr.mxu0 0.0
    %685 = vmatpush1.msra.mxu0 0.0
    %686 = vmatprep.subr.mxu0 0.0
    %687 = vmatpush1.msra.mxu0 0.0
    %688 = vmatprep.subr.mxu0 0.0
    %689 = vmatpush1.msra.mxu0 0.0
    %690 = vmatprep.subr.mxu0 0.0
    %691 = vmatpush1.msra.mxu0 0.0
    %692 = vmatprep.subr.mxu0 0.0
    %693 = vmatpush1.msra.mxu0 0.0
    %694 = vmatprep.subr.mxu0 0.0
    %695 = vmatpush1.msra.mxu0 0.0
    %696 = vmatprep.subr.mxu0 0.0
    %697 = vmatpush1.msra.mxu0 0.0
    %698 = vmatprep.subr.mxu0 0.0
    %699 = vmatpush1.msra.mxu0 0.0
    %700 = vmatprep.subr.mxu0 0.0
    %701 = vmatpush1.msra.mxu0 0.0
    %702 = vmatprep.subr.mxu0 0.0
    %703 = vmatpush1.msra.mxu0 0.0
    %704 = vmatprep.subr.mxu0 0.0
    %705 = vmatpush1.msra.mxu0 0.0
    %706 = vmatprep.subr.mxu0 0.0
    %707 = vmatpush1.msra.mxu0 0.0
    %708 = vmatprep.mubr.f32.mxu0 0.0
    %709 = vmatmul.mubr.f32.gmra.mrb[0].mxu0 %v630
    %v710 = vpop.f32.mrb[0].mxu0
    %v711 = vadd.f32 %v606, %v710
    %v712 = vpop.f32.mrb[0].mxu0
    %713 = vmatprep.mubr.f32.mxu0 0.0
    %714 = vmatmul.mubr.f32.gmra.mrb[0].mxu0 %v633
    %v715 = vpop.f32.mrb[0].mxu0
    %v716 = vadd.f32 %v611, %v715
    %v717 = vpop.f32.mrb[0].mxu0
    %718 = vmatprep.mubr.f32.mxu0 0.0
    %719 = vmatmul.mubr.f32.gmra.mrb[0].mxu0 %v636
    %v720 = vpop.f32.mrb[0].mxu0
    %v721 = vadd.f32 %v616, %v720
    %v722 = vpop.f32.mrb[0].mxu0
    %723 = vmatprep.mubr.f32.mxu0 0.0
    %724 = vmatmul.mubr.f32.gmra.mrb[0].mxu0 %v639
    %v725 = vpop.f32.mrb[0].mxu0
    %v726 = vadd.f32 %v621, %v725
    %v727 = vpop.f32.mrb[0].mxu0
    %728 = vmatprep.mubr.f32.mxu0 0.0
    %729 = vmatmul.mubr.f32.gmra.mrb[0].mxu0 %v642
    %v730 = vpop.f32.mrb[0].mxu0
    %v731 = vadd.f32 %v626, %v730
    %v732 = vpop.f32.mrb[0].mxu0
    %733 = vdwg.mxu0
    %v734 = vld [vmem:[#allocation2 + $0x50] sm:$0xff]
    %v735 = vld [vmem:[#allocation2 + $0x58] sm:$0xff]
    %v736 = vld [vmem:[#allocation2 + $0x60] sm:$0xff]
    %v737 = vld [vmem:[#allocation2 + $0x68] sm:$0xff]
    %v738 = vld [vmem:[#allocation2 + $0x70] sm:$0xff]
    %s739 = scalar_lea.vmem %s5, 16
    %v740 = vld [vmem:[%s739] sm:$0xff]
    %v742 = vsel %vm485, %v734, 0
    %v745 = vsel %vm485, %v735, 0
    %v748 = vsel %vm485, %v736, 0
    %v751 = vsel %vm485, %v737, 0
    %v754 = vsel %vm485, %v738, 0
    %756 = vmatprep.subr.mxu0 0.0
    %757 = vmatpush1.msra.mxu0 %v740
    %758 = vmatprep.subr.mxu0 0.0
    %759 = vmatpush1.msra.mxu0 0.0
    %760 = vmatprep.subr.mxu0 0.0
    %761 = vmatpush1.msra.mxu0 0.0
    %762 = vmatprep.subr.mxu0 0.0
    %763 = vmatpush1.msra.mxu0 0.0
    %764 = vmatprep.subr.mxu0 0.0
    %765 = vmatpush1.msra.mxu0 0.0
    %766 = vmatprep.subr.mxu0 0.0
    %767 = vmatpush1.msra.mxu0 0.0
    %768 = vmatprep.subr.mxu0 0.0
    %769 = vmatpush1.msra.mxu0 0.0
    %770 = vmatprep.subr.mxu0 0.0
    %771 = vmatpush1.msra.mxu0 0.0
    %772 = vmatprep.subr.mxu0 0.0
    %773 = vmatpush1.msra.mxu0 0.0
    %774 = vmatprep.subr.mxu0 0.0
    %775 = vmatpush1.msra.mxu0 0.0
    %776 = vmatprep.subr.mxu0 0.0
    %777 = vmatpush1.msra.mxu0 0.0
    %778 = vmatprep.subr.mxu0 0.0
    %779 = vmatpush1.msra.mxu0 0.0
    %780 = vmatprep.subr.mxu0 0.0
    %781 = vmatpush1.msra.mxu0 0.0
    %782 = vmatprep.subr.mxu0 0.0
    %783 = vmatpush1.msra.mxu0 0.0
    %784 = vmatprep.subr.mxu0 0.0
    %785 = vmatpush1.msra.mxu0 0.0
    %786 = vmatprep.subr.mxu0 0.0
    %787 = vmatpush1.msra.mxu0 0.0
    %788 = vmatprep.subr.mxu0 0.0
    %789 = vmatpush1.msra.mxu0 0.0
    %790 = vmatprep.subr.mxu0 0.0
    %791 = vmatpush1.msra.mxu0 0.0
    %792 = vmatprep.subr.mxu0 0.0
    %793 = vmatpush1.msra.mxu0 0.0
    %794 = vmatprep.subr.mxu0 0.0
    %795 = vmatpush1.msra.mxu0 0.0
    %796 = vmatprep.subr.mxu0 0.0
    %797 = vmatpush1.msra.mxu0 0.0
    %798 = vmatprep.subr.mxu0 0.0
    %799 = vmatpush1.msra.mxu0 0.0
    %800 = vmatprep.subr.mxu0 0.0
    %801 = vmatpush1.msra.mxu0 0.0
    %802 = vmatprep.subr.mxu0 0.0
    %803 = vmatpush1.msra.mxu0 0.0
    %804 = vmatprep.subr.mxu0 0.0
    %805 = vmatpush1.msra.mxu0 0.0
    %806 = vmatprep.subr.mxu0 0.0
    %807 = vmatpush1.msra.mxu0 0.0
    %808 = vmatprep.subr.mxu0 0.0
    %809 = vmatpush1.msra.mxu0 0.0
    %810 = vmatprep.subr.mxu0 0.0
    %811 = vmatpush1.msra.mxu0 0.0
    %812 = vmatprep.subr.mxu0 0.0
    %813 = vmatpush1.msra.mxu0 0.0
    %814 = vmatprep.subr.mxu0 0.0
    %815 = vmatpush1.msra.mxu0 0.0
    %816 = vmatprep.subr.mxu0 0.0
    %817 = vmatpush1.msra.mxu0 0.0
    %818 = vmatprep.subr.mxu0 0.0
    %819 = vmatpush1.msra.mxu0 0.0
    %820 = vmatprep.mubr.f32.mxu0 0.0
    %821 = vmatmul.mubr.f32.gmra.mrb[0].mxu0 %v742
    %v822 = vpop.f32.mrb[0].mxu0
    %v823 = vadd.f32 0.0, %v822
    %v824 = vpop.f32.mrb[0].mxu0
    %825 = vmatprep.mubr.f32.mxu0 0.0
    %826 = vmatmul.mubr.f32.gmra.mrb[0].mxu0 %v745
    %v827 = vpop.f32.mrb[0].mxu0
    %v828 = vadd.f32 0.0, %v827
    %v829 = vpop.f32.mrb[0].mxu0
    %830 = vmatprep.mubr.f32.mxu0 0.0
    %831 = vmatmul.mubr.f32.gmra.mrb[0].mxu0 %v748
    %v832 = vpop.f32.mrb[0].mxu0
    %v833 = vadd.f32 0.0, %v832
    %v834 = vpop.f32.mrb[0].mxu0
    %835 = vmatprep.mubr.f32.mxu0 0.0
    %836 = vmatmul.mubr.f32.gmra.mrb[0].mxu0 %v751
    %v837 = vpop.f32.mrb[0].mxu0
    %v838 = vadd.f32 0.0, %v837
    %v839 = vpop.f32.mrb[0].mxu0
    %840 = vmatprep.mubr.f32.mxu0 0.0
    %841 = vmatmul.mubr.f32.gmra.mrb[0].mxu0 %v754
    %v842 = vpop.f32.mrb[0].mxu0
    %v843 = vadd.f32 0.0, %v842
    %v844 = vpop.f32.mrb[0].mxu0
    %845 = vdwg.mxu0
    %v846 = vadd.f32 %v711, %v823
    %v847 = vadd.f32 %v716, %v828
    %v848 = vadd.f32 %v721, %v833
    %v849 = vadd.f32 %v726, %v838
    %v850 = vadd.f32 %v731, %v843
    %v851 = vld [vmem:[#allocation2 + $0x78] sm:$0xff]
    %v852 = vld [vmem:[#allocation2 + $0x80] sm:$0xff]
    %v853 = vld [vmem:[#allocation2 + $0x88] sm:$0xff]
    %v854 = vld [vmem:[#allocation2 + $0x90] sm:$0xff]
    %v855 = vld [vmem:[#allocation2 + $0x98] sm:$0xff]
    %s856 = scalar_lea.vmem %s5, 24
    %v857 = vld [vmem:[%s856] sm:$0xff]
    %v859 = vsel %vm485, %v851, 0
    %v862 = vsel %vm485, %v852, 0
    %v865 = vsel %vm485, %v853, 0
    %v868 = vsel %vm485, %v854, 0
    %v871 = vsel %vm485, %v855, 0
    %873 = vmatprep.subr.mxu0 0.0
    %874 = vmatpush1.msra.mxu0 %v857
    %875 = vmatprep.subr.mxu0 0.0
    %876 = vmatpush1.msra.mxu0 0.0
    %877 = vmatprep.subr.mxu0 0.0
    %878 = vmatpush1.msra.mxu0 0.0
    %879 = vmatprep.subr.mxu0 0.0
    %880 = vmatpush1.msra.mxu0 0.0
    %881 = vmatprep.subr.mxu0 0.0
    %882 = vmatpush1.msra.mxu0 0.0
    %883 = vmatprep.subr.mxu0 0.0
    %884 = vmatpush1.msra.mxu0 0.0
    %885 = vmatprep.subr.mxu0 0.0
    %886 = vmatpush1.msra.mxu0 0.0
    %887 = vmatprep.subr.mxu0 0.0
    %888 = vmatpush1.msra.mxu0 0.0
    %889 = vmatprep.subr.mxu0 0.0
    %890 = vmatpush1.msra.mxu0 0.0
    %891 = vmatprep.subr.mxu0 0.0
    %892 = vmatpush1.msra.mxu0 0.0
    %893 = vmatprep.subr.mxu0 0.0
    %894 = vmatpush1.msra.mxu0 0.0
    %895 = vmatprep.subr.mxu0 0.0
    %896 = vmatpush1.msra.mxu0 0.0
    %897 = vmatprep.subr.mxu0 0.0
    %898 = vmatpush1.msra.mxu0 0.0
    %899 = vmatprep.subr.mxu0 0.0
    %900 = vmatpush1.msra.mxu0 0.0
    %901 = vmatprep.subr.mxu0 0.0
    %902 = vmatpush1.msra.mxu0 0.0
    %903 = vmatprep.subr.mxu0 0.0
    %904 = vmatpush1.msra.mxu0 0.0
    %905 = vmatprep.subr.mxu0 0.0
    %906 = vmatpush1.msra.mxu0 0.0
    %907 = vmatprep.subr.mxu0 0.0
    %908 = vmatpush1.msra.mxu0 0.0
    %909 = vmatprep.subr.mxu0 0.0
    %910 = vmatpush1.msra.mxu0 0.0
    %911 = vmatprep.subr.mxu0 0.0
    %912 = vmatpush1.msra.mxu0 0.0
    %913 = vmatprep.subr.mxu0 0.0
    %914 = vmatpush1.msra.mxu0 0.0
    %915 = vmatprep.subr.mxu0 0.0
    %916 = vmatpush1.msra.mxu0 0.0
    %917 = vmatprep.subr.mxu0 0.0
    %918 = vmatpush1.msra.mxu0 0.0
    %919 = vmatprep.subr.mxu0 0.0
    %920 = vmatpush1.msra.mxu0 0.0
    %921 = vmatprep.subr.mxu0 0.0
    %922 = vmatpush1.msra.mxu0 0.0
    %923 = vmatprep.subr.mxu0 0.0
    %924 = vmatpush1.msra.mxu0 0.0
    %925 = vmatprep.subr.mxu0 0.0
    %926 = vmatpush1.msra.mxu0 0.0
    %927 = vmatprep.subr.mxu0 0.0
    %928 = vmatpush1.msra.mxu0 0.0
    %929 = vmatprep.subr.mxu0 0.0
    %930 = vmatpush1.msra.mxu0 0.0
    %931 = vmatprep.subr.mxu0 0.0
    %932 = vmatpush1.msra.mxu0 0.0
    %933 = vmatprep.subr.mxu0 0.0
    %934 = vmatpush1.msra.mxu0 0.0
    %935 = vmatprep.subr.mxu0 0.0
    %936 = vmatpush1.msra.mxu0 0.0
    %937 = vmatprep.mubr.f32.mxu0 0.0
    %938 = vmatmul.mubr.f32.gmra.mrb[0].mxu0 %v859
    %v939 = vpop.f32.mrb[0].mxu0
    %v940 = vadd.f32 0.0, %v939
    %v941 = vpop.f32.mrb[0].mxu0
    %942 = vmatprep.mubr.f32.mxu0 0.0
    %943 = vmatmul.mubr.f32.gmra.mrb[0].mxu0 %v862
    %v944 = vpop.f32.mrb[0].mxu0
    %v945 = vadd.f32 0.0, %v944
    %v946 = vpop.f32.mrb[0].mxu0
    %947 = vmatprep.mubr.f32.mxu0 0.0
    %948 = vmatmul.mubr.f32.gmra.mrb[0].mxu0 %v865
    %v949 = vpop.f32.mrb[0].mxu0
    %v950 = vadd.f32 0.0, %v949
    %v951 = vpop.f32.mrb[0].mxu0
    %952 = vmatprep.mubr.f32.mxu0 0.0
    %953 = vmatmul.mubr.f32.gmra.mrb[0].mxu0 %v868
    %v954 = vpop.f32.mrb[0].mxu0
    %v955 = vadd.f32 0.0, %v954
    %v956 = vpop.f32.mrb[0].mxu0
    %957 = vmatprep.mubr.f32.mxu0 0.0
    %958 = vmatmul.mubr.f32.gmra.mrb[0].mxu0 %v871
    %v959 = vpop.f32.mrb[0].mxu0
    %v960 = vadd.f32 0.0, %v959
    %v961 = vpop.f32.mrb[0].mxu0
    %962 = vdwg.mxu0
    %v963 = vadd.f32 %v846, %v940
    %v964 = vadd.f32 %v847, %v945
    %v965 = vadd.f32 %v848, %v950
    %v966 = vadd.f32 %v849, %v955
    %v967 = vadd.f32 %v850, %v960
    %v968 = vld [vmem:[#allocation2 + $0xa0] sm:$0xff]
    %v969 = vld [vmem:[#allocation2 + $0xa8] sm:$0xff]
    %v970 = vld [vmem:[#allocation2 + $0xb0] sm:$0xff]
    %v971 = vld [vmem:[#allocation2 + $0xb8] sm:$0xff]
    %v972 = vld [vmem:[#allocation2 + $0xc0] sm:$0xff]
    %s973 = scalar_lea.vmem %s5, 32
    %v974 = vld [vmem:[%s973] sm:$0xff]
    %v976 = vsel %vm485, %v968, 0
    %v979 = vsel %vm485, %v969, 0
    %v982 = vsel %vm485, %v970, 0
    %v985 = vsel %vm485, %v971, 0
    %v988 = vsel %vm485, %v972, 0
    %990 = vmatprep.subr.mxu0 0.0
    %991 = vmatpush1.msra.mxu0 %v974
    %992 = vmatprep.subr.mxu0 0.0
    %993 = vmatpush1.msra.mxu0 0.0
    %994 = vmatprep.subr.mxu0 0.0
    %995 = vmatpush1.msra.mxu0 0.0
    %996 = vmatprep.subr.mxu0 0.0
    %997 = vmatpush1.msra.mxu0 0.0
    %998 = vmatprep.subr.mxu0 0.0
    %999 = vmatpush1.msra.mxu0 0.0
    %1000 = vmatprep.subr.mxu0 0.0
    %1001 = vmatpush1.msra.mxu0 0.0
    %1002 = vmatprep.subr.mxu0 0.0
    %1003 = vmatpush1.msra.mxu0 0.0
    %1004 = vmatprep.subr.mxu0 0.0
    %1005 = vmatpush1.msra.mxu0 0.0
    %1006 = vmatprep.subr.mxu0 0.0
    %1007 = vmatpush1.msra.mxu0 0.0
    %1008 = vmatprep.subr.mxu0 0.0
    %1009 = vmatpush1.msra.mxu0 0.0
    %1010 = vmatprep.subr.mxu0 0.0
    %1011 = vmatpush1.msra.mxu0 0.0
    %1012 = vmatprep.subr.mxu0 0.0
    %1013 = vmatpush1.msra.mxu0 0.0
    %1014 = vmatprep.subr.mxu0 0.0
    %1015 = vmatpush1.msra.mxu0 0.0
    %1016 = vmatprep.subr.mxu0 0.0
    %1017 = vmatpush1.msra.mxu0 0.0
    %1018 = vmatprep.subr.mxu0 0.0
    %1019 = vmatpush1.msra.mxu0 0.0
    %1020 = vmatprep.subr.mxu0 0.0
    %1021 = vmatpush1.msra.mxu0 0.0
    %1022 = vmatprep.subr.mxu0 0.0
    %1023 = vmatpush1.msra.mxu0 0.0
    %1024 = vmatprep.subr.mxu0 0.0
    %1025 = vmatpush1.msra.mxu0 0.0
    %1026 = vmatprep.subr.mxu0 0.0
    %1027 = vmatpush1.msra.mxu0 0.0
    %1028 = vmatprep.subr.mxu0 0.0
    %1029 = vmatpush1.msra.mxu0 0.0
    %1030 = vmatprep.subr.mxu0 0.0
    %1031 = vmatpush1.msra.mxu0 0.0
    %1032 = vmatprep.subr.mxu0 0.0
    %1033 = vmatpush1.msra.mxu0 0.0
    %1034 = vmatprep.subr.mxu0 0.0
    %1035 = vmatpush1.msra.mxu0 0.0
    %1036 = vmatprep.subr.mxu0 0.0
    %1037 = vmatpush1.msra.mxu0 0.0
    %1038 = vmatprep.subr.mxu0 0.0
    %1039 = vmatpush1.msra.mxu0 0.0
    %1040 = vmatprep.subr.mxu0 0.0
    %1041 = vmatpush1.msra.mxu0 0.0
    %1042 = vmatprep.subr.mxu0 0.0
    %1043 = vmatpush1.msra.mxu0 0.0
    %1044 = vmatprep.subr.mxu0 0.0
    %1045 = vmatpush1.msra.mxu0 0.0
    %1046 = vmatprep.subr.mxu0 0.0
    %1047 = vmatpush1.msra.mxu0 0.0
    %1048 = vmatprep.subr.mxu0 0.0
    %1049 = vmatpush1.msra.mxu0 0.0
    %1050 = vmatprep.subr.mxu0 0.0
    %1051 = vmatpush1.msra.mxu0 0.0
    %1052 = vmatprep.subr.mxu0 0.0
    %1053 = vmatpush1.msra.mxu0 0.0
    %1054 = vmatprep.mubr.f32.mxu0 0.0
    %1055 = vmatmul.mubr.f32.gmra.mrb[0].mxu0 %v976
    %v1056 = vpop.f32.mrb[0].mxu0
    %v1057 = vadd.f32 0.0, %v1056
    %v1058 = vpop.f32.mrb[0].mxu0
    %1059 = vmatprep.mubr.f32.mxu0 0.0
    %1060 = vmatmul.mubr.f32.gmra.mrb[0].mxu0 %v979
    %v1061 = vpop.f32.mrb[0].mxu0
    %v1062 = vadd.f32 0.0, %v1061
    %v1063 = vpop.f32.mrb[0].mxu0
    %1064 = vmatprep.mubr.f32.mxu0 0.0
    %1065 = vmatmul.mubr.f32.gmra.mrb[0].mxu0 %v982
    %v1066 = vpop.f32.mrb[0].mxu0
    %v1067 = vadd.f32 0.0, %v1066
    %v1068 = vpop.f32.mrb[0].mxu0
    %1069 = vmatprep.mubr.f32.mxu0 0.0
    %1070 = vmatmul.mubr.f32.gmra.mrb[0].mxu0 %v985
    %v1071 = vpop.f32.mrb[0].mxu0
    %v1072 = vadd.f32 0.0, %v1071
    %v1073 = vpop.f32.mrb[0].mxu0
    %1074 = vmatprep.mubr.f32.mxu0 0.0
    %1075 = vmatmul.mubr.f32.gmra.mrb[0].mxu0 %v988
    %v1076 = vpop.f32.mrb[0].mxu0
    %v1077 = vadd.f32 0.0, %v1076
    %v1078 = vpop.f32.mrb[0].mxu0
    %1079 = vdwg.mxu0
    %v1080 = vadd.f32 %v963, %v1057
    %v1081 = vadd.f32 %v964, %v1062
    %v1082 = vadd.f32 %v965, %v1067
    %v1083 = vadd.f32 %v966, %v1072
    %v1084 = vadd.f32 %v967, %v1077
    %v1086 = vlaneseq
    %v1087 = vshrl.u32 %v1086, 7
    %v1088 = vsub.s32 0, %v1087
    %v1089 = vrot.slane %v104, %v1088
    %v1091 = vadd.f32 %v1080, %v1089
    %v1092 = vadd.f32 %v1081, %v1089
    %v1093 = vadd.f32 %v1082, %v1089
    %v1094 = vadd.f32 %v1083, %v1089
    %v1095 = vadd.f32 %v1084, %v1089
    %v1096 = vmax.f32 %v1091, 0.0
    %v1097 = vmax.f32 %v1092, 0.0
    %v1098 = vmax.f32 %v1093, 0.0
    %v1099 = vmax.f32 %v1094, 0.0
    %v1100 = vmax.f32 %v1095, 0.0
    %vm1101 = vcmask 130048
    %1102 = vst.msk [vmem:[#allocation3] sm:$0xff] %vm1101, %v1096
    %1103 = vst.msk [vmem:[#allocation3 + $0x8] sm:$0xff] %vm1101, %v1097
    %1104 = vst.msk [vmem:[#allocation3 + $0x10] sm:$0xff] %vm1101, %v1098
    %1105 = vst.msk [vmem:[#allocation3 + $0x18] sm:$0xff] %vm1101, %v1099
    %1106 = vst.msk [vmem:[#allocation3 + $0x20] sm:$0xff] %vm1101, %v1100
    %v1107 = vld [vmem:[#allocation3] sm:$0xff]
    %v1108 = vld [vmem:[%s7] sm:$0xff]
    %v1109 = vld [vmem:[%s7 + $0x8] sm:$0xff]
    %v1110 = vld [vmem:[#allocation3 + $0x8] sm:$0xff]
    %s1111 = scalar_lea.vmem %s7, 16
    %v1112 = vld [vmem:[%s1111] sm:$0xff]
    %v1113 = vld [vmem:[%s1111 + $0x8] sm:$0xff]
    %v1115 = vsel %vm1101, %v1110, 0
    %1117 = vmatprep.subr.mxu0 0.0
    %1118 = vmatpush1.msra.mxu0 %v1112
    %1119 = vmatprep.subr.mxu0 0.0
    %1120 = vmatpush1.msra.mxu0 %v1113
    %1121 = vmatprep.subr.mxu0 0.0
    %1122 = vmatpush1.msra.mxu0 0.0
    %1123 = vmatprep.subr.mxu0 0.0
    %1124 = vmatpush1.msra.mxu0 0.0
    %1125 = vmatprep.subr.mxu0 0.0
    %1126 = vmatpush1.msra.mxu0 0.0
    %1127 = vmatprep.subr.mxu0 0.0
    %1128 = vmatpush1.msra.mxu0 0.0
    %1129 = vmatprep.subr.mxu0 0.0
    %1130 = vmatpush1.msra.mxu0 0.0
    %1131 = vmatprep.subr.mxu0 0.0
    %1132 = vmatpush1.msra.mxu0 0.0
    %1133 = vmatprep.subr.mxu0 0.0
    %1134 = vmatpush1.msra.mxu0 0.0
    %1135 = vmatprep.subr.mxu0 0.0
    %1136 = vmatpush1.msra.mxu0 0.0
    %1137 = vmatprep.subr.mxu0 0.0
    %1138 = vmatpush1.msra.mxu0 0.0
    %1139 = vmatprep.subr.mxu0 0.0
    %1140 = vmatpush1.msra.mxu0 0.0
    %1141 = vmatprep.subr.mxu0 0.0
    %1142 = vmatpush1.msra.mxu0 0.0
    %1143 = vmatprep.subr.mxu0 0.0
    %1144 = vmatpush1.msra.mxu0 0.0
    %1145 = vmatprep.subr.mxu0 0.0
    %1146 = vmatpush1.msra.mxu0 0.0
    %1147 = vmatprep.subr.mxu0 0.0
    %1148 = vmatpush1.msra.mxu0 0.0
    %1149 = vmatprep.subr.mxu0 0.0
    %1150 = vmatpush1.msra.mxu0 0.0
    %1151 = vmatprep.subr.mxu0 0.0
    %1152 = vmatpush1.msra.mxu0 0.0
    %1153 = vmatprep.subr.mxu0 0.0
    %1154 = vmatpush1.msra.mxu0 0.0
    %1155 = vmatprep.subr.mxu0 0.0
    %1156 = vmatpush1.msra.mxu0 0.0
    %1157 = vmatprep.subr.mxu0 0.0
    %1158 = vmatpush1.msra.mxu0 0.0
    %1159 = vmatprep.subr.mxu0 0.0
    %1160 = vmatpush1.msra.mxu0 0.0
    %1161 = vmatprep.subr.mxu0 0.0
    %1162 = vmatpush1.msra.mxu0 0.0
    %1163 = vmatprep.subr.mxu0 0.0
    %1164 = vmatpush1.msra.mxu0 0.0
    %1165 = vmatprep.subr.mxu0 0.0
    %1166 = vmatpush1.msra.mxu0 0.0
    %1167 = vmatprep.subr.mxu0 0.0
    %1168 = vmatpush1.msra.mxu0 0.0
    %1169 = vmatprep.subr.mxu0 0.0
    %1170 = vmatpush1.msra.mxu0 0.0
    %1171 = vmatprep.subr.mxu0 0.0
    %1172 = vmatpush1.msra.mxu0 0.0
    %1173 = vmatprep.subr.mxu0 0.0
    %1174 = vmatpush1.msra.mxu0 0.0
    %1175 = vmatprep.subr.mxu0 0.0
    %1176 = vmatpush1.msra.mxu0 0.0
    %1177 = vmatprep.subr.mxu0 0.0
    %1178 = vmatpush1.msra.mxu0 0.0
    %1179 = vmatprep.subr.mxu0 0.0
    %1180 = vmatpush1.msra.mxu0 0.0
    %1181 = vmatprep.mubr.f32.mxu0 0.0
    %1182 = vmatmul.mubr.f32.gmra.mrb[0].mxu0 %v1115
    %v1183 = vpop.f32.mrb[0].mxu0
    %v1184 = vadd.f32 0.0, %v1183
    %v1185 = vpop.f32.mrb[0].mxu0
    %1186 = vdwg.mxu0
    %v1188 = vsel %vm1101, %v1107, 0
    %1190 = vmatprep.subr.mxu0 0.0
    %1191 = vmatpush1.msra.mxu0 %v1108
    %1192 = vmatprep.subr.mxu0 0.0
    %1193 = vmatpush1.msra.mxu0 %v1109
    %1194 = vmatprep.subr.mxu0 0.0
    %1195 = vmatpush1.msra.mxu0 0.0
    %1196 = vmatprep.subr.mxu0 0.0
    %1197 = vmatpush1.msra.mxu0 0.0
    %1198 = vmatprep.subr.mxu0 0.0
    %1199 = vmatpush1.msra.mxu0 0.0
    %1200 = vmatprep.subr.mxu0 0.0
    %1201 = vmatpush1.msra.mxu0 0.0
    %1202 = vmatprep.subr.mxu0 0.0
    %1203 = vmatpush1.msra.mxu0 0.0
    %1204 = vmatprep.subr.mxu0 0.0
    %1205 = vmatpush1.msra.mxu0 0.0
    %1206 = vmatprep.subr.mxu0 0.0
    %1207 = vmatpush1.msra.mxu0 0.0
    %1208 = vmatprep.subr.mxu0 0.0
    %1209 = vmatpush1.msra.mxu0 0.0
    %1210 = vmatprep.subr.mxu0 0.0
    %1211 = vmatpush1.msra.mxu0 0.0
    %1212 = vmatprep.subr.mxu0 0.0
    %1213 = vmatpush1.msra.mxu0 0.0
    %1214 = vmatprep.subr.mxu0 0.0
    %1215 = vmatpush1.msra.mxu0 0.0
    %1216 = vmatprep.subr.mxu0 0.0
    %1217 = vmatpush1.msra.mxu0 0.0
    %1218 = vmatprep.subr.mxu0 0.0
    %1219 = vmatpush1.msra.mxu0 0.0
    %1220 = vmatprep.subr.mxu0 0.0
    %1221 = vmatpush1.msra.mxu0 0.0
    %1222 = vmatprep.subr.mxu0 0.0
    %1223 = vmatpush1.msra.mxu0 0.0
    %1224 = vmatprep.subr.mxu0 0.0
    %1225 = vmatpush1.msra.mxu0 0.0
    %1226 = vmatprep.subr.mxu0 0.0
    %1227 = vmatpush1.msra.mxu0 0.0
    %1228 = vmatprep.subr.mxu0 0.0
    %1229 = vmatpush1.msra.mxu0 0.0
    %1230 = vmatprep.subr.mxu0 0.0
    %1231 = vmatpush1.msra.mxu0 0.0
    %1232 = vmatprep.subr.mxu0 0.0
    %1233 = vmatpush1.msra.mxu0 0.0
    %1234 = vmatprep.subr.mxu0 0.0
    %1235 = vmatpush1.msra.mxu0 0.0
    %1236 = vmatprep.subr.mxu0 0.0
    %1237 = vmatpush1.msra.mxu0 0.0
    %1238 = vmatprep.subr.mxu0 0.0
    %1239 = vmatpush1.msra.mxu0 0.0
    %1240 = vmatprep.subr.mxu0 0.0
    %1241 = vmatpush1.msra.mxu0 0.0
    %1242 = vmatprep.subr.mxu0 0.0
    %1243 = vmatpush1.msra.mxu0 0.0
    %1244 = vmatprep.subr.mxu0 0.0
    %1245 = vmatpush1.msra.mxu0 0.0
    %1246 = vmatprep.subr.mxu0 0.0
    %1247 = vmatpush1.msra.mxu0 0.0
    %1248 = vmatprep.subr.mxu0 0.0
    %1249 = vmatpush1.msra.mxu0 0.0
    %1250 = vmatprep.subr.mxu0 0.0
    %1251 = vmatpush1.msra.mxu0 0.0
    %1252 = vmatprep.subr.mxu0 0.0
    %1253 = vmatpush1.msra.mxu0 0.0
    %1254 = vmatprep.mubr.f32.mxu0 0.0
    %1255 = vmatmul.mubr.f32.gmra.mrb[0].mxu0 %v1188
    %v1256 = vpop.f32.mrb[0].mxu0
    %v1257 = vadd.f32 %v1184, %v1256
    %v1258 = vpop.f32.mrb[0].mxu0
    %1259 = vdwg.mxu0
    %v1260 = vld [vmem:[#allocation3 + $0x10] sm:$0xff]
    %s1261 = scalar_lea.vmem %s7, 32
    %v1262 = vld [vmem:[%s1261] sm:$0xff]
    %v1263 = vld [vmem:[%s1261 + $0x8] sm:$0xff]
    %v1265 = vsel %vm1101, %v1260, 0
    %1267 = vmatprep.subr.mxu0 0.0
    %1268 = vmatpush1.msra.mxu0 %v1262
    %1269 = vmatprep.subr.mxu0 0.0
    %1270 = vmatpush1.msra.mxu0 %v1263
    %1271 = vmatprep.subr.mxu0 0.0
    %1272 = vmatpush1.msra.mxu0 0.0
    %1273 = vmatprep.subr.mxu0 0.0
    %1274 = vmatpush1.msra.mxu0 0.0
    %1275 = vmatprep.subr.mxu0 0.0
    %1276 = vmatpush1.msra.mxu0 0.0
    %1277 = vmatprep.subr.mxu0 0.0
    %1278 = vmatpush1.msra.mxu0 0.0
    %1279 = vmatprep.subr.mxu0 0.0
    %1280 = vmatpush1.msra.mxu0 0.0
    %1281 = vmatprep.subr.mxu0 0.0
    %1282 = vmatpush1.msra.mxu0 0.0
    %1283 = vmatprep.subr.mxu0 0.0
    %1284 = vmatpush1.msra.mxu0 0.0
    %1285 = vmatprep.subr.mxu0 0.0
    %1286 = vmatpush1.msra.mxu0 0.0
    %1287 = vmatprep.subr.mxu0 0.0
    %1288 = vmatpush1.msra.mxu0 0.0
    %1289 = vmatprep.subr.mxu0 0.0
    %1290 = vmatpush1.msra.mxu0 0.0
    %1291 = vmatprep.subr.mxu0 0.0
    %1292 = vmatpush1.msra.mxu0 0.0
    %1293 = vmatprep.subr.mxu0 0.0
    %1294 = vmatpush1.msra.mxu0 0.0
    %1295 = vmatprep.subr.mxu0 0.0
    %1296 = vmatpush1.msra.mxu0 0.0
    %1297 = vmatprep.subr.mxu0 0.0
    %1298 = vmatpush1.msra.mxu0 0.0
    %1299 = vmatprep.subr.mxu0 0.0
    %1300 = vmatpush1.msra.mxu0 0.0
    %1301 = vmatprep.subr.mxu0 0.0
    %1302 = vmatpush1.msra.mxu0 0.0
    %1303 = vmatprep.subr.mxu0 0.0
    %1304 = vmatpush1.msra.mxu0 0.0
    %1305 = vmatprep.subr.mxu0 0.0
    %1306 = vmatpush1.msra.mxu0 0.0
    %1307 = vmatprep.subr.mxu0 0.0
    %1308 = vmatpush1.msra.mxu0 0.0
    %1309 = vmatprep.subr.mxu0 0.0
    %1310 = vmatpush1.msra.mxu0 0.0
    %1311 = vmatprep.subr.mxu0 0.0
    %1312 = vmatpush1.msra.mxu0 0.0
    %1313 = vmatprep.subr.mxu0 0.0
    %1314 = vmatpush1.msra.mxu0 0.0
    %1315 = vmatprep.subr.mxu0 0.0
    %1316 = vmatpush1.msra.mxu0 0.0
    %1317 = vmatprep.subr.mxu0 0.0
    %1318 = vmatpush1.msra.mxu0 0.0
    %1319 = vmatprep.subr.mxu0 0.0
    %1320 = vmatpush1.msra.mxu0 0.0
    %1321 = vmatprep.subr.mxu0 0.0
    %1322 = vmatpush1.msra.mxu0 0.0
    %1323 = vmatprep.subr.mxu0 0.0
    %1324 = vmatpush1.msra.mxu0 0.0
    %1325 = vmatprep.subr.mxu0 0.0
    %1326 = vmatpush1.msra.mxu0 0.0
    %1327 = vmatprep.subr.mxu0 0.0
    %1328 = vmatpush1.msra.mxu0 0.0
    %1329 = vmatprep.subr.mxu0 0.0
    %1330 = vmatpush1.msra.mxu0 0.0
    %1331 = vmatprep.mubr.f32.mxu0 0.0
    %1332 = vmatmul.mubr.f32.gmra.mrb[0].mxu0 %v1265
    %v1333 = vpop.f32.mrb[0].mxu0
    %v1334 = vadd.f32 0.0, %v1333
    %v1335 = vpop.f32.mrb[0].mxu0
    %1336 = vdwg.mxu0
    %v1337 = vadd.f32 %v1257, %v1334
    %v1338 = vld [vmem:[#allocation3 + $0x18] sm:$0xff]
    %s1339 = scalar_lea.vmem %s7, 48
    %v1340 = vld [vmem:[%s1339] sm:$0xff]
    %v1341 = vld [vmem:[%s1339 + $0x8] sm:$0xff]
    %v1343 = vsel %vm1101, %v1338, 0
    %1345 = vmatprep.subr.mxu0 0.0
    %1346 = vmatpush1.msra.mxu0 %v1340
    %1347 = vmatprep.subr.mxu0 0.0
    %1348 = vmatpush1.msra.mxu0 %v1341
    %1349 = vmatprep.subr.mxu0 0.0
    %1350 = vmatpush1.msra.mxu0 0.0
    %1351 = vmatprep.subr.mxu0 0.0
    %1352 = vmatpush1.msra.mxu0 0.0
    %1353 = vmatprep.subr.mxu0 0.0
    %1354 = vmatpush1.msra.mxu0 0.0
    %1355 = vmatprep.subr.mxu0 0.0
    %1356 = vmatpush1.msra.mxu0 0.0
    %1357 = vmatprep.subr.mxu0 0.0
    %1358 = vmatpush1.msra.mxu0 0.0
    %1359 = vmatprep.subr.mxu0 0.0
    %1360 = vmatpush1.msra.mxu0 0.0
    %1361 = vmatprep.subr.mxu0 0.0
    %1362 = vmatpush1.msra.mxu0 0.0
    %1363 = vmatprep.subr.mxu0 0.0
    %1364 = vmatpush1.msra.mxu0 0.0
    %1365 = vmatprep.subr.mxu0 0.0
    %1366 = vmatpush1.msra.mxu0 0.0
    %1367 = vmatprep.subr.mxu0 0.0
    %1368 = vmatpush1.msra.mxu0 0.0
    %1369 = vmatprep.subr.mxu0 0.0
    %1370 = vmatpush1.msra.mxu0 0.0
    %1371 = vmatprep.subr.mxu0 0.0
    %1372 = vmatpush1.msra.mxu0 0.0
    %1373 = vmatprep.subr.mxu0 0.0
    %1374 = vmatpush1.msra.mxu0 0.0
    %1375 = vmatprep.subr.mxu0 0.0
    %1376 = vmatpush1.msra.mxu0 0.0
    %1377 = vmatprep.subr.mxu0 0.0
    %1378 = vmatpush1.msra.mxu0 0.0
    %1379 = vmatprep.subr.mxu0 0.0
    %1380 = vmatpush1.msra.mxu0 0.0
    %1381 = vmatprep.subr.mxu0 0.0
    %1382 = vmatpush1.msra.mxu0 0.0
    %1383 = vmatprep.subr.mxu0 0.0
    %1384 = vmatpush1.msra.mxu0 0.0
    %1385 = vmatprep.subr.mxu0 0.0
    %1386 = vmatpush1.msra.mxu0 0.0
    %1387 = vmatprep.subr.mxu0 0.0
    %1388 = vmatpush1.msra.mxu0 0.0
    %1389 = vmatprep.subr.mxu0 0.0
    %1390 = vmatpush1.msra.mxu0 0.0
    %1391 = vmatprep.subr.mxu0 0.0
    %1392 = vmatpush1.msra.mxu0 0.0
    %1393 = vmatprep.subr.mxu0 0.0
    %1394 = vmatpush1.msra.mxu0 0.0
    %1395 = vmatprep.subr.mxu0 0.0
    %1396 = vmatpush1.msra.mxu0 0.0
    %1397 = vmatprep.subr.mxu0 0.0
    %1398 = vmatpush1.msra.mxu0 0.0
    %1399 = vmatprep.subr.mxu0 0.0
    %1400 = vmatpush1.msra.mxu0 0.0
    %1401 = vmatprep.subr.mxu0 0.0
    %1402 = vmatpush1.msra.mxu0 0.0
    %1403 = vmatprep.subr.mxu0 0.0
    %1404 = vmatpush1.msra.mxu0 0.0
    %1405 = vmatprep.subr.mxu0 0.0
    %1406 = vmatpush1.msra.mxu0 0.0
    %1407 = vmatprep.subr.mxu0 0.0
    %1408 = vmatpush1.msra.mxu0 0.0
    %1409 = vmatprep.mubr.f32.mxu0 0.0
    %1410 = vmatmul.mubr.f32.gmra.mrb[0].mxu0 %v1343
    %v1411 = vpop.f32.mrb[0].mxu0
    %v1412 = vadd.f32 0.0, %v1411
    %v1413 = vpop.f32.mrb[0].mxu0
    %1414 = vdwg.mxu0
    %v1415 = vadd.f32 %v1337, %v1412
    %v1416 = vld [vmem:[#allocation3 + $0x20] sm:$0xff]
    %s1417 = scalar_lea.vmem %s7, 64
    %v1418 = vld [vmem:[%s1417] sm:$0xff]
    %v1419 = vld [vmem:[%s1417 + $0x8] sm:$0xff]
    %v1421 = vsel %vm1101, %v1416, 0
    %1423 = vmatprep.subr.mxu0 0.0
    %1424 = vmatpush1.msra.mxu0 %v1418
    %1425 = vmatprep.subr.mxu0 0.0
    %1426 = vmatpush1.msra.mxu0 %v1419
    %1427 = vmatprep.subr.mxu0 0.0
    %1428 = vmatpush1.msra.mxu0 0.0
    %1429 = vmatprep.subr.mxu0 0.0
    %1430 = vmatpush1.msra.mxu0 0.0
    %1431 = vmatprep.subr.mxu0 0.0
    %1432 = vmatpush1.msra.mxu0 0.0
    %1433 = vmatprep.subr.mxu0 0.0
    %1434 = vmatpush1.msra.mxu0 0.0
    %1435 = vmatprep.subr.mxu0 0.0
    %1436 = vmatpush1.msra.mxu0 0.0
    %1437 = vmatprep.subr.mxu0 0.0
    %1438 = vmatpush1.msra.mxu0 0.0
    %1439 = vmatprep.subr.mxu0 0.0
    %1440 = vmatpush1.msra.mxu0 0.0
    %1441 = vmatprep.subr.mxu0 0.0
    %1442 = vmatpush1.msra.mxu0 0.0
    %1443 = vmatprep.subr.mxu0 0.0
    %1444 = vmatpush1.msra.mxu0 0.0
    %1445 = vmatprep.subr.mxu0 0.0
    %1446 = vmatpush1.msra.mxu0 0.0
    %1447 = vmatprep.subr.mxu0 0.0
    %1448 = vmatpush1.msra.mxu0 0.0
    %1449 = vmatprep.subr.mxu0 0.0
    %1450 = vmatpush1.msra.mxu0 0.0
    %1451 = vmatprep.subr.mxu0 0.0
    %1452 = vmatpush1.msra.mxu0 0.0
    %1453 = vmatprep.subr.mxu0 0.0
    %1454 = vmatpush1.msra.mxu0 0.0
    %1455 = vmatprep.subr.mxu0 0.0
    %1456 = vmatpush1.msra.mxu0 0.0
    %1457 = vmatprep.subr.mxu0 0.0
    %1458 = vmatpush1.msra.mxu0 0.0
    %1459 = vmatprep.subr.mxu0 0.0
    %1460 = vmatpush1.msra.mxu0 0.0
    %1461 = vmatprep.subr.mxu0 0.0
    %1462 = vmatpush1.msra.mxu0 0.0
    %1463 = vmatprep.subr.mxu0 0.0
    %1464 = vmatpush1.msra.mxu0 0.0
    %1465 = vmatprep.subr.mxu0 0.0
    %1466 = vmatpush1.msra.mxu0 0.0
    %1467 = vmatprep.subr.mxu0 0.0
    %1468 = vmatpush1.msra.mxu0 0.0
    %1469 = vmatprep.subr.mxu0 0.0
    %1470 = vmatpush1.msra.mxu0 0.0
    %1471 = vmatprep.subr.mxu0 0.0
    %1472 = vmatpush1.msra.mxu0 0.0
    %1473 = vmatprep.subr.mxu0 0.0
    %1474 = vmatpush1.msra.mxu0 0.0
    %1475 = vmatprep.subr.mxu0 0.0
    %1476 = vmatpush1.msra.mxu0 0.0
    %1477 = vmatprep.subr.mxu0 0.0
    %1478 = vmatpush1.msra.mxu0 0.0
    %1479 = vmatprep.subr.mxu0 0.0
    %1480 = vmatpush1.msra.mxu0 0.0
    %1481 = vmatprep.subr.mxu0 0.0
    %1482 = vmatpush1.msra.mxu0 0.0
    %1483 = vmatprep.subr.mxu0 0.0
    %1484 = vmatpush1.msra.mxu0 0.0
    %1485 = vmatprep.subr.mxu0 0.0
    %1486 = vmatpush1.msra.mxu0 0.0
    %1487 = vmatprep.mubr.f32.mxu0 0.0
    %1488 = vmatmul.mubr.f32.gmra.mrb[0].mxu0 %v1421
    %v1489 = vpop.f32.mrb[0].mxu0
    %v1490 = vadd.f32 0.0, %v1489
    %v1491 = vpop.f32.mrb[0].mxu0
    %1492 = vdwg.mxu0
    %v1493 = vadd.f32 %v1415, %v1490
    %v1495 = vlaneseq
    %v1496 = vshrl.u32 %v1495, 7
    %v1497 = vsub.s32 0, %v1496
    %v1498 = vrot.slane %v105, %v1497
    %v1500 = vadd.f32 %v1493, %v1498
    %v1501 = vmax.f32 %v1500, 0.0
    %vm1502 = vcmask 261120
    %1503 = vst.msk [vmem:[#allocation4] sm:$0xff] %vm1502, %v1501
    %v1504 = vld [vmem:[#allocation4] sm:$0x1]
    %v1505 = vld [vmem:[%s9] sm:$0xff]
    %v1506 = vld [vmem:[%s9 + $0x8] sm:$0xff]
    %v1507 = vld [vmem:[%s9 + $0x10] sm:$0xff]
    %v1508 = vld [vmem:[%s9 + $0x18] sm:$0xff]
    %v1509 = vld [vmem:[#allocation4 + $0x1] sm:$0x1]
    %s1510 = scalar_lea.vmem %s9, 32
    %v1511 = vld [vmem:[%s1510] sm:$0xff]
    %v1512 = vld [vmem:[%s1510 + $0x8] sm:$0xff]
    %v1513 = vld [vmem:[%s1510 + $0x10] sm:$0xff]
    %v1514 = vld [vmem:[%s1510 + $0x18] sm:$0xff]
    %v1516 = vsel %vm1502, %v1509, 0
    %1518 = vmatprep.subr.mxu0 0.0
    %1519 = vmatpush1.msra.mxu0 %v1511
    %1520 = vmatprep.subr.mxu0 0.0
    %1521 = vmatpush1.msra.mxu0 %v1512
    %1522 = vmatprep.subr.mxu0 0.0
    %1523 = vmatpush1.msra.mxu0 %v1513
    %1524 = vmatprep.subr.mxu0 0.0
    %1525 = vmatpush1.msra.mxu0 %v1514
    %1526 = vmatprep.subr.mxu0 0.0
    %1527 = vmatpush1.msra.mxu0 0.0
    %1528 = vmatprep.subr.mxu0 0.0
    %1529 = vmatpush1.msra.mxu0 0.0
    %1530 = vmatprep.subr.mxu0 0.0
    %1531 = vmatpush1.msra.mxu0 0.0
    %1532 = vmatprep.subr.mxu0 0.0
    %1533 = vmatpush1.msra.mxu0 0.0
    %1534 = vmatprep.subr.mxu0 0.0
    %1535 = vmatpush1.msra.mxu0 0.0
    %1536 = vmatprep.subr.mxu0 0.0
    %1537 = vmatpush1.msra.mxu0 0.0
    %1538 = vmatprep.subr.mxu0 0.0
    %1539 = vmatpush1.msra.mxu0 0.0
    %1540 = vmatprep.subr.mxu0 0.0
    %1541 = vmatpush1.msra.mxu0 0.0
    %1542 = vmatprep.subr.mxu0 0.0
    %1543 = vmatpush1.msra.mxu0 0.0
    %1544 = vmatprep.subr.mxu0 0.0
    %1545 = vmatpush1.msra.mxu0 0.0
    %1546 = vmatprep.subr.mxu0 0.0
    %1547 = vmatpush1.msra.mxu0 0.0
    %1548 = vmatprep.subr.mxu0 0.0
    %1549 = vmatpush1.msra.mxu0 0.0
    %1550 = vmatprep.subr.mxu0 0.0
    %1551 = vmatpush1.msra.mxu0 0.0
    %1552 = vmatprep.subr.mxu0 0.0
    %1553 = vmatpush1.msra.mxu0 0.0
    %1554 = vmatprep.subr.mxu0 0.0
    %1555 = vmatpush1.msra.mxu0 0.0
    %1556 = vmatprep.subr.mxu0 0.0
    %1557 = vmatpush1.msra.mxu0 0.0
    %1558 = vmatprep.subr.mxu0 0.0
    %1559 = vmatpush1.msra.mxu0 0.0
    %1560 = vmatprep.subr.mxu0 0.0
    %1561 = vmatpush1.msra.mxu0 0.0
    %1562 = vmatprep.subr.mxu0 0.0
    %1563 = vmatpush1.msra.mxu0 0.0
    %1564 = vmatprep.subr.mxu0 0.0
    %1565 = vmatpush1.msra.mxu0 0.0
    %1566 = vmatprep.subr.mxu0 0.0
    %1567 = vmatpush1.msra.mxu0 0.0
    %1568 = vmatprep.subr.mxu0 0.0
    %1569 = vmatpush1.msra.mxu0 0.0
    %1570 = vmatprep.subr.mxu0 0.0
    %1571 = vmatpush1.msra.mxu0 0.0
    %1572 = vmatprep.subr.mxu0 0.0
    %1573 = vmatpush1.msra.mxu0 0.0
    %1574 = vmatprep.subr.mxu0 0.0
    %1575 = vmatpush1.msra.mxu0 0.0
    %1576 = vmatprep.subr.mxu0 0.0
    %1577 = vmatpush1.msra.mxu0 0.0
    %1578 = vmatprep.subr.mxu0 0.0
    %1579 = vmatpush1.msra.mxu0 0.0
    %1580 = vmatprep.subr.mxu0 0.0
    %1581 = vmatpush1.msra.mxu0 0.0
    %1582 = vmatprep.mubr.f32.mxu0 0.0
    %1583 = vmatmul.mubr.f32.gmra.mrb[0].mxu0 %v1516
    %v1584 = vpop.f32.mrb[0].mxu0
    %v1585 = vadd.f32 0.0, %v1584
    %v1586 = vpop.f32.mrb[0].mxu0
    %1587 = vdwg.mxu0
    %v1589 = vsel %vm1502, %v1504, 0
    %1591 = vmatprep.subr.mxu0 0.0
    %1592 = vmatpush1.msra.mxu0 %v1505
    %1593 = vmatprep.subr.mxu0 0.0
    %1594 = vmatpush1.msra.mxu0 %v1506
    %1595 = vmatprep.subr.mxu0 0.0
    %1596 = vmatpush1.msra.mxu0 %v1507
    %1597 = vmatprep.subr.mxu0 0.0
    %1598 = vmatpush1.msra.mxu0 %v1508
    %1599 = vmatprep.subr.mxu0 0.0
    %1600 = vmatpush1.msra.mxu0 0.0
    %1601 = vmatprep.subr.mxu0 0.0
    %1602 = vmatpush1.msra.mxu0 0.0
    %1603 = vmatprep.subr.mxu0 0.0
    %1604 = vmatpush1.msra.mxu0 0.0
    %1605 = vmatprep.subr.mxu0 0.0
    %1606 = vmatpush1.msra.mxu0 0.0
    %1607 = vmatprep.subr.mxu0 0.0
    %1608 = vmatpush1.msra.mxu0 0.0
    %1609 = vmatprep.subr.mxu0 0.0
    %1610 = vmatpush1.msra.mxu0 0.0
    %1611 = vmatprep.subr.mxu0 0.0
    %1612 = vmatpush1.msra.mxu0 0.0
    %1613 = vmatprep.subr.mxu0 0.0
    %1614 = vmatpush1.msra.mxu0 0.0
    %1615 = vmatprep.subr.mxu0 0.0
    %1616 = vmatpush1.msra.mxu0 0.0
    %1617 = vmatprep.subr.mxu0 0.0
    %1618 = vmatpush1.msra.mxu0 0.0
    %1619 = vmatprep.subr.mxu0 0.0
    %1620 = vmatpush1.msra.mxu0 0.0
    %1621 = vmatprep.subr.mxu0 0.0
    %1622 = vmatpush1.msra.mxu0 0.0
    %1623 = vmatprep.subr.mxu0 0.0
    %1624 = vmatpush1.msra.mxu0 0.0
    %1625 = vmatprep.subr.mxu0 0.0
    %1626 = vmatpush1.msra.mxu0 0.0
    %1627 = vmatprep.subr.mxu0 0.0
    %1628 = vmatpush1.msra.mxu0 0.0
    %1629 = vmatprep.subr.mxu0 0.0
    %1630 = vmatpush1.msra.mxu0 0.0
    %1631 = vmatprep.subr.mxu0 0.0
    %1632 = vmatpush1.msra.mxu0 0.0
    %1633 = vmatprep.subr.mxu0 0.0
    %1634 = vmatpush1.msra.mxu0 0.0
    %1635 = vmatprep.subr.mxu0 0.0
    %1636 = vmatpush1.msra.mxu0 0.0
    %1637 = vmatprep.subr.mxu0 0.0
    %1638 = vmatpush1.msra.mxu0 0.0
    %1639 = vmatprep.subr.mxu0 0.0
    %1640 = vmatpush1.msra.mxu0 0.0
    %1641 = vmatprep.subr.mxu0 0.0
    %1642 = vmatpush1.msra.mxu0 0.0
    %1643 = vmatprep.subr.mxu0 0.0
    %1644 = vmatpush1.msra.mxu0 0.0
    %1645 = vmatprep.subr.mxu0 0.0
    %1646 = vmatpush1.msra.mxu0 0.0
    %1647 = vmatprep.subr.mxu0 0.0
    %1648 = vmatpush1.msra.mxu0 0.0
    %1649 = vmatprep.subr.mxu0 0.0
    %1650 = vmatpush1.msra.mxu0 0.0
    %1651 = vmatprep.subr.mxu0 0.0
    %1652 = vmatpush1.msra.mxu0 0.0
    %1653 = vmatprep.subr.mxu0 0.0
    %1654 = vmatpush1.msra.mxu0 0.0
    %1655 = vmatprep.mubr.f32.mxu0 0.0
    %1656 = vmatmul.mubr.f32.gmra.mrb[0].mxu0 %v1589
    %v1657 = vpop.f32.mrb[0].mxu0
    %v1658 = vadd.f32 %v1585, %v1657
    %v1659 = vpop.f32.mrb[0].mxu0
    %1660 = vdwg.mxu0
    %v1661 = vld [vmem:[#allocation4 + $0x2] sm:$0x1]
    %s1662 = scalar_lea.vmem %s9, 64
    %v1663 = vld [vmem:[%s1662] sm:$0xff]
    %v1664 = vld [vmem:[%s1662 + $0x8] sm:$0xff]
    %v1665 = vld [vmem:[%s1662 + $0x10] sm:$0xff]
    %v1666 = vld [vmem:[%s1662 + $0x18] sm:$0xff]
    %v1668 = vsel %vm1502, %v1661, 0
    %1670 = vmatprep.subr.mxu0 0.0
    %1671 = vmatpush1.msra.mxu0 %v1663
    %1672 = vmatprep.subr.mxu0 0.0
    %1673 = vmatpush1.msra.mxu0 %v1664
    %1674 = vmatprep.subr.mxu0 0.0
    %1675 = vmatpush1.msra.mxu0 %v1665
    %1676 = vmatprep.subr.mxu0 0.0
    %1677 = vmatpush1.msra.mxu0 %v1666
    %1678 = vmatprep.subr.mxu0 0.0
    %1679 = vmatpush1.msra.mxu0 0.0
    %1680 = vmatprep.subr.mxu0 0.0
    %1681 = vmatpush1.msra.mxu0 0.0
    %1682 = vmatprep.subr.mxu0 0.0
    %1683 = vmatpush1.msra.mxu0 0.0
    %1684 = vmatprep.subr.mxu0 0.0
    %1685 = vmatpush1.msra.mxu0 0.0
    %1686 = vmatprep.subr.mxu0 0.0
    %1687 = vmatpush1.msra.mxu0 0.0
    %1688 = vmatprep.subr.mxu0 0.0
    %1689 = vmatpush1.msra.mxu0 0.0
    %1690 = vmatprep.subr.mxu0 0.0
    %1691 = vmatpush1.msra.mxu0 0.0
    %1692 = vmatprep.subr.mxu0 0.0
    %1693 = vmatpush1.msra.mxu0 0.0
    %1694 = vmatprep.subr.mxu0 0.0
    %1695 = vmatpush1.msra.mxu0 0.0
    %1696 = vmatprep.subr.mxu0 0.0
    %1697 = vmatpush1.msra.mxu0 0.0
    %1698 = vmatprep.subr.mxu0 0.0
    %1699 = vmatpush1.msra.mxu0 0.0
    %1700 = vmatprep.subr.mxu0 0.0
    %1701 = vmatpush1.msra.mxu0 0.0
    %1702 = vmatprep.subr.mxu0 0.0
    %1703 = vmatpush1.msra.mxu0 0.0
    %1704 = vmatprep.subr.mxu0 0.0
    %1705 = vmatpush1.msra.mxu0 0.0
    %1706 = vmatprep.subr.mxu0 0.0
    %1707 = vmatpush1.msra.mxu0 0.0
    %1708 = vmatprep.subr.mxu0 0.0
    %1709 = vmatpush1.msra.mxu0 0.0
    %1710 = vmatprep.subr.mxu0 0.0
    %1711 = vmatpush1.msra.mxu0 0.0
    %1712 = vmatprep.subr.mxu0 0.0
    %1713 = vmatpush1.msra.mxu0 0.0
    %1714 = vmatprep.subr.mxu0 0.0
    %1715 = vmatpush1.msra.mxu0 0.0
    %1716 = vmatprep.subr.mxu0 0.0
    %1717 = vmatpush1.msra.mxu0 0.0
    %1718 = vmatprep.subr.mxu0 0.0
    %1719 = vmatpush1.msra.mxu0 0.0
    %1720 = vmatprep.subr.mxu0 0.0
    %1721 = vmatpush1.msra.mxu0 0.0
    %1722 = vmatprep.subr.mxu0 0.0
    %1723 = vmatpush1.msra.mxu0 0.0
    %1724 = vmatprep.subr.mxu0 0.0
    %1725 = vmatpush1.msra.mxu0 0.0
    %1726 = vmatprep.subr.mxu0 0.0
    %1727 = vmatpush1.msra.mxu0 0.0
    %1728 = vmatprep.subr.mxu0 0.0
    %1729 = vmatpush1.msra.mxu0 0.0
    %1730 = vmatprep.subr.mxu0 0.0
    %1731 = vmatpush1.msra.mxu0 0.0
    %1732 = vmatprep.subr.mxu0 0.0
    %1733 = vmatpush1.msra.mxu0 0.0
    %1734 = vmatprep.mubr.f32.mxu0 0.0
    %1735 = vmatmul.mubr.f32.gmra.mrb[0].mxu0 %v1668
    %v1736 = vpop.f32.mrb[0].mxu0
    %v1737 = vadd.f32 0.0, %v1736
    %v1738 = vpop.f32.mrb[0].mxu0
    %1739 = vdwg.mxu0
    %v1740 = vadd.f32 %v1658, %v1737
    %v1741 = vld [vmem:[#allocation4 + $0x3] sm:$0x1]
    %s1742 = scalar_lea.vmem %s9, 96
    %v1743 = vld [vmem:[%s1742] sm:$0xff]
    %v1744 = vld [vmem:[%s1742 + $0x8] sm:$0xff]
    %v1745 = vld [vmem:[%s1742 + $0x10] sm:$0xff]
    %v1746 = vld [vmem:[%s1742 + $0x18] sm:$0xff]
    %v1748 = vsel %vm1502, %v1741, 0
    %1750 = vmatprep.subr.mxu0 0.0
    %1751 = vmatpush1.msra.mxu0 %v1743
    %1752 = vmatprep.subr.mxu0 0.0
    %1753 = vmatpush1.msra.mxu0 %v1744
    %1754 = vmatprep.subr.mxu0 0.0
    %1755 = vmatpush1.msra.mxu0 %v1745
    %1756 = vmatprep.subr.mxu0 0.0
    %1757 = vmatpush1.msra.mxu0 %v1746
    %1758 = vmatprep.subr.mxu0 0.0
    %1759 = vmatpush1.msra.mxu0 0.0
    %1760 = vmatprep.subr.mxu0 0.0
    %1761 = vmatpush1.msra.mxu0 0.0
    %1762 = vmatprep.subr.mxu0 0.0
    %1763 = vmatpush1.msra.mxu0 0.0
    %1764 = vmatprep.subr.mxu0 0.0
    %1765 = vmatpush1.msra.mxu0 0.0
    %1766 = vmatprep.subr.mxu0 0.0
    %1767 = vmatpush1.msra.mxu0 0.0
    %1768 = vmatprep.subr.mxu0 0.0
    %1769 = vmatpush1.msra.mxu0 0.0
    %1770 = vmatprep.subr.mxu0 0.0
    %1771 = vmatpush1.msra.mxu0 0.0
    %1772 = vmatprep.subr.mxu0 0.0
    %1773 = vmatpush1.msra.mxu0 0.0
    %1774 = vmatprep.subr.mxu0 0.0
    %1775 = vmatpush1.msra.mxu0 0.0
    %1776 = vmatprep.subr.mxu0 0.0
    %1777 = vmatpush1.msra.mxu0 0.0
    %1778 = vmatprep.subr.mxu0 0.0
    %1779 = vmatpush1.msra.mxu0 0.0
    %1780 = vmatprep.subr.mxu0 0.0
    %1781 = vmatpush1.msra.mxu0 0.0
    %1782 = vmatprep.subr.mxu0 0.0
    %1783 = vmatpush1.msra.mxu0 0.0
    %1784 = vmatprep.subr.mxu0 0.0
    %1785 = vmatpush1.msra.mxu0 0.0
    %1786 = vmatprep.subr.mxu0 0.0
    %1787 = vmatpush1.msra.mxu0 0.0
    %1788 = vmatprep.subr.mxu0 0.0
    %1789 = vmatpush1.msra.mxu0 0.0
    %1790 = vmatprep.subr.mxu0 0.0
    %1791 = vmatpush1.msra.mxu0 0.0
    %1792 = vmatprep.subr.mxu0 0.0
    %1793 = vmatpush1.msra.mxu0 0.0
    %1794 = vmatprep.subr.mxu0 0.0
    %1795 = vmatpush1.msra.mxu0 0.0
    %1796 = vmatprep.subr.mxu0 0.0
    %1797 = vmatpush1.msra.mxu0 0.0
    %1798 = vmatprep.subr.mxu0 0.0
    %1799 = vmatpush1.msra.mxu0 0.0
    %1800 = vmatprep.subr.mxu0 0.0
    %1801 = vmatpush1.msra.mxu0 0.0
    %1802 = vmatprep.subr.mxu0 0.0
    %1803 = vmatpush1.msra.mxu0 0.0
    %1804 = vmatprep.subr.mxu0 0.0
    %1805 = vmatpush1.msra.mxu0 0.0
    %1806 = vmatprep.subr.mxu0 0.0
    %1807 = vmatpush1.msra.mxu0 0.0
    %1808 = vmatprep.subr.mxu0 0.0
    %1809 = vmatpush1.msra.mxu0 0.0
    %1810 = vmatprep.subr.mxu0 0.0
    %1811 = vmatpush1.msra.mxu0 0.0
    %1812 = vmatprep.subr.mxu0 0.0
    %1813 = vmatpush1.msra.mxu0 0.0
    %1814 = vmatprep.mubr.f32.mxu0 0.0
    %1815 = vmatmul.mubr.f32.gmra.mrb[0].mxu0 %v1748
    %v1816 = vpop.f32.mrb[0].mxu0
    %v1817 = vadd.f32 0.0, %v1816
    %v1818 = vpop.f32.mrb[0].mxu0
    %1819 = vdwg.mxu0
    %v1820 = vadd.f32 %v1740, %v1817
    %v1821 = vld [vmem:[#allocation4 + $0x4] sm:$0x1]
    %s1822 = scalar_lea.vmem %s9, 128
    %v1823 = vld [vmem:[%s1822] sm:$0xff]
    %v1824 = vld [vmem:[%s1822 + $0x8] sm:$0xff]
    %v1825 = vld [vmem:[%s1822 + $0x10] sm:$0xff]
    %v1826 = vld [vmem:[%s1822 + $0x18] sm:$0xff]
    %v1828 = vsel %vm1502, %v1821, 0
    %1830 = vmatprep.subr.mxu0 0.0
    %1831 = vmatpush1.msra.mxu0 %v1823
    %1832 = vmatprep.subr.mxu0 0.0
    %1833 = vmatpush1.msra.mxu0 %v1824
    %1834 = vmatprep.subr.mxu0 0.0
    %1835 = vmatpush1.msra.mxu0 %v1825
    %1836 = vmatprep.subr.mxu0 0.0
    %1837 = vmatpush1.msra.mxu0 %v1826
    %1838 = vmatprep.subr.mxu0 0.0
    %1839 = vmatpush1.msra.mxu0 0.0
    %1840 = vmatprep.subr.mxu0 0.0
    %1841 = vmatpush1.msra.mxu0 0.0
    %1842 = vmatprep.subr.mxu0 0.0
    %1843 = vmatpush1.msra.mxu0 0.0
    %1844 = vmatprep.subr.mxu0 0.0
    %1845 = vmatpush1.msra.mxu0 0.0
    %1846 = vmatprep.subr.mxu0 0.0
    %1847 = vmatpush1.msra.mxu0 0.0
    %1848 = vmatprep.subr.mxu0 0.0
    %1849 = vmatpush1.msra.mxu0 0.0
    %1850 = vmatprep.subr.mxu0 0.0
    %1851 = vmatpush1.msra.mxu0 0.0
    %1852 = vmatprep.subr.mxu0 0.0
    %1853 = vmatpush1.msra.mxu0 0.0
    %1854 = vmatprep.subr.mxu0 0.0
    %1855 = vmatpush1.msra.mxu0 0.0
    %1856 = vmatprep.subr.mxu0 0.0
    %1857 = vmatpush1.msra.mxu0 0.0
    %1858 = vmatprep.subr.mxu0 0.0
    %1859 = vmatpush1.msra.mxu0 0.0
    %1860 = vmatprep.subr.mxu0 0.0
    %1861 = vmatpush1.msra.mxu0 0.0
    %1862 = vmatprep.subr.mxu0 0.0
    %1863 = vmatpush1.msra.mxu0 0.0
    %1864 = vmatprep.subr.mxu0 0.0
    %1865 = vmatpush1.msra.mxu0 0.0
    %1866 = vmatprep.subr.mxu0 0.0
    %1867 = vmatpush1.msra.mxu0 0.0
    %1868 = vmatprep.subr.mxu0 0.0
    %1869 = vmatpush1.msra.mxu0 0.0
    %1870 = vmatprep.subr.mxu0 0.0
    %1871 = vmatpush1.msra.mxu0 0.0
    %1872 = vmatprep.subr.mxu0 0.0
    %1873 = vmatpush1.msra.mxu0 0.0
    %1874 = vmatprep.subr.mxu0 0.0
    %1875 = vmatpush1.msra.mxu0 0.0
    %1876 = vmatprep.subr.mxu0 0.0
    %1877 = vmatpush1.msra.mxu0 0.0
    %1878 = vmatprep.subr.mxu0 0.0
    %1879 = vmatpush1.msra.mxu0 0.0
    %1880 = vmatprep.subr.mxu0 0.0
    %1881 = vmatpush1.msra.mxu0 0.0
    %1882 = vmatprep.subr.mxu0 0.0
    %1883 = vmatpush1.msra.mxu0 0.0
    %1884 = vmatprep.subr.mxu0 0.0
    %1885 = vmatpush1.msra.mxu0 0.0
    %1886 = vmatprep.subr.mxu0 0.0
    %1887 = vmatpush1.msra.mxu0 0.0
    %1888 = vmatprep.subr.mxu0 0.0
    %1889 = vmatpush1.msra.mxu0 0.0
    %1890 = vmatprep.subr.mxu0 0.0
    %1891 = vmatpush1.msra.mxu0 0.0
    %1892 = vmatprep.subr.mxu0 0.0
    %1893 = vmatpush1.msra.mxu0 0.0
    %1894 = vmatprep.mubr.f32.mxu0 0.0
    %1895 = vmatmul.mubr.f32.gmra.mrb[0].mxu0 %v1828
    %v1896 = vpop.f32.mrb[0].mxu0
    %v1897 = vadd.f32 0.0, %v1896
    %v1898 = vpop.f32.mrb[0].mxu0
    %1899 = vdwg.mxu0
    %v1900 = vadd.f32 %v1820, %v1897
    %v1901 = vld [vmem:[#allocation4 + $0x5] sm:$0x1]
    %s1902 = scalar_lea.vmem %s9, 160
    %v1903 = vld [vmem:[%s1902] sm:$0xff]
    %v1904 = vld [vmem:[%s1902 + $0x8] sm:$0xff]
    %v1905 = vld [vmem:[%s1902 + $0x10] sm:$0xff]
    %v1906 = vld [vmem:[%s1902 + $0x18] sm:$0xff]
    %v1908 = vsel %vm1502, %v1901, 0
    %1910 = vmatprep.subr.mxu0 0.0
    %1911 = vmatpush1.msra.mxu0 %v1903
    %1912 = vmatprep.subr.mxu0 0.0
    %1913 = vmatpush1.msra.mxu0 %v1904
    %1914 = vmatprep.subr.mxu0 0.0
    %1915 = vmatpush1.msra.mxu0 %v1905
    %1916 = vmatprep.subr.mxu0 0.0
    %1917 = vmatpush1.msra.mxu0 %v1906
    %1918 = vmatprep.subr.mxu0 0.0
    %1919 = vmatpush1.msra.mxu0 0.0
    %1920 = vmatprep.subr.mxu0 0.0
    %1921 = vmatpush1.msra.mxu0 0.0
    %1922 = vmatprep.subr.mxu0 0.0
    %1923 = vmatpush1.msra.mxu0 0.0
    %1924 = vmatprep.subr.mxu0 0.0
    %1925 = vmatpush1.msra.mxu0 0.0
    %1926 = vmatprep.subr.mxu0 0.0
    %1927 = vmatpush1.msra.mxu0 0.0
    %1928 = vmatprep.subr.mxu0 0.0
    %1929 = vmatpush1.msra.mxu0 0.0
    %1930 = vmatprep.subr.mxu0 0.0
    %1931 = vmatpush1.msra.mxu0 0.0
    %1932 = vmatprep.subr.mxu0 0.0
    %1933 = vmatpush1.msra.mxu0 0.0
    %1934 = vmatprep.subr.mxu0 0.0
    %1935 = vmatpush1.msra.mxu0 0.0
    %1936 = vmatprep.subr.mxu0 0.0
    %1937 = vmatpush1.msra.mxu0 0.0
    %1938 = vmatprep.subr.mxu0 0.0
    %1939 = vmatpush1.msra.mxu0 0.0
    %1940 = vmatprep.subr.mxu0 0.0
    %1941 = vmatpush1.msra.mxu0 0.0
    %1942 = vmatprep.subr.mxu0 0.0
    %1943 = vmatpush1.msra.mxu0 0.0
    %1944 = vmatprep.subr.mxu0 0.0
    %1945 = vmatpush1.msra.mxu0 0.0
    %1946 = vmatprep.subr.mxu0 0.0
    %1947 = vmatpush1.msra.mxu0 0.0
    %1948 = vmatprep.subr.mxu0 0.0
    %1949 = vmatpush1.msra.mxu0 0.0
    %1950 = vmatprep.subr.mxu0 0.0
    %1951 = vmatpush1.msra.mxu0 0.0
    %1952 = vmatprep.subr.mxu0 0.0
    %1953 = vmatpush1.msra.mxu0 0.0
    %1954 = vmatprep.subr.mxu0 0.0
    %1955 = vmatpush1.msra.mxu0 0.0
    %1956 = vmatprep.subr.mxu0 0.0
    %1957 = vmatpush1.msra.mxu0 0.0
    %1958 = vmatprep.subr.mxu0 0.0
    %1959 = vmatpush1.msra.mxu0 0.0
    %1960 = vmatprep.subr.mxu0 0.0
    %1961 = vmatpush1.msra.mxu0 0.0
    %1962 = vmatprep.subr.mxu0 0.0
    %1963 = vmatpush1.msra.mxu0 0.0
    %1964 = vmatprep.subr.mxu0 0.0
    %1965 = vmatpush1.msra.mxu0 0.0
    %1966 = vmatprep.subr.mxu0 0.0
    %1967 = vmatpush1.msra.mxu0 0.0
    %1968 = vmatprep.subr.mxu0 0.0
    %1969 = vmatpush1.msra.mxu0 0.0
    %1970 = vmatprep.subr.mxu0 0.0
    %1971 = vmatpush1.msra.mxu0 0.0
    %1972 = vmatprep.subr.mxu0 0.0
    %1973 = vmatpush1.msra.mxu0 0.0
    %1974 = vmatprep.mubr.f32.mxu0 0.0
    %1975 = vmatmul.mubr.f32.gmra.mrb[0].mxu0 %v1908
    %v1976 = vpop.f32.mrb[0].mxu0
    %v1977 = vadd.f32 0.0, %v1976
    %v1978 = vpop.f32.mrb[0].mxu0
    %1979 = vdwg.mxu0
    %v1980 = vadd.f32 %v1900, %v1977
    %v1981 = vld [vmem:[#allocation4 + $0x6] sm:$0x1]
    %s1982 = scalar_lea.vmem %s9, 192
    %v1983 = vld [vmem:[%s1982] sm:$0xff]
    %v1984 = vld [vmem:[%s1982 + $0x8] sm:$0xff]
    %v1985 = vld [vmem:[%s1982 + $0x10] sm:$0xff]
    %v1986 = vld [vmem:[%s1982 + $0x18] sm:$0xff]
    %v1988 = vsel %vm1502, %v1981, 0
    %1990 = vmatprep.subr.mxu0 0.0
    %1991 = vmatpush1.msra.mxu0 %v1983
    %1992 = vmatprep.subr.mxu0 0.0
    %1993 = vmatpush1.msra.mxu0 %v1984
    %1994 = vmatprep.subr.mxu0 0.0
    %1995 = vmatpush1.msra.mxu0 %v1985
    %1996 = vmatprep.subr.mxu0 0.0
    %1997 = vmatpush1.msra.mxu0 %v1986
    %1998 = vmatprep.subr.mxu0 0.0
    %1999 = vmatpush1.msra.mxu0 0.0
    %2000 = vmatprep.subr.mxu0 0.0
    %2001 = vmatpush1.msra.mxu0 0.0
    %2002 = vmatprep.subr.mxu0 0.0
    %2003 = vmatpush1.msra.mxu0 0.0
    %2004 = vmatprep.subr.mxu0 0.0
    %2005 = vmatpush1.msra.mxu0 0.0
    %2006 = vmatprep.subr.mxu0 0.0
    %2007 = vmatpush1.msra.mxu0 0.0
    %2008 = vmatprep.subr.mxu0 0.0
    %2009 = vmatpush1.msra.mxu0 0.0
    %2010 = vmatprep.subr.mxu0 0.0
    %2011 = vmatpush1.msra.mxu0 0.0
    %2012 = vmatprep.subr.mxu0 0.0
    %2013 = vmatpush1.msra.mxu0 0.0
    %2014 = vmatprep.subr.mxu0 0.0
    %2015 = vmatpush1.msra.mxu0 0.0
    %2016 = vmatprep.subr.mxu0 0.0
    %2017 = vmatpush1.msra.mxu0 0.0
    %2018 = vmatprep.subr.mxu0 0.0
    %2019 = vmatpush1.msra.mxu0 0.0
    %2020 = vmatprep.subr.mxu0 0.0
    %2021 = vmatpush1.msra.mxu0 0.0
    %2022 = vmatprep.subr.mxu0 0.0
    %2023 = vmatpush1.msra.mxu0 0.0
    %2024 = vmatprep.subr.mxu0 0.0
    %2025 = vmatpush1.msra.mxu0 0.0
    %2026 = vmatprep.subr.mxu0 0.0
    %2027 = vmatpush1.msra.mxu0 0.0
    %2028 = vmatprep.subr.mxu0 0.0
    %2029 = vmatpush1.msra.mxu0 0.0
    %2030 = vmatprep.subr.mxu0 0.0
    %2031 = vmatpush1.msra.mxu0 0.0
    %2032 = vmatprep.subr.mxu0 0.0
    %2033 = vmatpush1.msra.mxu0 0.0
    %2034 = vmatprep.subr.mxu0 0.0
    %2035 = vmatpush1.msra.mxu0 0.0
    %2036 = vmatprep.subr.mxu0 0.0
    %2037 = vmatpush1.msra.mxu0 0.0
    %2038 = vmatprep.subr.mxu0 0.0
    %2039 = vmatpush1.msra.mxu0 0.0
    %2040 = vmatprep.subr.mxu0 0.0
    %2041 = vmatpush1.msra.mxu0 0.0
    %2042 = vmatprep.subr.mxu0 0.0
    %2043 = vmatpush1.msra.mxu0 0.0
    %2044 = vmatprep.subr.mxu0 0.0
    %2045 = vmatpush1.msra.mxu0 0.0
    %2046 = vmatprep.subr.mxu0 0.0
    %2047 = vmatpush1.msra.mxu0 0.0
    %2048 = vmatprep.subr.mxu0 0.0
    %2049 = vmatpush1.msra.mxu0 0.0
    %2050 = vmatprep.subr.mxu0 0.0
    %2051 = vmatpush1.msra.mxu0 0.0
    %2052 = vmatprep.subr.mxu0 0.0
    %2053 = vmatpush1.msra.mxu0 0.0
    %2054 = vmatprep.mubr.f32.mxu0 0.0
    %2055 = vmatmul.mubr.f32.gmra.mrb[0].mxu0 %v1988
    %v2056 = vpop.f32.mrb[0].mxu0
    %v2057 = vadd.f32 0.0, %v2056
    %v2058 = vpop.f32.mrb[0].mxu0
    %2059 = vdwg.mxu0
    %v2060 = vadd.f32 %v1980, %v2057
    %v2061 = vld [vmem:[#allocation4 + $0x7] sm:$0x1]
    %s2062 = scalar_lea.vmem %s9, 224
    %v2063 = vld [vmem:[%s2062] sm:$0xff]
    %v2064 = vld [vmem:[%s2062 + $0x8] sm:$0xff]
    %v2065 = vld [vmem:[%s2062 + $0x10] sm:$0xff]
    %v2066 = vld [vmem:[%s2062 + $0x18] sm:$0xff]
    %v2068 = vsel %vm1502, %v2061, 0
    %2070 = vmatprep.subr.mxu0 0.0
    %2071 = vmatpush1.msra.mxu0 %v2063
    %2072 = vmatprep.subr.mxu0 0.0
    %2073 = vmatpush1.msra.mxu0 %v2064
    %2074 = vmatprep.subr.mxu0 0.0
    %2075 = vmatpush1.msra.mxu0 %v2065
    %2076 = vmatprep.subr.mxu0 0.0
    %2077 = vmatpush1.msra.mxu0 %v2066
    %2078 = vmatprep.subr.mxu0 0.0
    %2079 = vmatpush1.msra.mxu0 0.0
    %2080 = vmatprep.subr.mxu0 0.0
    %2081 = vmatpush1.msra.mxu0 0.0
    %2082 = vmatprep.subr.mxu0 0.0
    %2083 = vmatpush1.msra.mxu0 0.0
    %2084 = vmatprep.subr.mxu0 0.0
    %2085 = vmatpush1.msra.mxu0 0.0
    %2086 = vmatprep.subr.mxu0 0.0
    %2087 = vmatpush1.msra.mxu0 0.0
    %2088 = vmatprep.subr.mxu0 0.0
    %2089 = vmatpush1.msra.mxu0 0.0
    %2090 = vmatprep.subr.mxu0 0.0
    %2091 = vmatpush1.msra.mxu0 0.0
    %2092 = vmatprep.subr.mxu0 0.0
    %2093 = vmatpush1.msra.mxu0 0.0
    %2094 = vmatprep.subr.mxu0 0.0
    %2095 = vmatpush1.msra.mxu0 0.0
    %2096 = vmatprep.subr.mxu0 0.0
    %2097 = vmatpush1.msra.mxu0 0.0
    %2098 = vmatprep.subr.mxu0 0.0
    %2099 = vmatpush1.msra.mxu0 0.0
    %2100 = vmatprep.subr.mxu0 0.0
    %2101 = vmatpush1.msra.mxu0 0.0
    %2102 = vmatprep.subr.mxu0 0.0
    %2103 = vmatpush1.msra.mxu0 0.0
    %2104 = vmatprep.subr.mxu0 0.0
    %2105 = vmatpush1.msra.mxu0 0.0
    %2106 = vmatprep.subr.mxu0 0.0
    %2107 = vmatpush1.msra.mxu0 0.0
    %2108 = vmatprep.subr.mxu0 0.0
    %2109 = vmatpush1.msra.mxu0 0.0
    %2110 = vmatprep.subr.mxu0 0.0
    %2111 = vmatpush1.msra.mxu0 0.0
    %2112 = vmatprep.subr.mxu0 0.0
    %2113 = vmatpush1.msra.mxu0 0.0
    %2114 = vmatprep.subr.mxu0 0.0
    %2115 = vmatpush1.msra.mxu0 0.0
    %2116 = vmatprep.subr.mxu0 0.0
    %2117 = vmatpush1.msra.mxu0 0.0
    %2118 = vmatprep.subr.mxu0 0.0
    %2119 = vmatpush1.msra.mxu0 0.0
    %2120 = vmatprep.subr.mxu0 0.0
    %2121 = vmatpush1.msra.mxu0 0.0
    %2122 = vmatprep.subr.mxu0 0.0
    %2123 = vmatpush1.msra.mxu0 0.0
    %2124 = vmatprep.subr.mxu0 0.0
    %2125 = vmatpush1.msra.mxu0 0.0
    %2126 = vmatprep.subr.mxu0 0.0
    %2127 = vmatpush1.msra.mxu0 0.0
    %2128 = vmatprep.subr.mxu0 0.0
    %2129 = vmatpush1.msra.mxu0 0.0
    %2130 = vmatprep.subr.mxu0 0.0
    %2131 = vmatpush1.msra.mxu0 0.0
    %2132 = vmatprep.subr.mxu0 0.0
    %2133 = vmatpush1.msra.mxu0 0.0
    %2134 = vmatprep.mubr.f32.mxu0 0.0
    %2135 = vmatmul.mubr.f32.gmra.mrb[0].mxu0 %v2068
    %v2136 = vpop.f32.mrb[0].mxu0
    %v2137 = vadd.f32 0.0, %v2136
    %v2138 = vpop.f32.mrb[0].mxu0
    %2139 = vdwg.mxu0
    %v2140 = vadd.f32 %v2060, %v2137
    %v2141 = vadd.f32 %v2140, %v106
    %s2142 = sld [smem:[#allocation5 + $0x80]]
    %v2143 = vstv %s2142
    %v2144 = vmul.f32 %v2143, %v52
    %v2145 = vmul.f32 %v2143, %v53
    %v2146 = vmul.f32 %v2143, %v54
    %v2147 = vmul.f32 %v2143, %v55
    %v2148 = vmul.f32 %v2143, %v56
    %v2149 = vmul.f32 %v2143, %v57
    %v2150 = vmul.f32 %v2143, %v58
    %v2151 = vmul.f32 %v2143, %v59
    %v2152 = vmul.f32 %v2143, %v60
    %v2153 = vmul.f32 %v2143, %v61
    %v2154 = vmul.f32 %v2143, %v62
    %v2155 = vmul.f32 %v2143, %v63
    %v2156 = vmul.f32 %v2143, %v64
    %v2157 = vmul.f32 %v2143, %v65
    %v2158 = vmul.f32 %v2143, %v66
    %v2159 = vmul.f32 %v2143, %v67
    %v2160 = vmul.f32 %v2143, %v68
    %v2161 = vmul.f32 %v2143, %v69
    %v2162 = vmul.f32 %v2143, %v70
    %v2163 = vmul.f32 %v2143, %v71
    %v2164 = vmul.f32 %v2143, %v72
    %v2165 = vmul.f32 %v2143, %v73
    %v2166 = vmul.f32 %v2143, %v74
    %v2167 = vmul.f32 %v2143, %v75
    %v2168 = vmul.f32 %v2143, %v76
    %v2169 = vadd.f32 %v2144, %v77
    %v2170 = vadd.f32 %v2145, %v78
    %v2171 = vadd.f32 %v2146, %v79
    %v2172 = vadd.f32 %v2147, %v80
    %v2173 = vadd.f32 %v2148, %v81
    %v2174 = vadd.f32 %v2149, %v82
    %v2175 = vadd.f32 %v2150, %v83
    %v2176 = vadd.f32 %v2151, %v84
    %v2177 = vadd.f32 %v2152, %v85
    %v2178 = vadd.f32 %v2153, %v86
    %v2179 = vadd.f32 %v2154, %v87
    %v2180 = vadd.f32 %v2155, %v88
    %v2181 = vadd.f32 %v2156, %v89
    %v2182 = vadd.f32 %v2157, %v90
    %v2183 = vadd.f32 %v2158, %v91
    %v2184 = vadd.f32 %v2159, %v92
    %v2185 = vadd.f32 %v2160, %v93
    %v2186 = vadd.f32 %v2161, %v94
    %v2187 = vadd.f32 %v2162, %v95
    %v2188 = vadd.f32 %v2163, %v96
    %v2189 = vadd.f32 %v2164, %v97
    %v2190 = vadd.f32 %v2165, %v98
    %v2191 = vadd.f32 %v2166, %v99
    %v2192 = vadd.f32 %v2167, %v100
    %v2193 = vadd.f32 %v2168, %v101
    %v2194 = vmax.f32 %v2169, 0.0
    %v2195 = vmax.f32 %v2170, 0.0
    %v2196 = vmax.f32 %v2171, 0.0
    %v2197 = vmax.f32 %v2172, 0.0
    %v2198 = vmax.f32 %v2173, 0.0
    %v2199 = vmax.f32 %v2174, 0.0
    %v2200 = vmax.f32 %v2175, 0.0
    %v2201 = vmax.f32 %v2176, 0.0
    %v2202 = vmax.f32 %v2177, 0.0
    %v2203 = vmax.f32 %v2178, 0.0
    %v2204 = vmax.f32 %v2179, 0.0
    %v2205 = vmax.f32 %v2180, 0.0
    %v2206 = vmax.f32 %v2181, 0.0
    %v2207 = vmax.f32 %v2182, 0.0
    %v2208 = vmax.f32 %v2183, 0.0
    %v2209 = vmax.f32 %v2184, 0.0
    %v2210 = vmax.f32 %v2185, 0.0
    %v2211 = vmax.f32 %v2186, 0.0
    %v2212 = vmax.f32 %v2187, 0.0
    %v2213 = vmax.f32 %v2188, 0.0
    %v2214 = vmax.f32 %v2189, 0.0
    %v2215 = vmax.f32 %v2190, 0.0
    %v2216 = vmax.f32 %v2191, 0.0
    %v2217 = vmax.f32 %v2192, 0.0
    %v2218 = vmax.f32 %v2193, 0.0
    %v2220 = vsel %vm190, %v2194, 0
    %v2223 = vsel %vm190, %v2195, 0
    %v2226 = vsel %vm190, %v2196, 0
    %v2229 = vsel %vm190, %v2197, 0
    %v2232 = vsel %vm190, %v2198, 0
    %v2235 = vsel %vm190, %v2199, 0
    %v2238 = vsel %vm190, %v2200, 0
    %v2241 = vsel %vm190, %v2201, 0
    %v2244 = vsel %vm190, %v2202, 0
    %v2247 = vsel %vm190, %v2203, 0
    %v2250 = vsel %vm190, %v2204, 0
    %v2253 = vsel %vm190, %v2205, 0
    %v2256 = vsel %vm190, %v2206, 0
    %v2259 = vsel %vm190, %v2207, 0
    %v2262 = vsel %vm190, %v2208, 0
    %v2265 = vsel %vm190, %v2209, 0
    %v2268 = vsel %vm190, %v2210, 0
    %v2271 = vsel %vm190, %v2211, 0
    %v2274 = vsel %vm190, %v2212, 0
    %v2277 = vsel %vm190, %v2213, 0
    %v2280 = vsel %vm190, %v2214, 0
    %v2283 = vsel %vm190, %v2215, 0
    %v2286 = vsel %vm190, %v2216, 0
    %v2289 = vsel %vm190, %v2217, 0
    %v2292 = vsel %vm190, %v2218, 0
    %2294 = vmatprep.subr.mxu0 0.0
    %2295 = vmatpush1.msra.mxu0 %v268
    %2296 = vmatprep.subr.mxu0 0.0
    %2297 = vmatpush1.msra.mxu0 0.0
    %2298 = vmatprep.subr.mxu0 0.0
    %2299 = vmatpush1.msra.mxu0 0.0
    %2300 = vmatprep.subr.mxu0 0.0
    %2301 = vmatpush1.msra.mxu0 0.0
    %2302 = vmatprep.subr.mxu0 0.0
    %2303 = vmatpush1.msra.mxu0 0.0
    %2304 = vmatprep.subr.mxu0 0.0
    %2305 = vmatpush1.msra.mxu0 0.0
    %2306 = vmatprep.subr.mxu0 0.0
    %2307 = vmatpush1.msra.mxu0 0.0
    %2308 = vmatprep.subr.mxu0 0.0
    %2309 = vmatpush1.msra.mxu0 0.0
    %2310 = vmatprep.subr.mxu0 0.0
    %2311 = vmatpush1.msra.mxu0 0.0
    %2312 = vmatprep.subr.mxu0 0.0
    %2313 = vmatpush1.msra.mxu0 0.0
    %2314 = vmatprep.subr.mxu0 0.0
    %2315 = vmatpush1.msra.mxu0 0.0
    %2316 = vmatprep.subr.mxu0 0.0
    %2317 = vmatpush1.msra.mxu0 0.0
    %2318 = vmatprep.subr.mxu0 0.0
    %2319 = vmatpush1.msra.mxu0 0.0
    %2320 = vmatprep.subr.mxu0 0.0
    %2321 = vmatpush1.msra.mxu0 0.0
    %2322 = vmatprep.subr.mxu0 0.0
    %2323 = vmatpush1.msra.mxu0 0.0
    %2324 = vmatprep.subr.mxu0 0.0
    %2325 = vmatpush1.msra.mxu0 0.0
    %2326 = vmatprep.subr.mxu0 0.0
    %2327 = vmatpush1.msra.mxu0 0.0
    %2328 = vmatprep.subr.mxu0 0.0
    %2329 = vmatpush1.msra.mxu0 0.0
    %2330 = vmatprep.subr.mxu0 0.0
    %2331 = vmatpush1.msra.mxu0 0.0
    %2332 = vmatprep.subr.mxu0 0.0
    %2333 = vmatpush1.msra.mxu0 0.0
    %2334 = vmatprep.subr.mxu0 0.0
    %2335 = vmatpush1.msra.mxu0 0.0
    %2336 = vmatprep.subr.mxu0 0.0
    %2337 = vmatpush1.msra.mxu0 0.0
    %2338 = vmatprep.subr.mxu0 0.0
    %2339 = vmatpush1.msra.mxu0 0.0
    %2340 = vmatprep.subr.mxu0 0.0
    %2341 = vmatpush1.msra.mxu0 0.0
    %2342 = vmatprep.subr.mxu0 0.0
    %2343 = vmatpush1.msra.mxu0 0.0
    %2344 = vmatprep.subr.mxu0 0.0
    %2345 = vmatpush1.msra.mxu0 0.0
    %2346 = vmatprep.subr.mxu0 0.0
    %2347 = vmatpush1.msra.mxu0 0.0
    %2348 = vmatprep.subr.mxu0 0.0
    %2349 = vmatpush1.msra.mxu0 0.0
    %2350 = vmatprep.subr.mxu0 0.0
    %2351 = vmatpush1.msra.mxu0 0.0
    %2352 = vmatprep.subr.mxu0 0.0
    %2353 = vmatpush1.msra.mxu0 0.0
    %2354 = vmatprep.subr.mxu0 0.0
    %2355 = vmatpush1.msra.mxu0 0.0
    %2356 = vmatprep.subr.mxu0 0.0
    %2357 = vmatpush1.msra.mxu0 0.0
    %2358 = vmatprep.mubr.f32.mxu0 0.0
    %2359 = vmatmul.mubr.f32.gmra.mrb[0].mxu0 %v2220
    %v2360 = vpop.f32.mrb[0].mxu0
    %v2361 = vadd.f32 %v188, %v2360
    %v2362 = vpop.f32.mrb[0].mxu0
    %2363 = vmatprep.mubr.f32.mxu0 0.0
    %2364 = vmatmul.mubr.f32.gmra.mrb[0].mxu0 %v2223
    %v2365 = vpop.f32.mrb[0].mxu0
    %v2366 = vadd.f32 %v188, %v2365
    %v2367 = vpop.f32.mrb[0].mxu0
    %2368 = vmatprep.mubr.f32.mxu0 0.0
    %2369 = vmatmul.mubr.f32.gmra.mrb[0].mxu0 %v2226
    %v2370 = vpop.f32.mrb[0].mxu0
    %v2371 = vadd.f32 %v188, %v2370
    %v2372 = vpop.f32.mrb[0].mxu0
    %2373 = vmatprep.mubr.f32.mxu0 0.0
    %2374 = vmatmul.mubr.f32.gmra.mrb[0].mxu0 %v2229
    %v2375 = vpop.f32.mrb[0].mxu0
    %v2376 = vadd.f32 %v188, %v2375
    %v2377 = vpop.f32.mrb[0].mxu0
    %2378 = vmatprep.mubr.f32.mxu0 0.0
    %2379 = vmatmul.mubr.f32.gmra.mrb[0].mxu0 %v2232
    %v2380 = vpop.f32.mrb[0].mxu0
    %v2381 = vadd.f32 %v188, %v2380
    %v2382 = vpop.f32.mrb[0].mxu0
    %2383 = vmatprep.mubr.f32.mxu0 0.0
    %2384 = vmatmul.mubr.f32.gmra.mrb[0].mxu0 %v2235
    %v2385 = vpop.f32.mrb[0].mxu0
    %v2386 = vadd.f32 %v188, %v2385
    %v2387 = vpop.f32.mrb[0].mxu0
    %2388 = vmatprep.mubr.f32.mxu0 0.0
    %2389 = vmatmul.mubr.f32.gmra.mrb[0].mxu0 %v2238
    %v2390 = vpop.f32.mrb[0].mxu0
    %v2391 = vadd.f32 %v188, %v2390
    %v2392 = vpop.f32.mrb[0].mxu0
    %2393 = vmatprep.mubr.f32.mxu0 0.0
    %2394 = vmatmul.mubr.f32.gmra.mrb[0].mxu0 %v2241
    %v2395 = vpop.f32.mrb[0].mxu0
    %v2396 = vadd.f32 %v188, %v2395
    %v2397 = vpop.f32.mrb[0].mxu0
    %2398 = vmatprep.mubr.f32.mxu0 0.0
    %2399 = vmatmul.mubr.f32.gmra.mrb[0].mxu0 %v2244
    %v2400 = vpop.f32.mrb[0].mxu0
    %v2401 = vadd.f32 %v188, %v2400
    %v2402 = vpop.f32.mrb[0].mxu0
    %2403 = vmatprep.mubr.f32.mxu0 0.0
    %2404 = vmatmul.mubr.f32.gmra.mrb[0].mxu0 %v2247
    %v2405 = vpop.f32.mrb[0].mxu0
    %v2406 = vadd.f32 %v188, %v2405
    %v2407 = vpop.f32.mrb[0].mxu0
    %2408 = vmatprep.mubr.f32.mxu0 0.0
    %2409 = vmatmul.mubr.f32.gmra.mrb[0].mxu0 %v2250
    %v2410 = vpop.f32.mrb[0].mxu0
    %v2411 = vadd.f32 %v188, %v2410
    %v2412 = vpop.f32.mrb[0].mxu0
    %2413 = vmatprep.mubr.f32.mxu0 0.0
    %2414 = vmatmul.mubr.f32.gmra.mrb[0].mxu0 %v2253
    %v2415 = vpop.f32.mrb[0].mxu0
    %v2416 = vadd.f32 %v188, %v2415
    %v2417 = vpop.f32.mrb[0].mxu0
    %2418 = vmatprep.mubr.f32.mxu0 0.0
    %2419 = vmatmul.mubr.f32.gmra.mrb[0].mxu0 %v2256
    %v2420 = vpop.f32.mrb[0].mxu0
    %v2421 = vadd.f32 %v188, %v2420
    %v2422 = vpop.f32.mrb[0].mxu0
    %2423 = vmatprep.mubr.f32.mxu0 0.0
    %2424 = vmatmul.mubr.f32.gmra.mrb[0].mxu0 %v2259
    %v2425 = vpop.f32.mrb[0].mxu0
    %v2426 = vadd.f32 %v188, %v2425
    %v2427 = vpop.f32.mrb[0].mxu0
    %2428 = vmatprep.mubr.f32.mxu0 0.0
    %2429 = vmatmul.mubr.f32.gmra.mrb[0].mxu0 %v2262
    %v2430 = vpop.f32.mrb[0].mxu0
    %v2431 = vadd.f32 %v188, %v2430
    %v2432 = vpop.f32.mrb[0].mxu0
    %2433 = vmatprep.mubr.f32.mxu0 0.0
    %2434 = vmatmul.mubr.f32.gmra.mrb[0].mxu0 %v2265
    %v2435 = vpop.f32.mrb[0].mxu0
    %v2436 = vadd.f32 %v188, %v2435
    %v2437 = vpop.f32.mrb[0].mxu0
    %2438 = vmatprep.mubr.f32.mxu0 0.0
    %2439 = vmatmul.mubr.f32.gmra.mrb[0].mxu0 %v2268
    %v2440 = vpop.f32.mrb[0].mxu0
    %v2441 = vadd.f32 %v188, %v2440
    %v2442 = vpop.f32.mrb[0].mxu0
    %2443 = vmatprep.mubr.f32.mxu0 0.0
    %2444 = vmatmul.mubr.f32.gmra.mrb[0].mxu0 %v2271
    %v2445 = vpop.f32.mrb[0].mxu0
    %v2446 = vadd.f32 %v188, %v2445
    %v2447 = vpop.f32.mrb[0].mxu0
    %2448 = vmatprep.mubr.f32.mxu0 0.0
    %2449 = vmatmul.mubr.f32.gmra.mrb[0].mxu0 %v2274
    %v2450 = vpop.f32.mrb[0].mxu0
    %v2451 = vadd.f32 %v188, %v2450
    %v2452 = vpop.f32.mrb[0].mxu0
    %2453 = vmatprep.mubr.f32.mxu0 0.0
    %2454 = vmatmul.mubr.f32.gmra.mrb[0].mxu0 %v2277
    %v2455 = vpop.f32.mrb[0].mxu0
    %v2456 = vadd.f32 %v188, %v2455
    %v2457 = vpop.f32.mrb[0].mxu0
    %2458 = vmatprep.mubr.f32.mxu0 0.0
    %2459 = vmatmul.mubr.f32.gmra.mrb[0].mxu0 %v2280
    %v2460 = vpop.f32.mrb[0].mxu0
    %v2461 = vadd.f32 %v188, %v2460
    %v2462 = vpop.f32.mrb[0].mxu0
    %2463 = vmatprep.mubr.f32.mxu0 0.0
    %2464 = vmatmul.mubr.f32.gmra.mrb[0].mxu0 %v2283
    %v2465 = vpop.f32.mrb[0].mxu0
    %v2466 = vadd.f32 %v188, %v2465
    %v2467 = vpop.f32.mrb[0].mxu0
    %2468 = vmatprep.mubr.f32.mxu0 0.0
    %2469 = vmatmul.mubr.f32.gmra.mrb[0].mxu0 %v2286
    %v2470 = vpop.f32.mrb[0].mxu0
    %v2471 = vadd.f32 %v188, %v2470
    %v2472 = vpop.f32.mrb[0].mxu0
    %2473 = vmatprep.mubr.f32.mxu0 0.0
    %2474 = vmatmul.mubr.f32.gmra.mrb[0].mxu0 %v2289
    %v2475 = vpop.f32.mrb[0].mxu0
    %v2476 = vadd.f32 %v188, %v2475
    %v2477 = vpop.f32.mrb[0].mxu0
    %2478 = vmatprep.mubr.f32.mxu0 0.0
    %2479 = vmatmul.mubr.f32.gmra.mrb[0].mxu0 %v2292
    %v2480 = vpop.f32.mrb[0].mxu0
    %v2481 = vadd.f32 %v188, %v2480
    %v2482 = vpop.f32.mrb[0].mxu0
    %2483 = vdwg.mxu0
    %v2484 = vmax.f32 %v2361, 0.0
    %v2485 = vmax.f32 %v2366, 0.0
    %v2486 = vmax.f32 %v2371, 0.0
    %v2487 = vmax.f32 %v2376, 0.0
    %v2488 = vmax.f32 %v2381, 0.0
    %v2489 = vmax.f32 %v2386, 0.0
    %v2490 = vmax.f32 %v2391, 0.0
    %v2491 = vmax.f32 %v2396, 0.0
    %v2492 = vmax.f32 %v2401, 0.0
    %v2493 = vmax.f32 %v2406, 0.0
    %v2494 = vmax.f32 %v2411, 0.0
    %v2495 = vmax.f32 %v2416, 0.0
    %v2496 = vmax.f32 %v2421, 0.0
    %v2497 = vmax.f32 %v2426, 0.0
    %v2498 = vmax.f32 %v2431, 0.0
    %v2499 = vmax.f32 %v2436, 0.0
    %v2500 = vmax.f32 %v2441, 0.0
    %v2501 = vmax.f32 %v2446, 0.0
    %v2502 = vmax.f32 %v2451, 0.0
    %v2503 = vmax.f32 %v2456, 0.0
    %v2504 = vmax.f32 %v2461, 0.0
    %v2505 = vmax.f32 %v2466, 0.0
    %v2506 = vmax.f32 %v2471, 0.0
    %v2507 = vmax.f32 %v2476, 0.0
    %v2508 = vmax.f32 %v2481, 0.0
    %2509 = vst.msk [vmem:[#allocation2] sm:$0xff] %vm485, %v2484
    %2510 = vst.msk [vmem:[#allocation2 + $0x8] sm:$0xff] %vm485, %v2485
    %2511 = vst.msk [vmem:[#allocation2 + $0x10] sm:$0xff] %vm485, %v2486
    %2512 = vst.msk [vmem:[#allocation2 + $0x18] sm:$0xff] %vm485, %v2487
    %2513 = vst.msk [vmem:[#allocation2 + $0x20] sm:$0xff] %vm485, %v2488
    %2514 = vst.msk [vmem:[#allocation2 + $0x28] sm:$0xff] %vm485, %v2489
    %2515 = vst.msk [vmem:[#allocation2 + $0x30] sm:$0xff] %vm485, %v2490
    %2516 = vst.msk [vmem:[#allocation2 + $0x38] sm:$0xff] %vm485, %v2491
    %2517 = vst.msk [vmem:[#allocation2 + $0x40] sm:$0xff] %vm485, %v2492
    %2518 = vst.msk [vmem:[#allocation2 + $0x48] sm:$0xff] %vm485, %v2493
    %2519 = vst.msk [vmem:[#allocation2 + $0x50] sm:$0xff] %vm485, %v2494
    %2520 = vst.msk [vmem:[#allocation2 + $0x58] sm:$0xff] %vm485, %v2495
    %2521 = vst.msk [vmem:[#allocation2 + $0x60] sm:$0xff] %vm485, %v2496
    %2522 = vst.msk [vmem:[#allocation2 + $0x68] sm:$0xff] %vm485, %v2497
    %2523 = vst.msk [vmem:[#allocation2 + $0x70] sm:$0xff] %vm485, %v2498
    %2524 = vst.msk [vmem:[#allocation2 + $0x78] sm:$0xff] %vm485, %v2499
    %2525 = vst.msk [vmem:[#allocation2 + $0x80] sm:$0xff] %vm485, %v2500
    %2526 = vst.msk [vmem:[#allocation2 + $0x88] sm:$0xff] %vm485, %v2501
    %2527 = vst.msk [vmem:[#allocation2 + $0x90] sm:$0xff] %vm485, %v2502
    %2528 = vst.msk [vmem:[#allocation2 + $0x98] sm:$0xff] %vm485, %v2503
    %2529 = vst.msk [vmem:[#allocation2 + $0xa0] sm:$0xff] %vm485, %v2504
    %2530 = vst.msk [vmem:[#allocation2 + $0xa8] sm:$0xff] %vm485, %v2505
    %2531 = vst.msk [vmem:[#allocation2 + $0xb0] sm:$0xff] %vm485, %v2506
    %2532 = vst.msk [vmem:[#allocation2 + $0xb8] sm:$0xff] %vm485, %v2507
    %2533 = vst.msk [vmem:[#allocation2 + $0xc0] sm:$0xff] %vm485, %v2508
    %v2534 = vld [vmem:[#allocation2] sm:$0xff]
    %v2535 = vld [vmem:[#allocation2 + $0x8] sm:$0xff]
    %v2536 = vld [vmem:[#allocation2 + $0x10] sm:$0xff]
    %v2537 = vld [vmem:[#allocation2 + $0x18] sm:$0xff]
    %v2538 = vld [vmem:[#allocation2 + $0x20] sm:$0xff]
    %v2539 = vld [vmem:[%s5] sm:$0xff]
    %v2540 = vld [vmem:[#allocation2 + $0x28] sm:$0xff]
    %v2541 = vld [vmem:[#allocation2 + $0x30] sm:$0xff]
    %v2542 = vld [vmem:[#allocation2 + $0x38] sm:$0xff]
    %v2543 = vld [vmem:[#allocation2 + $0x40] sm:$0xff]
    %v2544 = vld [vmem:[#allocation2 + $0x48] sm:$0xff]
    %v2545 = vld [vmem:[%s522] sm:$0xff]
    %v2547 = vsel %vm485, %v2540, 0
    %v2550 = vsel %vm485, %v2541, 0
    %v2553 = vsel %vm485, %v2542, 0
    %v2556 = vsel %vm485, %v2543, 0
    %v2559 = vsel %vm485, %v2544, 0
    %2561 = vmatprep.subr.mxu0 0.0
    %2562 = vmatpush1.msra.mxu0 %v2545
    %2563 = vmatprep.subr.mxu0 0.0
    %2564 = vmatpush1.msra.mxu0 0.0
    %2565 = vmatprep.subr.mxu0 0.0
    %2566 = vmatpush1.msra.mxu0 0.0
    %2567 = vmatprep.subr.mxu0 0.0
    %2568 = vmatpush1.msra.mxu0 0.0
    %2569 = vmatprep.subr.mxu0 0.0
    %2570 = vmatpush1.msra.mxu0 0.0
    %2571 = vmatprep.subr.mxu0 0.0
    %2572 = vmatpush1.msra.mxu0 0.0
    %2573 = vmatprep.subr.mxu0 0.0
    %2574 = vmatpush1.msra.mxu0 0.0
    %2575 = vmatprep.subr.mxu0 0.0
    %2576 = vmatpush1.msra.mxu0 0.0
    %2577 = vmatprep.subr.mxu0 0.0
    %2578 = vmatpush1.msra.mxu0 0.0
    %2579 = vmatprep.subr.mxu0 0.0
    %2580 = vmatpush1.msra.mxu0 0.0
    %2581 = vmatprep.subr.mxu0 0.0
    %2582 = vmatpush1.msra.mxu0 0.0
    %2583 = vmatprep.subr.mxu0 0.0
    %2584 = vmatpush1.msra.mxu0 0.0
    %2585 = vmatprep.subr.mxu0 0.0
    %2586 = vmatpush1.msra.mxu0 0.0
    %2587 = vmatprep.subr.mxu0 0.0
    %2588 = vmatpush1.msra.mxu0 0.0
    %2589 = vmatprep.subr.mxu0 0.0
    %2590 = vmatpush1.msra.mxu0 0.0
    %2591 = vmatprep.subr.mxu0 0.0
    %2592 = vmatpush1.msra.mxu0 0.0
    %2593 = vmatprep.subr.mxu0 0.0
    %2594 = vmatpush1.msra.mxu0 0.0
    %2595 = vmatprep.subr.mxu0 0.0
    %2596 = vmatpush1.msra.mxu0 0.0
    %2597 = vmatprep.subr.mxu0 0.0
    %2598 = vmatpush1.msra.mxu0 0.0
    %2599 = vmatprep.subr.mxu0 0.0
    %2600 = vmatpush1.msra.mxu0 0.0
    %2601 = vmatprep.subr.mxu0 0.0
    %2602 = vmatpush1.msra.mxu0 0.0
    %2603 = vmatprep.subr.mxu0 0.0
    %2604 = vmatpush1.msra.mxu0 0.0
    %2605 = vmatprep.subr.mxu0 0.0
    %2606 = vmatpush1.msra.mxu0 0.0
    %2607 = vmatprep.subr.mxu0 0.0
    %2608 = vmatpush1.msra.mxu0 0.0
    %2609 = vmatprep.subr.mxu0 0.0
    %2610 = vmatpush1.msra.mxu0 0.0
    %2611 = vmatprep.subr.mxu0 0.0
    %2612 = vmatpush1.msra.mxu0 0.0
    %2613 = vmatprep.subr.mxu0 0.0
    %2614 = vmatpush1.msra.mxu0 0.0
    %2615 = vmatprep.subr.mxu0 0.0
    %2616 = vmatpush1.msra.mxu0 0.0
    %2617 = vmatprep.subr.mxu0 0.0
    %2618 = vmatpush1.msra.mxu0 0.0
    %2619 = vmatprep.subr.mxu0 0.0
    %2620 = vmatpush1.msra.mxu0 0.0
    %2621 = vmatprep.subr.mxu0 0.0
    %2622 = vmatpush1.msra.mxu0 0.0
    %2623 = vmatprep.subr.mxu0 0.0
    %2624 = vmatpush1.msra.mxu0 0.0
    %2625 = vmatprep.mubr.f32.mxu0 0.0
    %2626 = vmatmul.mubr.f32.gmra.mrb[0].mxu0 %v2547
    %v2627 = vpop.f32.mrb[0].mxu0
    %v2628 = vadd.f32 0.0, %v2627
    %v2629 = vpop.f32.mrb[0].mxu0
    %2630 = vmatprep.mubr.f32.mxu0 0.0
    %2631 = vmatmul.mubr.f32.gmra.mrb[0].mxu0 %v2550
    %v2632 = vpop.f32.mrb[0].mxu0
    %v2633 = vadd.f32 0.0, %v2632
    %v2634 = vpop.f32.mrb[0].mxu0
    %2635 = vmatprep.mubr.f32.mxu0 0.0
    %2636 = vmatmul.mubr.f32.gmra.mrb[0].mxu0 %v2553
    %v2637 = vpop.f32.mrb[0].mxu0
    %v2638 = vadd.f32 0.0, %v2637
    %v2639 = vpop.f32.mrb[0].mxu0
    %2640 = vmatprep.mubr.f32.mxu0 0.0
    %2641 = vmatmul.mubr.f32.gmra.mrb[0].mxu0 %v2556
    %v2642 = vpop.f32.mrb[0].mxu0
    %v2643 = vadd.f32 0.0, %v2642
    %v2644 = vpop.f32.mrb[0].mxu0
    %2645 = vmatprep.mubr.f32.mxu0 0.0
    %2646 = vmatmul.mubr.f32.gmra.mrb[0].mxu0 %v2559
    %v2647 = vpop.f32.mrb[0].mxu0
    %v2648 = vadd.f32 0.0, %v2647
    %v2649 = vpop.f32.mrb[0].mxu0
    %2650 = vdwg.mxu0
    %v2652 = vsel %vm485, %v2534, 0
    %v2655 = vsel %vm485, %v2535, 0
    %v2658 = vsel %vm485, %v2536, 0
    %v2661 = vsel %vm485, %v2537, 0
    %v2664 = vsel %vm485, %v2538, 0
    %2666 = vmatprep.subr.mxu0 0.0
    %2667 = vmatpush1.msra.mxu0 %v2539
    %2668 = vmatprep.subr.mxu0 0.0
    %2669 = vmatpush1.msra.mxu0 0.0
    %2670 = vmatprep.subr.mxu0 0.0
    %2671 = vmatpush1.msra.mxu0 0.0
    %2672 = vmatprep.subr.mxu0 0.0
    %2673 = vmatpush1.msra.mxu0 0.0
    %2674 = vmatprep.subr.mxu0 0.0
    %2675 = vmatpush1.msra.mxu0 0.0
    %2676 = vmatprep.subr.mxu0 0.0
    %2677 = vmatpush1.msra.mxu0 0.0
    %2678 = vmatprep.subr.mxu0 0.0
    %2679 = vmatpush1.msra.mxu0 0.0
    %2680 = vmatprep.subr.mxu0 0.0
    %2681 = vmatpush1.msra.mxu0 0.0
    %2682 = vmatprep.subr.mxu0 0.0
    %2683 = vmatpush1.msra.mxu0 0.0
    %2684 = vmatprep.subr.mxu0 0.0
    %2685 = vmatpush1.msra.mxu0 0.0
    %2686 = vmatprep.subr.mxu0 0.0
    %2687 = vmatpush1.msra.mxu0 0.0
    %2688 = vmatprep.subr.mxu0 0.0
    %2689 = vmatpush1.msra.mxu0 0.0
    %2690 = vmatprep.subr.mxu0 0.0
    %2691 = vmatpush1.msra.mxu0 0.0
    %2692 = vmatprep.subr.mxu0 0.0
    %2693 = vmatpush1.msra.mxu0 0.0
    %2694 = vmatprep.subr.mxu0 0.0
    %2695 = vmatpush1.msra.mxu0 0.0
    %2696 = vmatprep.subr.mxu0 0.0
    %2697 = vmatpush1.msra.mxu0 0.0
    %2698 = vmatprep.subr.mxu0 0.0
    %2699 = vmatpush1.msra.mxu0 0.0
    %2700 = vmatprep.subr.mxu0 0.0
    %2701 = vmatpush1.msra.mxu0 0.0
    %2702 = vmatprep.subr.mxu0 0.0
    %2703 = vmatpush1.msra.mxu0 0.0
    %2704 = vmatprep.subr.mxu0 0.0
    %2705 = vmatpush1.msra.mxu0 0.0
    %2706 = vmatprep.subr.mxu0 0.0
    %2707 = vmatpush1.msra.mxu0 0.0
    %2708 = vmatprep.subr.mxu0 0.0
    %2709 = vmatpush1.msra.mxu0 0.0
    %2710 = vmatprep.subr.mxu0 0.0
    %2711 = vmatpush1.msra.mxu0 0.0
    %2712 = vmatprep.subr.mxu0 0.0
    %2713 = vmatpush1.msra.mxu0 0.0
    %2714 = vmatprep.subr.mxu0 0.0
    %2715 = vmatpush1.msra.mxu0 0.0
    %2716 = vmatprep.subr.mxu0 0.0
    %2717 = vmatpush1.msra.mxu0 0.0
    %2718 = vmatprep.subr.mxu0 0.0
    %2719 = vmatpush1.msra.mxu0 0.0
    %2720 = vmatprep.subr.mxu0 0.0
    %2721 = vmatpush1.msra.mxu0 0.0
    %2722 = vmatprep.subr.mxu0 0.0
    %2723 = vmatpush1.msra.mxu0 0.0
    %2724 = vmatprep.subr.mxu0 0.0
    %2725 = vmatpush1.msra.mxu0 0.0
    %2726 = vmatprep.subr.mxu0 0.0
    %2727 = vmatpush1.msra.mxu0 0.0
    %2728 = vmatprep.subr.mxu0 0.0
    %2729 = vmatpush1.msra.mxu0 0.0
    %2730 = vmatprep.mubr.f32.mxu0 0.0
    %2731 = vmatmul.mubr.f32.gmra.mrb[0].mxu0 %v2652
    %v2732 = vpop.f32.mrb[0].mxu0
    %v2733 = vadd.f32 %v2628, %v2732
    %v2734 = vpop.f32.mrb[0].mxu0
    %2735 = vmatprep.mubr.f32.mxu0 0.0
    %2736 = vmatmul.mubr.f32.gmra.mrb[0].mxu0 %v2655
    %v2737 = vpop.f32.mrb[0].mxu0
    %v2738 = vadd.f32 %v2633, %v2737
    %v2739 = vpop.f32.mrb[0].mxu0
    %2740 = vmatprep.mubr.f32.mxu0 0.0
    %2741 = vmatmul.mubr.f32.gmra.mrb[0].mxu0 %v2658
    %v2742 = vpop.f32.mrb[0].mxu0
    %v2743 = vadd.f32 %v2638, %v2742
    %v2744 = vpop.f32.mrb[0].mxu0
    %2745 = vmatprep.mubr.f32.mxu0 0.0
    %2746 = vmatmul.mubr.f32.gmra.mrb[0].mxu0 %v2661
    %v2747 = vpop.f32.mrb[0].mxu0
    %v2748 = vadd.f32 %v2643, %v2747
    %v2749 = vpop.f32.mrb[0].mxu0
    %2750 = vmatprep.mubr.f32.mxu0 0.0
    %2751 = vmatmul.mubr.f32.gmra.mrb[0].mxu0 %v2664
    %v2752 = vpop.f32.mrb[0].mxu0
    %v2753 = vadd.f32 %v2648, %v2752
    %v2754 = vpop.f32.mrb[0].mxu0
    %2755 = vdwg.mxu0
    %v2756 = vld [vmem:[#allocation2 + $0x50] sm:$0xff]
    %v2757 = vld [vmem:[#allocation2 + $0x58] sm:$0xff]
    %v2758 = vld [vmem:[#allocation2 + $0x60] sm:$0xff]
    %v2759 = vld [vmem:[#allocation2 + $0x68] sm:$0xff]
    %v2760 = vld [vmem:[#allocation2 + $0x70] sm:$0xff]
    %v2761 = vld [vmem:[%s739] sm:$0xff]
    %v2763 = vsel %vm485, %v2756, 0
    %v2766 = vsel %vm485, %v2757, 0
    %v2769 = vsel %vm485, %v2758, 0
    %v2772 = vsel %vm485, %v2759, 0
    %v2775 = vsel %vm485, %v2760, 0
    %2777 = vmatprep.subr.mxu0 0.0
    %2778 = vmatpush1.msra.mxu0 %v2761
    %2779 = vmatprep.subr.mxu0 0.0
    %2780 = vmatpush1.msra.mxu0 0.0
    %2781 = vmatprep.subr.mxu0 0.0
    %2782 = vmatpush1.msra.mxu0 0.0
    %2783 = vmatprep.subr.mxu0 0.0
    %2784 = vmatpush1.msra.mxu0 0.0
    %2785 = vmatprep.subr.mxu0 0.0
    %2786 = vmatpush1.msra.mxu0 0.0
    %2787 = vmatprep.subr.mxu0 0.0
    %2788 = vmatpush1.msra.mxu0 0.0
    %2789 = vmatprep.subr.mxu0 0.0
    %2790 = vmatpush1.msra.mxu0 0.0
    %2791 = vmatprep.subr.mxu0 0.0
    %2792 = vmatpush1.msra.mxu0 0.0
    %2793 = vmatprep.subr.mxu0 0.0
    %2794 = vmatpush1.msra.mxu0 0.0
    %2795 = vmatprep.subr.mxu0 0.0
    %2796 = vmatpush1.msra.mxu0 0.0
    %2797 = vmatprep.subr.mxu0 0.0
    %2798 = vmatpush1.msra.mxu0 0.0
    %2799 = vmatprep.subr.mxu0 0.0
    %2800 = vmatpush1.msra.mxu0 0.0
    %2801 = vmatprep.subr.mxu0 0.0
    %2802 = vmatpush1.msra.mxu0 0.0
    %2803 = vmatprep.subr.mxu0 0.0
    %2804 = vmatpush1.msra.mxu0 0.0
    %2805 = vmatprep.subr.mxu0 0.0
    %2806 = vmatpush1.msra.mxu0 0.0
    %2807 = vmatprep.subr.mxu0 0.0
    %2808 = vmatpush1.msra.mxu0 0.0
    %2809 = vmatprep.subr.mxu0 0.0
    %2810 = vmatpush1.msra.mxu0 0.0
    %2811 = vmatprep.subr.mxu0 0.0
    %2812 = vmatpush1.msra.mxu0 0.0
    %2813 = vmatprep.subr.mxu0 0.0
    %2814 = vmatpush1.msra.mxu0 0.0
    %2815 = vmatprep.subr.mxu0 0.0
    %2816 = vmatpush1.msra.mxu0 0.0
    %2817 = vmatprep.subr.mxu0 0.0
    %2818 = vmatpush1.msra.mxu0 0.0
    %2819 = vmatprep.subr.mxu0 0.0
    %2820 = vmatpush1.msra.mxu0 0.0
    %2821 = vmatprep.subr.mxu0 0.0
    %2822 = vmatpush1.msra.mxu0 0.0
    %2823 = vmatprep.subr.mxu0 0.0
    %2824 = vmatpush1.msra.mxu0 0.0
    %2825 = vmatprep.subr.mxu0 0.0
    %2826 = vmatpush1.msra.mxu0 0.0
    %2827 = vmatprep.subr.mxu0 0.0
    %2828 = vmatpush1.msra.mxu0 0.0
    %2829 = vmatprep.subr.mxu0 0.0
    %2830 = vmatpush1.msra.mxu0 0.0
    %2831 = vmatprep.subr.mxu0 0.0
    %2832 = vmatpush1.msra.mxu0 0.0
    %2833 = vmatprep.subr.mxu0 0.0
    %2834 = vmatpush1.msra.mxu0 0.0
    %2835 = vmatprep.subr.mxu0 0.0
    %2836 = vmatpush1.msra.mxu0 0.0
    %2837 = vmatprep.subr.mxu0 0.0
    %2838 = vmatpush1.msra.mxu0 0.0
    %2839 = vmatprep.subr.mxu0 0.0
    %2840 = vmatpush1.msra.mxu0 0.0
    %2841 = vmatprep.mubr.f32.mxu0 0.0
    %2842 = vmatmul.mubr.f32.gmra.mrb[0].mxu0 %v2763
    %v2843 = vpop.f32.mrb[0].mxu0
    %v2844 = vadd.f32 0.0, %v2843
    %v2845 = vpop.f32.mrb[0].mxu0
    %2846 = vmatprep.mubr.f32.mxu0 0.0
    %2847 = vmatmul.mubr.f32.gmra.mrb[0].mxu0 %v2766
    %v2848 = vpop.f32.mrb[0].mxu0
    %v2849 = vadd.f32 0.0, %v2848
    %v2850 = vpop.f32.mrb[0].mxu0
    %2851 = vmatprep.mubr.f32.mxu0 0.0
    %2852 = vmatmul.mubr.f32.gmra.mrb[0].mxu0 %v2769
    %v2853 = vpop.f32.mrb[0].mxu0
    %v2854 = vadd.f32 0.0, %v2853
    %v2855 = vpop.f32.mrb[0].mxu0
    %2856 = vmatprep.mubr.f32.mxu0 0.0
    %2857 = vmatmul.mubr.f32.gmra.mrb[0].mxu0 %v2772
    %v2858 = vpop.f32.mrb[0].mxu0
    %v2859 = vadd.f32 0.0, %v2858
    %v2860 = vpop.f32.mrb[0].mxu0
    %2861 = vmatprep.mubr.f32.mxu0 0.0
    %2862 = vmatmul.mubr.f32.gmra.mrb[0].mxu0 %v2775
    %v2863 = vpop.f32.mrb[0].mxu0
    %v2864 = vadd.f32 0.0, %v2863
    %v2865 = vpop.f32.mrb[0].mxu0
    %2866 = vdwg.mxu0
    %v2867 = vadd.f32 %v2733, %v2844
    %v2868 = vadd.f32 %v2738, %v2849
    %v2869 = vadd.f32 %v2743, %v2854
    %v2870 = vadd.f32 %v2748, %v2859
    %v2871 = vadd.f32 %v2753, %v2864
    %v2872 = vld [vmem:[#allocation2 + $0x78] sm:$0xff]
    %v2873 = vld [vmem:[#allocation2 + $0x80] sm:$0xff]
    %v2874 = vld [vmem:[#allocation2 + $0x88] sm:$0xff]
    %v2875 = vld [vmem:[#allocation2 + $0x90] sm:$0xff]
    %v2876 = vld [vmem:[#allocation2 + $0x98] sm:$0xff]
    %v2877 = vld [vmem:[%s856] sm:$0xff]
    %v2879 = vsel %vm485, %v2872, 0
    %v2882 = vsel %vm485, %v2873, 0
    %v2885 = vsel %vm485, %v2874, 0
    %v2888 = vsel %vm485, %v2875, 0
    %v2891 = vsel %vm485, %v2876, 0
    %2893 = vmatprep.subr.mxu0 0.0
    %2894 = vmatpush1.msra.mxu0 %v2877
    %2895 = vmatprep.subr.mxu0 0.0
    %2896 = vmatpush1.msra.mxu0 0.0
    %2897 = vmatprep.subr.mxu0 0.0
    %2898 = vmatpush1.msra.mxu0 0.0
    %2899 = vmatprep.subr.mxu0 0.0
    %2900 = vmatpush1.msra.mxu0 0.0
    %2901 = vmatprep.subr.mxu0 0.0
    %2902 = vmatpush1.msra.mxu0 0.0
    %2903 = vmatprep.subr.mxu0 0.0
    %2904 = vmatpush1.msra.mxu0 0.0
    %2905 = vmatprep.subr.mxu0 0.0
    %2906 = vmatpush1.msra.mxu0 0.0
    %2907 = vmatprep.subr.mxu0 0.0
    %2908 = vmatpush1.msra.mxu0 0.0
    %2909 = vmatprep.subr.mxu0 0.0
    %2910 = vmatpush1.msra.mxu0 0.0
    %2911 = vmatprep.subr.mxu0 0.0
    %2912 = vmatpush1.msra.mxu0 0.0
    %2913 = vmatprep.subr.mxu0 0.0
    %2914 = vmatpush1.msra.mxu0 0.0
    %2915 = vmatprep.subr.mxu0 0.0
    %2916 = vmatpush1.msra.mxu0 0.0
    %2917 = vmatprep.subr.mxu0 0.0
    %2918 = vmatpush1.msra.mxu0 0.0
    %2919 = vmatprep.subr.mxu0 0.0
    %2920 = vmatpush1.msra.mxu0 0.0
    %2921 = vmatprep.subr.mxu0 0.0
    %2922 = vmatpush1.msra.mxu0 0.0
    %2923 = vmatprep.subr.mxu0 0.0
    %2924 = vmatpush1.msra.mxu0 0.0
    %2925 = vmatprep.subr.mxu0 0.0
    %2926 = vmatpush1.msra.mxu0 0.0
    %2927 = vmatprep.subr.mxu0 0.0
    %2928 = vmatpush1.msra.mxu0 0.0
    %2929 = vmatprep.subr.mxu0 0.0
    %2930 = vmatpush1.msra.mxu0 0.0
    %2931 = vmatprep.subr.mxu0 0.0
    %2932 = vmatpush1.msra.mxu0 0.0
    %2933 = vmatprep.subr.mxu0 0.0
    %2934 = vmatpush1.msra.mxu0 0.0
    %2935 = vmatprep.subr.mxu0 0.0
    %2936 = vmatpush1.msra.mxu0 0.0
    %2937 = vmatprep.subr.mxu0 0.0
    %2938 = vmatpush1.msra.mxu0 0.0
    %2939 = vmatprep.subr.mxu0 0.0
    %2940 = vmatpush1.msra.mxu0 0.0
    %2941 = vmatprep.subr.mxu0 0.0
    %2942 = vmatpush1.msra.mxu0 0.0
    %2943 = vmatprep.subr.mxu0 0.0
    %2944 = vmatpush1.msra.mxu0 0.0
    %2945 = vmatprep.subr.mxu0 0.0
    %2946 = vmatpush1.msra.mxu0 0.0
    %2947 = vmatprep.subr.mxu0 0.0
    %2948 = vmatpush1.msra.mxu0 0.0
    %2949 = vmatprep.subr.mxu0 0.0
    %2950 = vmatpush1.msra.mxu0 0.0
    %2951 = vmatprep.subr.mxu0 0.0
    %2952 = vmatpush1.msra.mxu0 0.0
    %2953 = vmatprep.subr.mxu0 0.0
    %2954 = vmatpush1.msra.mxu0 0.0
    %2955 = vmatprep.subr.mxu0 0.0
    %2956 = vmatpush1.msra.mxu0 0.0
    %2957 = vmatprep.mubr.f32.mxu0 0.0
    %2958 = vmatmul.mubr.f32.gmra.mrb[0].mxu0 %v2879
    %v2959 = vpop.f32.mrb[0].mxu0
    %v2960 = vadd.f32 0.0, %v2959
    %v2961 = vpop.f32.mrb[0].mxu0
    %2962 = vmatprep.mubr.f32.mxu0 0.0
    %2963 = vmatmul.mubr.f32.gmra.mrb[0].mxu0 %v2882
    %v2964 = vpop.f32.mrb[0].mxu0
    %v2965 = vadd.f32 0.0, %v2964
    %v2966 = vpop.f32.mrb[0].mxu0
    %2967 = vmatprep.mubr.f32.mxu0 0.0
    %2968 = vmatmul.mubr.f32.gmra.mrb[0].mxu0 %v2885
    %v2969 = vpop.f32.mrb[0].mxu0
    %v2970 = vadd.f32 0.0, %v2969
    %v2971 = vpop.f32.mrb[0].mxu0
    %2972 = vmatprep.mubr.f32.mxu0 0.0
    %2973 = vmatmul.mubr.f32.gmra.mrb[0].mxu0 %v2888
    %v2974 = vpop.f32.mrb[0].mxu0
    %v2975 = vadd.f32 0.0, %v2974
    %v2976 = vpop.f32.mrb[0].mxu0
    %2977 = vmatprep.mubr.f32.mxu0 0.0
    %2978 = vmatmul.mubr.f32.gmra.mrb[0].mxu0 %v2891
    %v2979 = vpop.f32.mrb[0].mxu0
    %v2980 = vadd.f32 0.0, %v2979
    %v2981 = vpop.f32.mrb[0].mxu0
    %2982 = vdwg.mxu0
    %v2983 = vadd.f32 %v2867, %v2960
    %v2984 = vadd.f32 %v2868, %v2965
    %v2985 = vadd.f32 %v2869, %v2970
    %v2986 = vadd.f32 %v2870, %v2975
    %v2987 = vadd.f32 %v2871, %v2980
    %v2988 = vld [vmem:[#allocation2 + $0xa0] sm:$0xff]
    %v2989 = vld [vmem:[#allocation2 + $0xa8] sm:$0xff]
    %v2990 = vld [vmem:[#allocation2 + $0xb0] sm:$0xff]
    %v2991 = vld [vmem:[#allocation2 + $0xb8] sm:$0xff]
    %v2992 = vld [vmem:[#allocation2 + $0xc0] sm:$0xff]
    %v2993 = vld [vmem:[%s973] sm:$0xff]
    %v2995 = vsel %vm485, %v2988, 0
    %v2998 = vsel %vm485, %v2989, 0
    %v3001 = vsel %vm485, %v2990, 0
    %v3004 = vsel %vm485, %v2991, 0
    %v3007 = vsel %vm485, %v2992, 0
    %3009 = vmatprep.subr.mxu0 0.0
    %3010 = vmatpush1.msra.mxu0 %v2993
    %3011 = vmatprep.subr.mxu0 0.0
    %3012 = vmatpush1.msra.mxu0 0.0
    %3013 = vmatprep.subr.mxu0 0.0
    %3014 = vmatpush1.msra.mxu0 0.0
    %3015 = vmatprep.subr.mxu0 0.0
    %3016 = vmatpush1.msra.mxu0 0.0
    %3017 = vmatprep.subr.mxu0 0.0
    %3018 = vmatpush1.msra.mxu0 0.0
    %3019 = vmatprep.subr.mxu0 0.0
    %3020 = vmatpush1.msra.mxu0 0.0
    %3021 = vmatprep.subr.mxu0 0.0
    %3022 = vmatpush1.msra.mxu0 0.0
    %3023 = vmatprep.subr.mxu0 0.0
    %3024 = vmatpush1.msra.mxu0 0.0
    %3025 = vmatprep.subr.mxu0 0.0
    %3026 = vmatpush1.msra.mxu0 0.0
    %3027 = vmatprep.subr.mxu0 0.0
    %3028 = vmatpush1.msra.mxu0 0.0
    %3029 = vmatprep.subr.mxu0 0.0
    %3030 = vmatpush1.msra.mxu0 0.0
    %3031 = vmatprep.subr.mxu0 0.0
    %3032 = vmatpush1.msra.mxu0 0.0
    %3033 = vmatprep.subr.mxu0 0.0
    %3034 = vmatpush1.msra.mxu0 0.0
    %3035 = vmatprep.subr.mxu0 0.0
    %3036 = vmatpush1.msra.mxu0 0.0
    %3037 = vmatprep.subr.mxu0 0.0
    %3038 = vmatpush1.msra.mxu0 0.0
    %3039 = vmatprep.subr.mxu0 0.0
    %3040 = vmatpush1.msra.mxu0 0.0
    %3041 = vmatprep.subr.mxu0 0.0
    %3042 = vmatpush1.msra.mxu0 0.0
    %3043 = vmatprep.subr.mxu0 0.0
    %3044 = vmatpush1.msra.mxu0 0.0
    %3045 = vmatprep.subr.mxu0 0.0
    %3046 = vmatpush1.msra.mxu0 0.0
    %3047 = vmatprep.subr.mxu0 0.0
    %3048 = vmatpush1.msra.mxu0 0.0
    %3049 = vmatprep.subr.mxu0 0.0
    %3050 = vmatpush1.msra.mxu0 0.0
    %3051 = vmatprep.subr.mxu0 0.0
    %3052 = vmatpush1.msra.mxu0 0.0
    %3053 = vmatprep.subr.mxu0 0.0
    %3054 = vmatpush1.msra.mxu0 0.0
    %3055 = vmatprep.subr.mxu0 0.0
    %3056 = vmatpush1.msra.mxu0 0.0
    %3057 = vmatprep.subr.mxu0 0.0
    %3058 = vmatpush1.msra.mxu0 0.0
    %3059 = vmatprep.subr.mxu0 0.0
    %3060 = vmatpush1.msra.mxu0 0.0
    %3061 = vmatprep.subr.mxu0 0.0
    %3062 = vmatpush1.msra.mxu0 0.0
    %3063 = vmatprep.subr.mxu0 0.0
    %3064 = vmatpush1.msra.mxu0 0.0
    %3065 = vmatprep.subr.mxu0 0.0
    %3066 = vmatpush1.msra.mxu0 0.0
    %3067 = vmatprep.subr.mxu0 0.0
    %3068 = vmatpush1.msra.mxu0 0.0
    %3069 = vmatprep.subr.mxu0 0.0
    %3070 = vmatpush1.msra.mxu0 0.0
    %3071 = vmatprep.subr.mxu0 0.0
    %3072 = vmatpush1.msra.mxu0 0.0
    %3073 = vmatprep.mubr.f32.mxu0 0.0
    %3074 = vmatmul.mubr.f32.gmra.mrb[0].mxu0 %v2995
    %v3075 = vpop.f32.mrb[0].mxu0
    %v3076 = vadd.f32 0.0, %v3075
    %v3077 = vpop.f32.mrb[0].mxu0
    %3078 = vmatprep.mubr.f32.mxu0 0.0
    %3079 = vmatmul.mubr.f32.gmra.mrb[0].mxu0 %v2998
    %v3080 = vpop.f32.mrb[0].mxu0
    %v3081 = vadd.f32 0.0, %v3080
    %v3082 = vpop.f32.mrb[0].mxu0
    %3083 = vmatprep.mubr.f32.mxu0 0.0
    %3084 = vmatmul.mubr.f32.gmra.mrb[0].mxu0 %v3001
    %v3085 = vpop.f32.mrb[0].mxu0
    %v3086 = vadd.f32 0.0, %v3085
    %v3087 = vpop.f32.mrb[0].mxu0
    %3088 = vmatprep.mubr.f32.mxu0 0.0
    %3089 = vmatmul.mubr.f32.gmra.mrb[0].mxu0 %v3004
    %v3090 = vpop.f32.mrb[0].mxu0
    %v3091 = vadd.f32 0.0, %v3090
    %v3092 = vpop.f32.mrb[0].mxu0
    %3093 = vmatprep.mubr.f32.mxu0 0.0
    %3094 = vmatmul.mubr.f32.gmra.mrb[0].mxu0 %v3007
    %v3095 = vpop.f32.mrb[0].mxu0
    %v3096 = vadd.f32 0.0, %v3095
    %v3097 = vpop.f32.mrb[0].mxu0
    %3098 = vdwg.mxu0
    %v3099 = vadd.f32 %v2983, %v3076
    %v3100 = vadd.f32 %v2984, %v3081
    %v3101 = vadd.f32 %v2985, %v3086
    %v3102 = vadd.f32 %v2986, %v3091
    %v3103 = vadd.f32 %v2987, %v3096
    %v3104 = vadd.f32 %v3099, %v1089
    %v3105 = vadd.f32 %v3100, %v1089
    %v3106 = vadd.f32 %v3101, %v1089
    %v3107 = vadd.f32 %v3102, %v1089
    %v3108 = vadd.f32 %v3103, %v1089
    %v3109 = vmax.f32 %v3104, 0.0
    %v3110 = vmax.f32 %v3105, 0.0
    %v3111 = vmax.f32 %v3106, 0.0
    %v3112 = vmax.f32 %v3107, 0.0
    %v3113 = vmax.f32 %v3108, 0.0
    %3114 = vst.msk [vmem:[#allocation3] sm:$0xff] %vm1101, %v3109
    %3115 = vst.msk [vmem:[#allocation3 + $0x8] sm:$0xff] %vm1101, %v3110
    %3116 = vst.msk [vmem:[#allocation3 + $0x10] sm:$0xff] %vm1101, %v3111
    %3117 = vst.msk [vmem:[#allocation3 + $0x18] sm:$0xff] %vm1101, %v3112
    %3118 = vst.msk [vmem:[#allocation3 + $0x20] sm:$0xff] %vm1101, %v3113
    %v3119 = vld [vmem:[#allocation3] sm:$0xff]
    %v3120 = vld [vmem:[%s7] sm:$0xff]
    %v3121 = vld [vmem:[%s7 + $0x8] sm:$0xff]
    %v3122 = vld [vmem:[#allocation3 + $0x8] sm:$0xff]
    %v3123 = vld [vmem:[%s1111] sm:$0xff]
    %v3124 = vld [vmem:[%s1111 + $0x8] sm:$0xff]
    %v3126 = vsel %vm1101, %v3122, 0
    %3128 = vmatprep.subr.mxu0 0.0
    %3129 = vmatpush1.msra.mxu0 %v3123
    %3130 = vmatprep.subr.mxu0 0.0
    %3131 = vmatpush1.msra.mxu0 %v3124
    %3132 = vmatprep.subr.mxu0 0.0
    %3133 = vmatpush1.msra.mxu0 0.0
    %3134 = vmatprep.subr.mxu0 0.0
    %3135 = vmatpush1.msra.mxu0 0.0
    %3136 = vmatprep.subr.mxu0 0.0
    %3137 = vmatpush1.msra.mxu0 0.0
    %3138 = vmatprep.subr.mxu0 0.0
    %3139 = vmatpush1.msra.mxu0 0.0
    %3140 = vmatprep.subr.mxu0 0.0
    %3141 = vmatpush1.msra.mxu0 0.0
    %3142 = vmatprep.subr.mxu0 0.0
    %3143 = vmatpush1.msra.mxu0 0.0
    %3144 = vmatprep.subr.mxu0 0.0
    %3145 = vmatpush1.msra.mxu0 0.0
    %3146 = vmatprep.subr.mxu0 0.0
    %3147 = vmatpush1.msra.mxu0 0.0
    %3148 = vmatprep.subr.mxu0 0.0
    %3149 = vmatpush1.msra.mxu0 0.0
    %3150 = vmatprep.subr.mxu0 0.0
    %3151 = vmatpush1.msra.mxu0 0.0
    %3152 = vmatprep.subr.mxu0 0.0
    %3153 = vmatpush1.msra.mxu0 0.0
    %3154 = vmatprep.subr.mxu0 0.0
    %3155 = vmatpush1.msra.mxu0 0.0
    %3156 = vmatprep.subr.mxu0 0.0
    %3157 = vmatpush1.msra.mxu0 0.0
    %3158 = vmatprep.subr.mxu0 0.0
    %3159 = vmatpush1.msra.mxu0 0.0
    %3160 = vmatprep.subr.mxu0 0.0
    %3161 = vmatpush1.msra.mxu0 0.0
    %3162 = vmatprep.subr.mxu0 0.0
    %3163 = vmatpush1.msra.mxu0 0.0
    %3164 = vmatprep.subr.mxu0 0.0
    %3165 = vmatpush1.msra.mxu0 0.0
    %3166 = vmatprep.subr.mxu0 0.0
    %3167 = vmatpush1.msra.mxu0 0.0
    %3168 = vmatprep.subr.mxu0 0.0
    %3169 = vmatpush1.msra.mxu0 0.0
    %3170 = vmatprep.subr.mxu0 0.0
    %3171 = vmatpush1.msra.mxu0 0.0
    %3172 = vmatprep.subr.mxu0 0.0
    %3173 = vmatpush1.msra.mxu0 0.0
    %3174 = vmatprep.subr.mxu0 0.0
    %3175 = vmatpush1.msra.mxu0 0.0
    %3176 = vmatprep.subr.mxu0 0.0
    %3177 = vmatpush1.msra.mxu0 0.0
    %3178 = vmatprep.subr.mxu0 0.0
    %3179 = vmatpush1.msra.mxu0 0.0
    %3180 = vmatprep.subr.mxu0 0.0
    %3181 = vmatpush1.msra.mxu0 0.0
    %3182 = vmatprep.subr.mxu0 0.0
    %3183 = vmatpush1.msra.mxu0 0.0
    %3184 = vmatprep.subr.mxu0 0.0
    %3185 = vmatpush1.msra.mxu0 0.0
    %3186 = vmatprep.subr.mxu0 0.0
    %3187 = vmatpush1.msra.mxu0 0.0
    %3188 = vmatprep.subr.mxu0 0.0
    %3189 = vmatpush1.msra.mxu0 0.0
    %3190 = vmatprep.subr.mxu0 0.0
    %3191 = vmatpush1.msra.mxu0 0.0
    %3192 = vmatprep.mubr.f32.mxu0 0.0
    %3193 = vmatmul.mubr.f32.gmra.mrb[0].mxu0 %v3126
    %v3194 = vpop.f32.mrb[0].mxu0
    %v3195 = vadd.f32 0.0, %v3194
    %v3196 = vpop.f32.mrb[0].mxu0
    %3197 = vdwg.mxu0
    %v3199 = vsel %vm1101, %v3119, 0
    %3201 = vmatprep.subr.mxu0 0.0
    %3202 = vmatpush1.msra.mxu0 %v3120
    %3203 = vmatprep.subr.mxu0 0.0
    %3204 = vmatpush1.msra.mxu0 %v3121
    %3205 = vmatprep.subr.mxu0 0.0
    %3206 = vmatpush1.msra.mxu0 0.0
    %3207 = vmatprep.subr.mxu0 0.0
    %3208 = vmatpush1.msra.mxu0 0.0
    %3209 = vmatprep.subr.mxu0 0.0
    %3210 = vmatpush1.msra.mxu0 0.0
    %3211 = vmatprep.subr.mxu0 0.0
    %3212 = vmatpush1.msra.mxu0 0.0
    %3213 = vmatprep.subr.mxu0 0.0
    %3214 = vmatpush1.msra.mxu0 0.0
    %3215 = vmatprep.subr.mxu0 0.0
    %3216 = vmatpush1.msra.mxu0 0.0
    %3217 = vmatprep.subr.mxu0 0.0
    %3218 = vmatpush1.msra.mxu0 0.0
    %3219 = vmatprep.subr.mxu0 0.0
    %3220 = vmatpush1.msra.mxu0 0.0
    %3221 = vmatprep.subr.mxu0 0.0
    %3222 = vmatpush1.msra.mxu0 0.0
    %3223 = vmatprep.subr.mxu0 0.0
    %3224 = vmatpush1.msra.mxu0 0.0
    %3225 = vmatprep.subr.mxu0 0.0
    %3226 = vmatpush1.msra.mxu0 0.0
    %3227 = vmatprep.subr.mxu0 0.0
    %3228 = vmatpush1.msra.mxu0 0.0
    %3229 = vmatprep.subr.mxu0 0.0
    %3230 = vmatpush1.msra.mxu0 0.0
    %3231 = vmatprep.subr.mxu0 0.0
    %3232 = vmatpush1.msra.mxu0 0.0
    %3233 = vmatprep.subr.mxu0 0.0
    %3234 = vmatpush1.msra.mxu0 0.0
    %3235 = vmatprep.subr.mxu0 0.0
    %3236 = vmatpush1.msra.mxu0 0.0
    %3237 = vmatprep.subr.mxu0 0.0
    %3238 = vmatpush1.msra.mxu0 0.0
    %3239 = vmatprep.subr.mxu0 0.0
    %3240 = vmatpush1.msra.mxu0 0.0
    %3241 = vmatprep.subr.mxu0 0.0
    %3242 = vmatpush1.msra.mxu0 0.0
    %3243 = vmatprep.subr.mxu0 0.0
    %3244 = vmatpush1.msra.mxu0 0.0
    %3245 = vmatprep.subr.mxu0 0.0
    %3246 = vmatpush1.msra.mxu0 0.0
    %3247 = vmatprep.subr.mxu0 0.0
    %3248 = vmatpush1.msra.mxu0 0.0
    %3249 = vmatprep.subr.mxu0 0.0
    %3250 = vmatpush1.msra.mxu0 0.0
    %3251 = vmatprep.subr.mxu0 0.0
    %3252 = vmatpush1.msra.mxu0 0.0
    %3253 = vmatprep.subr.mxu0 0.0
    %3254 = vmatpush1.msra.mxu0 0.0
    %3255 = vmatprep.subr.mxu0 0.0
    %3256 = vmatpush1.msra.mxu0 0.0
    %3257 = vmatprep.subr.mxu0 0.0
    %3258 = vmatpush1.msra.mxu0 0.0
    %3259 = vmatprep.subr.mxu0 0.0
    %3260 = vmatpush1.msra.mxu0 0.0
    %3261 = vmatprep.subr.mxu0 0.0
    %3262 = vmatpush1.msra.mxu0 0.0
    %3263 = vmatprep.subr.mxu0 0.0
    %3264 = vmatpush1.msra.mxu0 0.0
    %3265 = vmatprep.mubr.f32.mxu0 0.0
    %3266 = vmatmul.mubr.f32.gmra.mrb[0].mxu0 %v3199
    %v3267 = vpop.f32.mrb[0].mxu0
    %v3268 = vadd.f32 %v3195, %v3267
    %v3269 = vpop.f32.mrb[0].mxu0
    %3270 = vdwg.mxu0
    %v3271 = vld [vmem:[#allocation3 + $0x10] sm:$0xff]
    %v3272 = vld [vmem:[%s1261] sm:$0xff]
    %v3273 = vld [vmem:[%s1261 + $0x8] sm:$0xff]
    %v3275 = vsel %vm1101, %v3271, 0
    %3277 = vmatprep.subr.mxu0 0.0
    %3278 = vmatpush1.msra.mxu0 %v3272
    %3279 = vmatprep.subr.mxu0 0.0
    %3280 = vmatpush1.msra.mxu0 %v3273
    %3281 = vmatprep.subr.mxu0 0.0
    %3282 = vmatpush1.msra.mxu0 0.0
    %3283 = vmatprep.subr.mxu0 0.0
    %3284 = vmatpush1.msra.mxu0 0.0
    %3285 = vmatprep.subr.mxu0 0.0
    %3286 = vmatpush1.msra.mxu0 0.0
    %3287 = vmatprep.subr.mxu0 0.0
    %3288 = vmatpush1.msra.mxu0 0.0
    %3289 = vmatprep.subr.mxu0 0.0
    %3290 = vmatpush1.msra.mxu0 0.0
    %3291 = vmatprep.subr.mxu0 0.0
    %3292 = vmatpush1.msra.mxu0 0.0
    %3293 = vmatprep.subr.mxu0 0.0
    %3294 = vmatpush1.msra.mxu0 0.0
    %3295 = vmatprep.subr.mxu0 0.0
    %3296 = vmatpush1.msra.mxu0 0.0
    %3297 = vmatprep.subr.mxu0 0.0
    %3298 = vmatpush1.msra.mxu0 0.0
    %3299 = vmatprep.subr.mxu0 0.0
    %3300 = vmatpush1.msra.mxu0 0.0
    %3301 = vmatprep.subr.mxu0 0.0
    %3302 = vmatpush1.msra.mxu0 0.0
    %3303 = vmatprep.subr.mxu0 0.0
    %3304 = vmatpush1.msra.mxu0 0.0
    %3305 = vmatprep.subr.mxu0 0.0
    %3306 = vmatpush1.msra.mxu0 0.0
    %3307 = vmatprep.subr.mxu0 0.0
    %3308 = vmatpush1.msra.mxu0 0.0
    %3309 = vmatprep.subr.mxu0 0.0
    %3310 = vmatpush1.msra.mxu0 0.0
    %3311 = vmatprep.subr.mxu0 0.0
    %3312 = vmatpush1.msra.mxu0 0.0
    %3313 = vmatprep.subr.mxu0 0.0
    %3314 = vmatpush1.msra.mxu0 0.0
    %3315 = vmatprep.subr.mxu0 0.0
    %3316 = vmatpush1.msra.mxu0 0.0
    %3317 = vmatprep.subr.mxu0 0.0
    %3318 = vmatpush1.msra.mxu0 0.0
    %3319 = vmatprep.subr.mxu0 0.0
    %3320 = vmatpush1.msra.mxu0 0.0
    %3321 = vmatprep.subr.mxu0 0.0
    %3322 = vmatpush1.msra.mxu0 0.0
    %3323 = vmatprep.subr.mxu0 0.0
    %3324 = vmatpush1.msra.mxu0 0.0
    %3325 = vmatprep.subr.mxu0 0.0
    %3326 = vmatpush1.msra.mxu0 0.0
    %3327 = vmatprep.subr.mxu0 0.0
    %3328 = vmatpush1.msra.mxu0 0.0
    %3329 = vmatprep.subr.mxu0 0.0
    %3330 = vmatpush1.msra.mxu0 0.0
    %3331 = vmatprep.subr.mxu0 0.0
    %3332 = vmatpush1.msra.mxu0 0.0
    %3333 = vmatprep.subr.mxu0 0.0
    %3334 = vmatpush1.msra.mxu0 0.0
    %3335 = vmatprep.subr.mxu0 0.0
    %3336 = vmatpush1.msra.mxu0 0.0
    %3337 = vmatprep.subr.mxu0 0.0
    %3338 = vmatpush1.msra.mxu0 0.0
    %3339 = vmatprep.subr.mxu0 0.0
    %3340 = vmatpush1.msra.mxu0 0.0
    %3341 = vmatprep.mubr.f32.mxu0 0.0
    %3342 = vmatmul.mubr.f32.gmra.mrb[0].mxu0 %v3275
    %v3343 = vpop.f32.mrb[0].mxu0
    %v3344 = vadd.f32 0.0, %v3343
    %v3345 = vpop.f32.mrb[0].mxu0
    %3346 = vdwg.mxu0
    %v3347 = vadd.f32 %v3268, %v3344
    %v3348 = vld [vmem:[#allocation3 + $0x18] sm:$0xff]
    %v3349 = vld [vmem:[%s1339] sm:$0xff]
    %v3350 = vld [vmem:[%s1339 + $0x8] sm:$0xff]
    %v3352 = vsel %vm1101, %v3348, 0
    %3354 = vmatprep.subr.mxu0 0.0
    %3355 = vmatpush1.msra.mxu0 %v3349
    %3356 = vmatprep.subr.mxu0 0.0
    %3357 = vmatpush1.msra.mxu0 %v3350
    %3358 = vmatprep.subr.mxu0 0.0
    %3359 = vmatpush1.msra.mxu0 0.0
    %3360 = vmatprep.subr.mxu0 0.0
    %3361 = vmatpush1.msra.mxu0 0.0
    %3362 = vmatprep.subr.mxu0 0.0
    %3363 = vmatpush1.msra.mxu0 0.0
    %3364 = vmatprep.subr.mxu0 0.0
    %3365 = vmatpush1.msra.mxu0 0.0
    %3366 = vmatprep.subr.mxu0 0.0
    %3367 = vmatpush1.msra.mxu0 0.0
    %3368 = vmatprep.subr.mxu0 0.0
    %3369 = vmatpush1.msra.mxu0 0.0
    %3370 = vmatprep.subr.mxu0 0.0
    %3371 = vmatpush1.msra.mxu0 0.0
    %3372 = vmatprep.subr.mxu0 0.0
    %3373 = vmatpush1.msra.mxu0 0.0
    %3374 = vmatprep.subr.mxu0 0.0
    %3375 = vmatpush1.msra.mxu0 0.0
    %3376 = vmatprep.subr.mxu0 0.0
    %3377 = vmatpush1.msra.mxu0 0.0
    %3378 = vmatprep.subr.mxu0 0.0
    %3379 = vmatpush1.msra.mxu0 0.0
    %3380 = vmatprep.subr.mxu0 0.0
    %3381 = vmatpush1.msra.mxu0 0.0
    %3382 = vmatprep.subr.mxu0 0.0
    %3383 = vmatpush1.msra.mxu0 0.0
    %3384 = vmatprep.subr.mxu0 0.0
    %3385 = vmatpush1.msra.mxu0 0.0
    %3386 = vmatprep.subr.mxu0 0.0
    %3387 = vmatpush1.msra.mxu0 0.0
    %3388 = vmatprep.subr.mxu0 0.0
    %3389 = vmatpush1.msra.mxu0 0.0
    %3390 = vmatprep.subr.mxu0 0.0
    %3391 = vmatpush1.msra.mxu0 0.0
    %3392 = vmatprep.subr.mxu0 0.0
    %3393 = vmatpush1.msra.mxu0 0.0
    %3394 = vmatprep.subr.mxu0 0.0
    %3395 = vmatpush1.msra.mxu0 0.0
    %3396 = vmatprep.subr.mxu0 0.0
    %3397 = vmatpush1.msra.mxu0 0.0
    %3398 = vmatprep.subr.mxu0 0.0
    %3399 = vmatpush1.msra.mxu0 0.0
    %3400 = vmatprep.subr.mxu0 0.0
    %3401 = vmatpush1.msra.mxu0 0.0
    %3402 = vmatprep.subr.mxu0 0.0
    %3403 = vmatpush1.msra.mxu0 0.0
    %3404 = vmatprep.subr.mxu0 0.0
    %3405 = vmatpush1.msra.mxu0 0.0
    %3406 = vmatprep.subr.mxu0 0.0
    %3407 = vmatpush1.msra.mxu0 0.0
    %3408 = vmatprep.subr.mxu0 0.0
    %3409 = vmatpush1.msra.mxu0 0.0
    %3410 = vmatprep.subr.mxu0 0.0
    %3411 = vmatpush1.msra.mxu0 0.0
    %3412 = vmatprep.subr.mxu0 0.0
    %3413 = vmatpush1.msra.mxu0 0.0
    %3414 = vmatprep.subr.mxu0 0.0
    %3415 = vmatpush1.msra.mxu0 0.0
    %3416 = vmatprep.subr.mxu0 0.0
    %3417 = vmatpush1.msra.mxu0 0.0
    %3418 = vmatprep.mubr.f32.mxu0 0.0
    %3419 = vmatmul.mubr.f32.gmra.mrb[0].mxu0 %v3352
    %v3420 = vpop.f32.mrb[0].mxu0
    %v3421 = vadd.f32 0.0, %v3420
    %v3422 = vpop.f32.mrb[0].mxu0
    %3423 = vdwg.mxu0
    %v3424 = vadd.f32 %v3347, %v3421
    %v3425 = vld [vmem:[#allocation3 + $0x20] sm:$0xff]
    %v3426 = vld [vmem:[%s1417] sm:$0xff]
    %v3427 = vld [vmem:[%s1417 + $0x8] sm:$0xff]
    %v3429 = vsel %vm1101, %v3425, 0
    %3431 = vmatprep.subr.mxu0 0.0
    %3432 = vmatpush1.msra.mxu0 %v3426
    %3433 = vmatprep.subr.mxu0 0.0
    %3434 = vmatpush1.msra.mxu0 %v3427
    %3435 = vmatprep.subr.mxu0 0.0
    %3436 = vmatpush1.msra.mxu0 0.0
    %3437 = vmatprep.subr.mxu0 0.0
    %3438 = vmatpush1.msra.mxu0 0.0
    %3439 = vmatprep.subr.mxu0 0.0
    %3440 = vmatpush1.msra.mxu0 0.0
    %3441 = vmatprep.subr.mxu0 0.0
    %3442 = vmatpush1.msra.mxu0 0.0
    %3443 = vmatprep.subr.mxu0 0.0
    %3444 = vmatpush1.msra.mxu0 0.0
    %3445 = vmatprep.subr.mxu0 0.0
    %3446 = vmatpush1.msra.mxu0 0.0
    %3447 = vmatprep.subr.mxu0 0.0
    %3448 = vmatpush1.msra.mxu0 0.0
    %3449 = vmatprep.subr.mxu0 0.0
    %3450 = vmatpush1.msra.mxu0 0.0
    %3451 = vmatprep.subr.mxu0 0.0
    %3452 = vmatpush1.msra.mxu0 0.0
    %3453 = vmatprep.subr.mxu0 0.0
    %3454 = vmatpush1.msra.mxu0 0.0
    %3455 = vmatprep.subr.mxu0 0.0
    %3456 = vmatpush1.msra.mxu0 0.0
    %3457 = vmatprep.subr.mxu0 0.0
    %3458 = vmatpush1.msra.mxu0 0.0
    %3459 = vmatprep.subr.mxu0 0.0
    %3460 = vmatpush1.msra.mxu0 0.0
    %3461 = vmatprep.subr.mxu0 0.0
    %3462 = vmatpush1.msra.mxu0 0.0
    %3463 = vmatprep.subr.mxu0 0.0
    %3464 = vmatpush1.msra.mxu0 0.0
    %3465 = vmatprep.subr.mxu0 0.0
    %3466 = vmatpush1.msra.mxu0 0.0
    %3467 = vmatprep.subr.mxu0 0.0
    %3468 = vmatpush1.msra.mxu0 0.0
    %3469 = vmatprep.subr.mxu0 0.0
    %3470 = vmatpush1.msra.mxu0 0.0
    %3471 = vmatprep.subr.mxu0 0.0
    %3472 = vmatpush1.msra.mxu0 0.0
    %3473 = vmatprep.subr.mxu0 0.0
    %3474 = vmatpush1.msra.mxu0 0.0
    %3475 = vmatprep.subr.mxu0 0.0
    %3476 = vmatpush1.msra.mxu0 0.0
    %3477 = vmatprep.subr.mxu0 0.0
    %3478 = vmatpush1.msra.mxu0 0.0
    %3479 = vmatprep.subr.mxu0 0.0
    %3480 = vmatpush1.msra.mxu0 0.0
    %3481 = vmatprep.subr.mxu0 0.0
    %3482 = vmatpush1.msra.mxu0 0.0
    %3483 = vmatprep.subr.mxu0 0.0
    %3484 = vmatpush1.msra.mxu0 0.0
    %3485 = vmatprep.subr.mxu0 0.0
    %3486 = vmatpush1.msra.mxu0 0.0
    %3487 = vmatprep.subr.mxu0 0.0
    %3488 = vmatpush1.msra.mxu0 0.0
    %3489 = vmatprep.subr.mxu0 0.0
    %3490 = vmatpush1.msra.mxu0 0.0
    %3491 = vmatprep.subr.mxu0 0.0
    %3492 = vmatpush1.msra.mxu0 0.0
    %3493 = vmatprep.subr.mxu0 0.0
    %3494 = vmatpush1.msra.mxu0 0.0
    %3495 = vmatprep.mubr.f32.mxu0 0.0
    %3496 = vmatmul.mubr.f32.gmra.mrb[0].mxu0 %v3429
    %v3497 = vpop.f32.mrb[0].mxu0
    %v3498 = vadd.f32 0.0, %v3497
    %v3499 = vpop.f32.mrb[0].mxu0
    %3500 = vdwg.mxu0
    %v3501 = vadd.f32 %v3424, %v3498
    %v3502 = vadd.f32 %v3501, %v1498
    %v3503 = vmax.f32 %v3502, 0.0
    %3504 = vst.msk [vmem:[#allocation4] sm:$0xff] %vm1502, %v3503
    %v3505 = vld [vmem:[#allocation4] sm:$0x1]
    %v3506 = vld [vmem:[%s9] sm:$0xff]
    %v3507 = vld [vmem:[%s9 + $0x8] sm:$0xff]
    %v3508 = vld [vmem:[%s9 + $0x10] sm:$0xff]
    %v3509 = vld [vmem:[%s9 + $0x18] sm:$0xff]
    %v3510 = vld [vmem:[#allocation4 + $0x1] sm:$0x1]
    %v3511 = vld [vmem:[%s1510] sm:$0xff]
    %v3512 = vld [vmem:[%s1510 + $0x8] sm:$0xff]
    %v3513 = vld [vmem:[%s1510 + $0x10] sm:$0xff]
    %v3514 = vld [vmem:[%s1510 + $0x18] sm:$0xff]
    %v3516 = vsel %vm1502, %v3510, 0
    %3518 = vmatprep.subr.mxu0 0.0
    %3519 = vmatpush1.msra.mxu0 %v3511
    %3520 = vmatprep.subr.mxu0 0.0
    %3521 = vmatpush1.msra.mxu0 %v3512
    %3522 = vmatprep.subr.mxu0 0.0
    %3523 = vmatpush1.msra.mxu0 %v3513
    %3524 = vmatprep.subr.mxu0 0.0
    %3525 = vmatpush1.msra.mxu0 %v3514
    %3526 = vmatprep.subr.mxu0 0.0
    %3527 = vmatpush1.msra.mxu0 0.0
    %3528 = vmatprep.subr.mxu0 0.0
    %3529 = vmatpush1.msra.mxu0 0.0
    %3530 = vmatprep.subr.mxu0 0.0
    %3531 = vmatpush1.msra.mxu0 0.0
    %3532 = vmatprep.subr.mxu0 0.0
    %3533 = vmatpush1.msra.mxu0 0.0
    %3534 = vmatprep.subr.mxu0 0.0
    %3535 = vmatpush1.msra.mxu0 0.0
    %3536 = vmatprep.subr.mxu0 0.0
    %3537 = vmatpush1.msra.mxu0 0.0
    %3538 = vmatprep.subr.mxu0 0.0
    %3539 = vmatpush1.msra.mxu0 0.0
    %3540 = vmatprep.subr.mxu0 0.0
    %3541 = vmatpush1.msra.mxu0 0.0
    %3542 = vmatprep.subr.mxu0 0.0
    %3543 = vmatpush1.msra.mxu0 0.0
    %3544 = vmatprep.subr.mxu0 0.0
    %3545 = vmatpush1.msra.mxu0 0.0
    %3546 = vmatprep.subr.mxu0 0.0
    %3547 = vmatpush1.msra.mxu0 0.0
    %3548 = vmatprep.subr.mxu0 0.0
    %3549 = vmatpush1.msra.mxu0 0.0
    %3550 = vmatprep.subr.mxu0 0.0
    %3551 = vmatpush1.msra.mxu0 0.0
    %3552 = vmatprep.subr.mxu0 0.0
    %3553 = vmatpush1.msra.mxu0 0.0
    %3554 = vmatprep.subr.mxu0 0.0
    %3555 = vmatpush1.msra.mxu0 0.0
    %3556 = vmatprep.subr.mxu0 0.0
    %3557 = vmatpush1.msra.mxu0 0.0
    %3558 = vmatprep.subr.mxu0 0.0
    %3559 = vmatpush1.msra.mxu0 0.0
    %3560 = vmatprep.subr.mxu0 0.0
    %3561 = vmatpush1.msra.mxu0 0.0
    %3562 = vmatprep.subr.mxu0 0.0
    %3563 = vmatpush1.msra.mxu0 0.0
    %3564 = vmatprep.subr.mxu0 0.0
    %3565 = vmatpush1.msra.mxu0 0.0
    %3566 = vmatprep.subr.mxu0 0.0
    %3567 = vmatpush1.msra.mxu0 0.0
    %3568 = vmatprep.subr.mxu0 0.0
    %3569 = vmatpush1.msra.mxu0 0.0
    %3570 = vmatprep.subr.mxu0 0.0
    %3571 = vmatpush1.msra.mxu0 0.0
    %3572 = vmatprep.subr.mxu0 0.0
    %3573 = vmatpush1.msra.mxu0 0.0
    %3574 = vmatprep.subr.mxu0 0.0
    %3575 = vmatpush1.msra.mxu0 0.0
    %3576 = vmatprep.subr.mxu0 0.0
    %3577 = vmatpush1.msra.mxu0 0.0
    %3578 = vmatprep.subr.mxu0 0.0
    %3579 = vmatpush1.msra.mxu0 0.0
    %3580 = vmatprep.subr.mxu0 0.0
    %3581 = vmatpush1.msra.mxu0 0.0
    %3582 = vmatprep.mubr.f32.mxu0 0.0
    %3583 = vmatmul.mubr.f32.gmra.mrb[0].mxu0 %v3516
    %v3584 = vpop.f32.mrb[0].mxu0
    %v3585 = vadd.f32 0.0, %v3584
    %v3586 = vpop.f32.mrb[0].mxu0
    %3587 = vdwg.mxu0
    %v3589 = vsel %vm1502, %v3505, 0
    %3591 = vmatprep.subr.mxu0 0.0
    %3592 = vmatpush1.msra.mxu0 %v3506
    %3593 = vmatprep.subr.mxu0 0.0
    %3594 = vmatpush1.msra.mxu0 %v3507
    %3595 = vmatprep.subr.mxu0 0.0
    %3596 = vmatpush1.msra.mxu0 %v3508
    %3597 = vmatprep.subr.mxu0 0.0
    %3598 = vmatpush1.msra.mxu0 %v3509
    %3599 = vmatprep.subr.mxu0 0.0
    %3600 = vmatpush1.msra.mxu0 0.0
    %3601 = vmatprep.subr.mxu0 0.0
    %3602 = vmatpush1.msra.mxu0 0.0
    %3603 = vmatprep.subr.mxu0 0.0
    %3604 = vmatpush1.msra.mxu0 0.0
    %3605 = vmatprep.subr.mxu0 0.0
    %3606 = vmatpush1.msra.mxu0 0.0
    %3607 = vmatprep.subr.mxu0 0.0
    %3608 = vmatpush1.msra.mxu0 0.0
    %3609 = vmatprep.subr.mxu0 0.0
    %3610 = vmatpush1.msra.mxu0 0.0
    %3611 = vmatprep.subr.mxu0 0.0
    %3612 = vmatpush1.msra.mxu0 0.0
    %3613 = vmatprep.subr.mxu0 0.0
    %3614 = vmatpush1.msra.mxu0 0.0
    %3615 = vmatprep.subr.mxu0 0.0
    %3616 = vmatpush1.msra.mxu0 0.0
    %3617 = vmatprep.subr.mxu0 0.0
    %3618 = vmatpush1.msra.mxu0 0.0
    %3619 = vmatprep.subr.mxu0 0.0
    %3620 = vmatpush1.msra.mxu0 0.0
    %3621 = vmatprep.subr.mxu0 0.0
    %3622 = vmatpush1.msra.mxu0 0.0
    %3623 = vmatprep.subr.mxu0 0.0
    %3624 = vmatpush1.msra.mxu0 0.0
    %3625 = vmatprep.subr.mxu0 0.0
    %3626 = vmatpush1.msra.mxu0 0.0
    %3627 = vmatprep.subr.mxu0 0.0
    %3628 = vmatpush1.msra.mxu0 0.0
    %3629 = vmatprep.subr.mxu0 0.0
    %3630 = vmatpush1.msra.mxu0 0.0
    %3631 = vmatprep.subr.mxu0 0.0
    %3632 = vmatpush1.msra.mxu0 0.0
    %3633 = vmatprep.subr.mxu0 0.0
    %3634 = vmatpush1.msra.mxu0 0.0
    %3635 = vmatprep.subr.mxu0 0.0
    %3636 = vmatpush1.msra.mxu0 0.0
    %3637 = vmatprep.subr.mxu0 0.0
    %3638 = vmatpush1.msra.mxu0 0.0
    %3639 = vmatprep.subr.mxu0 0.0
    %3640 = vmatpush1.msra.mxu0 0.0
    %3641 = vmatprep.subr.mxu0 0.0
    %3642 = vmatpush1.msra.mxu0 0.0
    %3643 = vmatprep.subr.mxu0 0.0
    %3644 = vmatpush1.msra.mxu0 0.0
    %3645 = vmatprep.subr.mxu0 0.0
    %3646 = vmatpush1.msra.mxu0 0.0
    %3647 = vmatprep.subr.mxu0 0.0
    %3648 = vmatpush1.msra.mxu0 0.0
    %3649 = vmatprep.subr.mxu0 0.0
    %3650 = vmatpush1.msra.mxu0 0.0
    %3651 = vmatprep.subr.mxu0 0.0
    %3652 = vmatpush1.msra.mxu0 0.0
    %3653 = vmatprep.subr.mxu0 0.0
    %3654 = vmatpush1.msra.mxu0 0.0
    %3655 = vmatprep.mubr.f32.mxu0 0.0
    %3656 = vmatmul.mubr.f32.gmra.mrb[0].mxu0 %v3589
    %v3657 = vpop.f32.mrb[0].mxu0
    %v3658 = vadd.f32 %v3585, %v3657
    %v3659 = vpop.f32.mrb[0].mxu0
    %3660 = vdwg.mxu0
    %v3661 = vld [vmem:[#allocation4 + $0x2] sm:$0x1]
    %v3662 = vld [vmem:[%s1662] sm:$0xff]
    %v3663 = vld [vmem:[%s1662 + $0x8] sm:$0xff]
    %v3664 = vld [vmem:[%s1662 + $0x10] sm:$0xff]
    %v3665 = vld [vmem:[%s1662 + $0x18] sm:$0xff]
    %v3667 = vsel %vm1502, %v3661, 0
    %3669 = vmatprep.subr.mxu0 0.0
    %3670 = vmatpush1.msra.mxu0 %v3662
    %3671 = vmatprep.subr.mxu0 0.0
    %3672 = vmatpush1.msra.mxu0 %v3663
    %3673 = vmatprep.subr.mxu0 0.0
    %3674 = vmatpush1.msra.mxu0 %v3664
    %3675 = vmatprep.subr.mxu0 0.0
    %3676 = vmatpush1.msra.mxu0 %v3665
    %3677 = vmatprep.subr.mxu0 0.0
    %3678 = vmatpush1.msra.mxu0 0.0
    %3679 = vmatprep.subr.mxu0 0.0
    %3680 = vmatpush1.msra.mxu0 0.0
    %3681 = vmatprep.subr.mxu0 0.0
    %3682 = vmatpush1.msra.mxu0 0.0
    %3683 = vmatprep.subr.mxu0 0.0
    %3684 = vmatpush1.msra.mxu0 0.0
    %3685 = vmatprep.subr.mxu0 0.0
    %3686 = vmatpush1.msra.mxu0 0.0
    %3687 = vmatprep.subr.mxu0 0.0
    %3688 = vmatpush1.msra.mxu0 0.0
    %3689 = vmatprep.subr.mxu0 0.0
    %3690 = vmatpush1.msra.mxu0 0.0
    %3691 = vmatprep.subr.mxu0 0.0
    %3692 = vmatpush1.msra.mxu0 0.0
    %3693 = vmatprep.subr.mxu0 0.0
    %3694 = vmatpush1.msra.mxu0 0.0
    %3695 = vmatprep.subr.mxu0 0.0
    %3696 = vmatpush1.msra.mxu0 0.0
    %3697 = vmatprep.subr.mxu0 0.0
    %3698 = vmatpush1.msra.mxu0 0.0
    %3699 = vmatprep.subr.mxu0 0.0
    %3700 = vmatpush1.msra.mxu0 0.0
    %3701 = vmatprep.subr.mxu0 0.0
    %3702 = vmatpush1.msra.mxu0 0.0
    %3703 = vmatprep.subr.mxu0 0.0
    %3704 = vmatpush1.msra.mxu0 0.0
    %3705 = vmatprep.subr.mxu0 0.0
    %3706 = vmatpush1.msra.mxu0 0.0
    %3707 = vmatprep.subr.mxu0 0.0
    %3708 = vmatpush1.msra.mxu0 0.0
    %3709 = vmatprep.subr.mxu0 0.0
    %3710 = vmatpush1.msra.mxu0 0.0
    %3711 = vmatprep.subr.mxu0 0.0
    %3712 = vmatpush1.msra.mxu0 0.0
    %3713 = vmatprep.subr.mxu0 0.0
    %3714 = vmatpush1.msra.mxu0 0.0
    %3715 = vmatprep.subr.mxu0 0.0
    %3716 = vmatpush1.msra.mxu0 0.0
    %3717 = vmatprep.subr.mxu0 0.0
    %3718 = vmatpush1.msra.mxu0 0.0
    %3719 = vmatprep.subr.mxu0 0.0
    %3720 = vmatpush1.msra.mxu0 0.0
    %3721 = vmatprep.subr.mxu0 0.0
    %3722 = vmatpush1.msra.mxu0 0.0
    %3723 = vmatprep.subr.mxu0 0.0
    %3724 = vmatpush1.msra.mxu0 0.0
    %3725 = vmatprep.subr.mxu0 0.0
    %3726 = vmatpush1.msra.mxu0 0.0
    %3727 = vmatprep.subr.mxu0 0.0
    %3728 = vmatpush1.msra.mxu0 0.0
    %3729 = vmatprep.subr.mxu0 0.0
    %3730 = vmatpush1.msra.mxu0 0.0
    %3731 = vmatprep.subr.mxu0 0.0
    %3732 = vmatpush1.msra.mxu0 0.0
    %3733 = vmatprep.mubr.f32.mxu0 0.0
    %3734 = vmatmul.mubr.f32.gmra.mrb[0].mxu0 %v3667
    %v3735 = vpop.f32.mrb[0].mxu0
    %v3736 = vadd.f32 0.0, %v3735
    %v3737 = vpop.f32.mrb[0].mxu0
    %3738 = vdwg.mxu0
    %v3739 = vadd.f32 %v3658, %v3736
    %v3740 = vld [vmem:[#allocation4 + $0x3] sm:$0x1]
    %v3741 = vld [vmem:[%s1742] sm:$0xff]
    %v3742 = vld [vmem:[%s1742 + $0x8] sm:$0xff]
    %v3743 = vld [vmem:[%s1742 + $0x10] sm:$0xff]
    %v3744 = vld [vmem:[%s1742 + $0x18] sm:$0xff]
    %v3746 = vsel %vm1502, %v3740, 0
    %3748 = vmatprep.subr.mxu0 0.0
    %3749 = vmatpush1.msra.mxu0 %v3741
    %3750 = vmatprep.subr.mxu0 0.0
    %3751 = vmatpush1.msra.mxu0 %v3742
    %3752 = vmatprep.subr.mxu0 0.0
    %3753 = vmatpush1.msra.mxu0 %v3743
    %3754 = vmatprep.subr.mxu0 0.0
    %3755 = vmatpush1.msra.mxu0 %v3744
    %3756 = vmatprep.subr.mxu0 0.0
    %3757 = vmatpush1.msra.mxu0 0.0
    %3758 = vmatprep.subr.mxu0 0.0
    %3759 = vmatpush1.msra.mxu0 0.0
    %3760 = vmatprep.subr.mxu0 0.0
    %3761 = vmatpush1.msra.mxu0 0.0
    %3762 = vmatprep.subr.mxu0 0.0
    %3763 = vmatpush1.msra.mxu0 0.0
    %3764 = vmatprep.subr.mxu0 0.0
    %3765 = vmatpush1.msra.mxu0 0.0
    %3766 = vmatprep.subr.mxu0 0.0
    %3767 = vmatpush1.msra.mxu0 0.0
    %3768 = vmatprep.subr.mxu0 0.0
    %3769 = vmatpush1.msra.mxu0 0.0
    %3770 = vmatprep.subr.mxu0 0.0
    %3771 = vmatpush1.msra.mxu0 0.0
    %3772 = vmatprep.subr.mxu0 0.0
    %3773 = vmatpush1.msra.mxu0 0.0
    %3774 = vmatprep.subr.mxu0 0.0
    %3775 = vmatpush1.msra.mxu0 0.0
    %3776 = vmatprep.subr.mxu0 0.0
    %3777 = vmatpush1.msra.mxu0 0.0
    %3778 = vmatprep.subr.mxu0 0.0
    %3779 = vmatpush1.msra.mxu0 0.0
    %3780 = vmatprep.subr.mxu0 0.0
    %3781 = vmatpush1.msra.mxu0 0.0
    %3782 = vmatprep.subr.mxu0 0.0
    %3783 = vmatpush1.msra.mxu0 0.0
    %3784 = vmatprep.subr.mxu0 0.0
    %3785 = vmatpush1.msra.mxu0 0.0
    %3786 = vmatprep.subr.mxu0 0.0
    %3787 = vmatpush1.msra.mxu0 0.0
    %3788 = vmatprep.subr.mxu0 0.0
    %3789 = vmatpush1.msra.mxu0 0.0
    %3790 = vmatprep.subr.mxu0 0.0
    %3791 = vmatpush1.msra.mxu0 0.0
    %3792 = vmatprep.subr.mxu0 0.0
    %3793 = vmatpush1.msra.mxu0 0.0
    %3794 = vmatprep.subr.mxu0 0.0
    %3795 = vmatpush1.msra.mxu0 0.0
    %3796 = vmatprep.subr.mxu0 0.0
    %3797 = vmatpush1.msra.mxu0 0.0
    %3798 = vmatprep.subr.mxu0 0.0
    %3799 = vmatpush1.msra.mxu0 0.0
    %3800 = vmatprep.subr.mxu0 0.0
    %3801 = vmatpush1.msra.mxu0 0.0
    %3802 = vmatprep.subr.mxu0 0.0
    %3803 = vmatpush1.msra.mxu0 0.0
    %3804 = vmatprep.subr.mxu0 0.0
    %3805 = vmatpush1.msra.mxu0 0.0
    %3806 = vmatprep.subr.mxu0 0.0
    %3807 = vmatpush1.msra.mxu0 0.0
    %3808 = vmatprep.subr.mxu0 0.0
    %3809 = vmatpush1.msra.mxu0 0.0
    %3810 = vmatprep.subr.mxu0 0.0
    %3811 = vmatpush1.msra.mxu0 0.0
    %3812 = vmatprep.mubr.f32.mxu0 0.0
    %3813 = vmatmul.mubr.f32.gmra.mrb[0].mxu0 %v3746
    %v3814 = vpop.f32.mrb[0].mxu0
    %v3815 = vadd.f32 0.0, %v3814
    %v3816 = vpop.f32.mrb[0].mxu0
    %3817 = vdwg.mxu0
    %v3818 = vadd.f32 %v3739, %v3815
    %v3819 = vld [vmem:[#allocation4 + $0x4] sm:$0x1]
    %v3820 = vld [vmem:[%s1822] sm:$0xff]
    %v3821 = vld [vmem:[%s1822 + $0x8] sm:$0xff]
    %v3822 = vld [vmem:[%s1822 + $0x10] sm:$0xff]
    %v3823 = vld [vmem:[%s1822 + $0x18] sm:$0xff]
    %v3825 = vsel %vm1502, %v3819, 0
    %3827 = vmatprep.subr.mxu0 0.0
    %3828 = vmatpush1.msra.mxu0 %v3820
    %3829 = vmatprep.subr.mxu0 0.0
    %3830 = vmatpush1.msra.mxu0 %v3821
    %3831 = vmatprep.subr.mxu0 0.0
    %3832 = vmatpush1.msra.mxu0 %v3822
    %3833 = vmatprep.subr.mxu0 0.0
    %3834 = vmatpush1.msra.mxu0 %v3823
    %3835 = vmatprep.subr.mxu0 0.0
    %3836 = vmatpush1.msra.mxu0 0.0
    %3837 = vmatprep.subr.mxu0 0.0
    %3838 = vmatpush1.msra.mxu0 0.0
    %3839 = vmatprep.subr.mxu0 0.0
    %3840 = vmatpush1.msra.mxu0 0.0
    %3841 = vmatprep.subr.mxu0 0.0
    %3842 = vmatpush1.msra.mxu0 0.0
    %3843 = vmatprep.subr.mxu0 0.0
    %3844 = vmatpush1.msra.mxu0 0.0
    %3845 = vmatprep.subr.mxu0 0.0
    %3846 = vmatpush1.msra.mxu0 0.0
    %3847 = vmatprep.subr.mxu0 0.0
    %3848 = vmatpush1.msra.mxu0 0.0
    %3849 = vmatprep.subr.mxu0 0.0
    %3850 = vmatpush1.msra.mxu0 0.0
    %3851 = vmatprep.subr.mxu0 0.0
    %3852 = vmatpush1.msra.mxu0 0.0
    %3853 = vmatprep.subr.mxu0 0.0
    %3854 = vmatpush1.msra.mxu0 0.0
    %3855 = vmatprep.subr.mxu0 0.0
    %3856 = vmatpush1.msra.mxu0 0.0
    %3857 = vmatprep.subr.mxu0 0.0
    %3858 = vmatpush1.msra.mxu0 0.0
    %3859 = vmatprep.subr.mxu0 0.0
    %3860 = vmatpush1.msra.mxu0 0.0
    %3861 = vmatprep.subr.mxu0 0.0
    %3862 = vmatpush1.msra.mxu0 0.0
    %3863 = vmatprep.subr.mxu0 0.0
    %3864 = vmatpush1.msra.mxu0 0.0
    %3865 = vmatprep.subr.mxu0 0.0
    %3866 = vmatpush1.msra.mxu0 0.0
    %3867 = vmatprep.subr.mxu0 0.0
    %3868 = vmatpush1.msra.mxu0 0.0
    %3869 = vmatprep.subr.mxu0 0.0
    %3870 = vmatpush1.msra.mxu0 0.0
    %3871 = vmatprep.subr.mxu0 0.0
    %3872 = vmatpush1.msra.mxu0 0.0
    %3873 = vmatprep.subr.mxu0 0.0
    %3874 = vmatpush1.msra.mxu0 0.0
    %3875 = vmatprep.subr.mxu0 0.0
    %3876 = vmatpush1.msra.mxu0 0.0
    %3877 = vmatprep.subr.mxu0 0.0
    %3878 = vmatpush1.msra.mxu0 0.0
    %3879 = vmatprep.subr.mxu0 0.0
    %3880 = vmatpush1.msra.mxu0 0.0
    %3881 = vmatprep.subr.mxu0 0.0
    %3882 = vmatpush1.msra.mxu0 0.0
    %3883 = vmatprep.subr.mxu0 0.0
    %3884 = vmatpush1.msra.mxu0 0.0
    %3885 = vmatprep.subr.mxu0 0.0
    %3886 = vmatpush1.msra.mxu0 0.0
    %3887 = vmatprep.subr.mxu0 0.0
    %3888 = vmatpush1.msra.mxu0 0.0
    %3889 = vmatprep.subr.mxu0 0.0
    %3890 = vmatpush1.msra.mxu0 0.0
    %3891 = vmatprep.mubr.f32.mxu0 0.0
    %3892 = vmatmul.mubr.f32.gmra.mrb[0].mxu0 %v3825
    %v3893 = vpop.f32.mrb[0].mxu0
    %v3894 = vadd.f32 0.0, %v3893
    %v3895 = vpop.f32.mrb[0].mxu0
    %3896 = vdwg.mxu0
    %v3897 = vadd.f32 %v3818, %v3894
    %v3898 = vld [vmem:[#allocation4 + $0x5] sm:$0x1]
    %v3899 = vld [vmem:[%s1902] sm:$0xff]
    %v3900 = vld [vmem:[%s1902 + $0x8] sm:$0xff]
    %v3901 = vld [vmem:[%s1902 + $0x10] sm:$0xff]
    %v3902 = vld [vmem:[%s1902 + $0x18] sm:$0xff]
    %v3904 = vsel %vm1502, %v3898, 0
    %3906 = vmatprep.subr.mxu0 0.0
    %3907 = vmatpush1.msra.mxu0 %v3899
    %3908 = vmatprep.subr.mxu0 0.0
    %3909 = vmatpush1.msra.mxu0 %v3900
    %3910 = vmatprep.subr.mxu0 0.0
    %3911 = vmatpush1.msra.mxu0 %v3901
    %3912 = vmatprep.subr.mxu0 0.0
    %3913 = vmatpush1.msra.mxu0 %v3902
    %3914 = vmatprep.subr.mxu0 0.0
    %3915 = vmatpush1.msra.mxu0 0.0
    %3916 = vmatprep.subr.mxu0 0.0
    %3917 = vmatpush1.msra.mxu0 0.0
    %3918 = vmatprep.subr.mxu0 0.0
    %3919 = vmatpush1.msra.mxu0 0.0
    %3920 = vmatprep.subr.mxu0 0.0
    %3921 = vmatpush1.msra.mxu0 0.0
    %3922 = vmatprep.subr.mxu0 0.0
    %3923 = vmatpush1.msra.mxu0 0.0
    %3924 = vmatprep.subr.mxu0 0.0
    %3925 = vmatpush1.msra.mxu0 0.0
    %3926 = vmatprep.subr.mxu0 0.0
    %3927 = vmatpush1.msra.mxu0 0.0
    %3928 = vmatprep.subr.mxu0 0.0
    %3929 = vmatpush1.msra.mxu0 0.0
    %3930 = vmatprep.subr.mxu0 0.0
    %3931 = vmatpush1.msra.mxu0 0.0
    %3932 = vmatprep.subr.mxu0 0.0
    %3933 = vmatpush1.msra.mxu0 0.0
    %3934 = vmatprep.subr.mxu0 0.0
    %3935 = vmatpush1.msra.mxu0 0.0
    %3936 = vmatprep.subr.mxu0 0.0
    %3937 = vmatpush1.msra.mxu0 0.0
    %3938 = vmatprep.subr.mxu0 0.0
    %3939 = vmatpush1.msra.mxu0 0.0
    %3940 = vmatprep.subr.mxu0 0.0
    %3941 = vmatpush1.msra.mxu0 0.0
    %3942 = vmatprep.subr.mxu0 0.0
    %3943 = vmatpush1.msra.mxu0 0.0
    %3944 = vmatprep.subr.mxu0 0.0
    %3945 = vmatpush1.msra.mxu0 0.0
    %3946 = vmatprep.subr.mxu0 0.0
    %3947 = vmatpush1.msra.mxu0 0.0
    %3948 = vmatprep.subr.mxu0 0.0
    %3949 = vmatpush1.msra.mxu0 0.0
    %3950 = vmatprep.subr.mxu0 0.0
    %3951 = vmatpush1.msra.mxu0 0.0
    %3952 = vmatprep.subr.mxu0 0.0
    %3953 = vmatpush1.msra.mxu0 0.0
    %3954 = vmatprep.subr.mxu0 0.0
    %3955 = vmatpush1.msra.mxu0 0.0
    %3956 = vmatprep.subr.mxu0 0.0
    %3957 = vmatpush1.msra.mxu0 0.0
    %3958 = vmatprep.subr.mxu0 0.0
    %3959 = vmatpush1.msra.mxu0 0.0
    %3960 = vmatprep.subr.mxu0 0.0
    %3961 = vmatpush1.msra.mxu0 0.0
    %3962 = vmatprep.subr.mxu0 0.0
    %3963 = vmatpush1.msra.mxu0 0.0
    %3964 = vmatprep.subr.mxu0 0.0
    %3965 = vmatpush1.msra.mxu0 0.0
    %3966 = vmatprep.subr.mxu0 0.0
    %3967 = vmatpush1.msra.mxu0 0.0
    %3968 = vmatprep.subr.mxu0 0.0
    %3969 = vmatpush1.msra.mxu0 0.0
    %3970 = vmatprep.mubr.f32.mxu0 0.0
    %3971 = vmatmul.mubr.f32.gmra.mrb[0].mxu0 %v3904
    %v3972 = vpop.f32.mrb[0].mxu0
    %v3973 = vadd.f32 0.0, %v3972
    %v3974 = vpop.f32.mrb[0].mxu0
    %3975 = vdwg.mxu0
    %v3976 = vadd.f32 %v3897, %v3973
    %v3977 = vld [vmem:[#allocation4 + $0x6] sm:$0x1]
    %v3978 = vld [vmem:[%s1982] sm:$0xff]
    %v3979 = vld [vmem:[%s1982 + $0x8] sm:$0xff]
    %v3980 = vld [vmem:[%s1982 + $0x10] sm:$0xff]
    %v3981 = vld [vmem:[%s1982 + $0x18] sm:$0xff]
    %v3983 = vsel %vm1502, %v3977, 0
    %3985 = vmatprep.subr.mxu0 0.0
    %3986 = vmatpush1.msra.mxu0 %v3978
    %3987 = vmatprep.subr.mxu0 0.0
    %3988 = vmatpush1.msra.mxu0 %v3979
    %3989 = vmatprep.subr.mxu0 0.0
    %3990 = vmatpush1.msra.mxu0 %v3980
    %3991 = vmatprep.subr.mxu0 0.0
    %3992 = vmatpush1.msra.mxu0 %v3981
    %3993 = vmatprep.subr.mxu0 0.0
    %3994 = vmatpush1.msra.mxu0 0.0
    %3995 = vmatprep.subr.mxu0 0.0
    %3996 = vmatpush1.msra.mxu0 0.0
    %3997 = vmatprep.subr.mxu0 0.0
    %3998 = vmatpush1.msra.mxu0 0.0
    %3999 = vmatprep.subr.mxu0 0.0
    %4000 = vmatpush1.msra.mxu0 0.0
    %4001 = vmatprep.subr.mxu0 0.0
    %4002 = vmatpush1.msra.mxu0 0.0
    %4003 = vmatprep.subr.mxu0 0.0
    %4004 = vmatpush1.msra.mxu0 0.0
    %4005 = vmatprep.subr.mxu0 0.0
    %4006 = vmatpush1.msra.mxu0 0.0
    %4007 = vmatprep.subr.mxu0 0.0
    %4008 = vmatpush1.msra.mxu0 0.0
    %4009 = vmatprep.subr.mxu0 0.0
    %4010 = vmatpush1.msra.mxu0 0.0
    %4011 = vmatprep.subr.mxu0 0.0
    %4012 = vmatpush1.msra.mxu0 0.0
    %4013 = vmatprep.subr.mxu0 0.0
    %4014 = vmatpush1.msra.mxu0 0.0
    %4015 = vmatprep.subr.mxu0 0.0
    %4016 = vmatpush1.msra.mxu0 0.0
    %4017 = vmatprep.subr.mxu0 0.0
    %4018 = vmatpush1.msra.mxu0 0.0
    %4019 = vmatprep.subr.mxu0 0.0
    %4020 = vmatpush1.msra.mxu0 0.0
    %4021 = vmatprep.subr.mxu0 0.0
    %4022 = vmatpush1.msra.mxu0 0.0
    %4023 = vmatprep.subr.mxu0 0.0
    %4024 = vmatpush1.msra.mxu0 0.0
    %4025 = vmatprep.subr.mxu0 0.0
    %4026 = vmatpush1.msra.mxu0 0.0
    %4027 = vmatprep.subr.mxu0 0.0
    %4028 = vmatpush1.msra.mxu0 0.0
    %4029 = vmatprep.subr.mxu0 0.0
    %4030 = vmatpush1.msra.mxu0 0.0
    %4031 = vmatprep.subr.mxu0 0.0
    %4032 = vmatpush1.msra.mxu0 0.0
    %4033 = vmatprep.subr.mxu0 0.0
    %4034 = vmatpush1.msra.mxu0 0.0
    %4035 = vmatprep.subr.mxu0 0.0
    %4036 = vmatpush1.msra.mxu0 0.0
    %4037 = vmatprep.subr.mxu0 0.0
    %4038 = vmatpush1.msra.mxu0 0.0
    %4039 = vmatprep.subr.mxu0 0.0
    %4040 = vmatpush1.msra.mxu0 0.0
    %4041 = vmatprep.subr.mxu0 0.0
    %4042 = vmatpush1.msra.mxu0 0.0
    %4043 = vmatprep.subr.mxu0 0.0
    %4044 = vmatpush1.msra.mxu0 0.0
    %4045 = vmatprep.subr.mxu0 0.0
    %4046 = vmatpush1.msra.mxu0 0.0
    %4047 = vmatprep.subr.mxu0 0.0
    %4048 = vmatpush1.msra.mxu0 0.0
    %4049 = vmatprep.mubr.f32.mxu0 0.0
    %4050 = vmatmul.mubr.f32.gmra.mrb[0].mxu0 %v3983
    %v4051 = vpop.f32.mrb[0].mxu0
    %v4052 = vadd.f32 0.0, %v4051
    %v4053 = vpop.f32.mrb[0].mxu0
    %4054 = vdwg.mxu0
    %v4055 = vadd.f32 %v3976, %v4052
    %v4056 = vld [vmem:[#allocation4 + $0x7] sm:$0x1]
    %v4057 = vld [vmem:[%s2062] sm:$0xff]
    %v4058 = vld [vmem:[%s2062 + $0x8] sm:$0xff]
    %v4059 = vld [vmem:[%s2062 + $0x10] sm:$0xff]
    %v4060 = vld [vmem:[%s2062 + $0x18] sm:$0xff]
    %v4062 = vsel %vm1502, %v4056, 0
    %4064 = vmatprep.subr.mxu0 0.0
    %4065 = vmatpush1.msra.mxu0 %v4057
    %4066 = vmatprep.subr.mxu0 0.0
    %4067 = vmatpush1.msra.mxu0 %v4058
    %4068 = vmatprep.subr.mxu0 0.0
    %4069 = vmatpush1.msra.mxu0 %v4059
    %4070 = vmatprep.subr.mxu0 0.0
    %4071 = vmatpush1.msra.mxu0 %v4060
    %4072 = vmatprep.subr.mxu0 0.0
    %4073 = vmatpush1.msra.mxu0 0.0
    %4074 = vmatprep.subr.mxu0 0.0
    %4075 = vmatpush1.msra.mxu0 0.0
    %4076 = vmatprep.subr.mxu0 0.0
    %4077 = vmatpush1.msra.mxu0 0.0
    %4078 = vmatprep.subr.mxu0 0.0
    %4079 = vmatpush1.msra.mxu0 0.0
    %4080 = vmatprep.subr.mxu0 0.0
    %4081 = vmatpush1.msra.mxu0 0.0
    %4082 = vmatprep.subr.mxu0 0.0
    %4083 = vmatpush1.msra.mxu0 0.0
    %4084 = vmatprep.subr.mxu0 0.0
    %4085 = vmatpush1.msra.mxu0 0.0
    %4086 = vmatprep.subr.mxu0 0.0
    %4087 = vmatpush1.msra.mxu0 0.0
    %4088 = vmatprep.subr.mxu0 0.0
    %4089 = vmatpush1.msra.mxu0 0.0
    %4090 = vmatprep.subr.mxu0 0.0
    %4091 = vmatpush1.msra.mxu0 0.0
    %4092 = vmatprep.subr.mxu0 0.0
    %4093 = vmatpush1.msra.mxu0 0.0
    %4094 = vmatprep.subr.mxu0 0.0
    %4095 = vmatpush1.msra.mxu0 0.0
    %4096 = vmatprep.subr.mxu0 0.0
    %4097 = vmatpush1.msra.mxu0 0.0
    %4098 = vmatprep.subr.mxu0 0.0
    %4099 = vmatpush1.msra.mxu0 0.0
    %4100 = vmatprep.subr.mxu0 0.0
    %4101 = vmatpush1.msra.mxu0 0.0
    %4102 = vmatprep.subr.mxu0 0.0
    %4103 = vmatpush1.msra.mxu0 0.0
    %4104 = vmatprep.subr.mxu0 0.0
    %4105 = vmatpush1.msra.mxu0 0.0
    %4106 = vmatprep.subr.mxu0 0.0
    %4107 = vmatpush1.msra.mxu0 0.0
    %4108 = vmatprep.subr.mxu0 0.0
    %4109 = vmatpush1.msra.mxu0 0.0
    %4110 = vmatprep.subr.mxu0 0.0
    %4111 = vmatpush1.msra.mxu0 0.0
    %4112 = vmatprep.subr.mxu0 0.0
    %4113 = vmatpush1.msra.mxu0 0.0
    %4114 = vmatprep.subr.mxu0 0.0
    %4115 = vmatpush1.msra.mxu0 0.0
    %4116 = vmatprep.subr.mxu0 0.0
    %4117 = vmatpush1.msra.mxu0 0.0
    %4118 = vmatprep.subr.mxu0 0.0
    %4119 = vmatpush1.msra.mxu0 0.0
    %4120 = vmatprep.subr.mxu0 0.0
    %4121 = vmatpush1.msra.mxu0 0.0
    %4122 = vmatprep.subr.mxu0 0.0
    %4123 = vmatpush1.msra.mxu0 0.0
    %4124 = vmatprep.subr.mxu0 0.0
    %4125 = vmatpush1.msra.mxu0 0.0
    %4126 = vmatprep.subr.mxu0 0.0
    %4127 = vmatpush1.msra.mxu0 0.0
    %4128 = vmatprep.mubr.f32.mxu0 0.0
    %4129 = vmatmul.mubr.f32.gmra.mrb[0].mxu0 %v4062
    %v4130 = vpop.f32.mrb[0].mxu0
    %v4131 = vadd.f32 0.0, %v4130
    %v4132 = vpop.f32.mrb[0].mxu0
    %4133 = vdwg.mxu0
    %v4134 = vadd.f32 %v4055, %v4131
    %v4135 = vadd.f32 %v4134, %v106
    %v4137 = vrot.slane %v4135, 7
    %vm4139 = vcmask 1040384
    %v4140 = vsel %vm4139, %v2141, %v4137
    %vm4141 = vcmask 58368
    %4142 = vst.msk [vmem:[#allocation8] sm:$0x3] %vm4141, %v4140
    // Predicated region
    $region50: #{forward.1} parent=1 // pred_check
      _
    $region51: #{forward.1} parent=1 // pred_check_branch
      %4144 = sbr.rel (0) target = $region53
    $region52: #{forward.1} parent=1 // pred_region
      %s4146 = ssub.s32 32, 32
      %4147 = vsyncadd [#allocation6], %s4146
      %s4149 = sshll.u32 [#allocation8], 4
      %s4150 = int_to_ptr.vmem [resolvable:$true] %s4149
      %4152 = dma.vmem_to_hbm [thread:$0]  %s4150, 32, %s11, [#allocation6]
    $region53: #{forward.1} parent=1 // pred_fallthru
      _
    // Predicated region
    $region54: #{forward.1} parent=1 // pred_check
      _
    $region55: #{forward.1} parent=1 // pred_check_branch
      %4154 = sbr.rel (0) target = $region57
    $region56: #{forward.1} parent=1 // pred_region
      %4155 = dma.done [#allocation6], 32
    $region57: #{forward.1} parent=1 // pred_fallthru
      _
    %4156 = vsyncpa [#allocation6], 1
    %4157 = vsyncpa [#allocation7], 1

</llo_original>
